<compile_context>
chip_gen: v7x
topology: tpu7x:2x2x1
jax: 0.10.0
libtpu: 0.0.40
codegen_flags: <defaults>
</compile_context>

<pallas_src>
import jax
import jax.numpy as jnp
from jax.experimental import pallas as pl
from jax.experimental.pallas import tpu as pltpu


def _cov_lstm_kernel(x_ref, wx_ref, wh_ref, b_ref, wlin_ref, blin_ref, out_ref,
                     h_ref, c_ref):
    # x_ref:    (TB, TS, I)   f32          raw input block (batch_first, no host transpose)
    # wx_ref:   (I, 4H)       matmul dtype input->gate weights  (gate order i, f, g, o)
    # wh_ref:   (H, 4H)       matmul dtype hidden->gate weights
    # b_ref:    (1, 4H)       f32          b_ih + b_hh (hoisted)
    # wlin_ref: (TS, H, Opad) matmul dtype time-sliced final Linear weight (O padded to 128)
    # blin_ref: (1, Opad)     f32          final Linear bias (padded)
    # out_ref:  (TB, Opad)    f32          resident output/accumulator block
    # h_ref / c_ref: (TB, H)  f32          recurrent state, persists across time blocks
    tb = pl.program_id(1)
    TS = x_ref.shape[1]
    I = wx_ref.shape[0]
    H = wh_ref.shape[0]

    @pl.when(tb == 0)
    def _init():
        # PyTorch default: no (h0, c0) passed -> zero initial state.  Seed the
        # resident output block with the Linear bias so no finalize pass is needed.
        h_ref[...] = jnp.zeros_like(h_ref)
        c_ref[...] = jnp.zeros_like(c_ref)
        out_ref[...] = jnp.broadcast_to(blin_ref[...], out_ref.shape)

    h = h_ref[...]
    c = c_ref[...]
    acc = jnp.zeros(out_ref.shape, jnp.float32)

    # Statically unrolled recurrence over the TS timesteps of this block
    # (equivalent to lax.fori_loop(..., unroll=True); all slices are static).
    for t in range(TS):
        x_t = x_ref[:, t, :]                                       # (TB, I)
        if I == 1:
            # K=1 contraction -> VPU broadcast FMA; keeps the MXU free for the
            # recurrence matmul.
            xp_t = x_t * wx_ref[...].astype(jnp.float32) + b_ref[...]
        else:
            xp_t = (jnp.dot(x_t.astype(wx_ref.dtype), wx_ref[...],
                            preferred_element_type=jnp.float32) + b_ref[...])
        # ONE fused (TB, H) @ (H, 4H) MXU matmul for all four gates.
        gates = xp_t + jnp.dot(h.astype(wh_ref.dtype), wh_ref[...],
                               preferred_element_type=jnp.float32)
        # Dense transcendentals on the full lane-aligned (TB, 4H) tile, then
        # static per-gate slices (PyTorch gate order i, f, g, o).
        sg = jax.nn.sigmoid(gates)
        tg = jnp.tanh(gates)
        i_g = sg[:, 0 * H:1 * H]
        f_g = sg[:, 1 * H:2 * H]
        g_g = tg[:, 2 * H:3 * H]
        o_g = sg[:, 3 * H:4 * H]
        c = f_g * c + i_g * g_g
        h = o_g * jnp.tanh(c)
        # Final Linear folded into the loop; Opad (multiple of 128) keeps the
        # accumulator and output tiles lane-dense (unmasked stores).
        acc = acc + jnp.dot(h.astype(wlin_ref.dtype), wlin_ref[t],
                            preferred_element_type=jnp.float32)

    h_ref[...] = h
    c_ref[...] = c
    out_ref[...] += acc


def _ceil_to(a, m):
    return -(-a // m) * m


def _tile_bytes(shape, itemsize):
    """VMEM bytes of one buffer of this block (last two dims padded to (8,128))."""
    lead = 1
    for d in shape[:-2]:
        lead *= d
    return lead * _ceil_to(shape[-2], 8) * _ceil_to(shape[-1], 128) * itemsize


def _batch_tile(B):
    # Largest multiple-of-8 tile that still leaves >= 2 batch tiles, so the
    # leading "parallel" grid axis can split across v7x's two TensorCores.
    for cand in (128, 64, 32, 16, 8):
        if B % cand == 0 and B // cand >= 2:
            return cand
    for cand in (128, 64, 32, 16, 8):
        if B % cand == 0:
            return cand
    return B  # odd batch: single full-batch tile (legal: block == full dim)


def _time_tile(S):
    # Collapse the whole time axis into one grid step when it is small (removes
    # all per-step grid/DMA overhead); otherwise block in multiples of 8 steps.
    if S <= 64:
        return S
    for cand in (64, 32, 16, 8):
        if S % cand == 0:
            return cand
    return S  # TODO(synk): very long, non-8-divisible sequences fully unroll.


def _vmem_budget(exact_bytes):
    # Exact (double-buffered) working set + 25% margin for compiler scratch,
    # floored at 8 MiB and capped at 40 MiB so it also fits v7x's 64 MiB VMEM.
    return int(min(max(int(exact_bytes * 1.25), 8 << 20), 40 << 20))


def cov_lstm_forward(x, params, *, matmul_dtype=jnp.bfloat16):
    """x: (B, S, I), batch_first, exactly like the PyTorch module."""
    B, S, I = x.shape
    w_ih = params["weight_ih"]                                   # (4H, I)
    w_hh = params["weight_hh"]                                   # (4H, H)
    bias = (params["bias_ih"] + params["bias_hh"]).astype(jnp.float32)
    w_lin = params["linear_w"]                                   # (O, H*S)
    b_lin = params["linear_b"]                                   # (O,)
    H = w_hh.shape[1]
    O = w_lin.shape[0]
    G = 4 * H
    Opad = _ceil_to(O, 128)                                      # lane-dense output width

    # --- parameter re-layout (pure glue; no per-element compute hoisted) -------
    wx4 = jnp.transpose(w_ih, (1, 0)).astype(matmul_dtype)       # (I, 4H)
    wh4 = jnp.transpose(w_hh, (1, 0)).astype(matmul_dtype)       # (H, 4H)
    b4 = bias.reshape(1, G)                                      # (1, 4H)  f32
    # PyTorch flattens the contiguous (B, S, H) LSTM output, so Linear column
    # t*H + j multiplies h_t[j]; pad the output dim to a multiple of 128 lanes.
    wlin = jnp.transpose(w_lin.reshape(O, S, H), (1, 2, 0))      # (S, H, O)
    wlin = jnp.pad(wlin, ((0, 0), (0, 0), (0, Opad - O))).astype(matmul_dtype)
    blin = jnp.pad(b_lin.astype(jnp.float32), (0, Opad - O)).reshape(1, Opad)
    x = x.astype(jnp.float32)                                    # streamed as-is (B,S,I)

    TB = _batch_tile(B)
    nb = B // TB
    TS = _time_tile(S)
    nt = S // TS

    mm_bytes = jnp.dtype(matmul_dtype).itemsize
    vmem = _vmem_budget(
        2 * (_tile_bytes((TB, TS, I), 4)              # x block (double-buffered)
             + _tile_bytes((I, G), mm_bytes)          # Wx4
             + _tile_bytes((H, G), mm_bytes)          # Wh4
             + _tile_bytes((1, G), 4)                 # gate bias
             + _tile_bytes((TS, H, Opad), mm_bytes)   # Wlin block
             + _tile_bytes((1, Opad), 4)              # Linear bias
             + _tile_bytes((TB, Opad), 4)             # output block
             + _tile_bytes((TB, H), 4)))              # h + c scratch

    out = pl.pallas_call(
        _cov_lstm_kernel,
        out_shape=jax.ShapeDtypeStruct((B, Opad), jnp.float32),
        grid_spec=pltpu.PrefetchScalarGridSpec(
            num_scalar_prefetch=0,
            grid=(nb, nt),
            in_specs=[
                pl.BlockSpec((TB, TS, I), lambda b, t: (b, t, 0)),    # x (streamed)
                pl.BlockSpec((I, G), lambda b, t: (0, 0)),            # Wx4 (resident)
                pl.BlockSpec((H, G), lambda b, t: (0, 0)),            # Wh4 (resident)
                pl.BlockSpec((1, G), lambda b, t: (0, 0)),            # gate bias
                pl.BlockSpec((TS, H, Opad), lambda b, t: (t, 0, 0)),  # Wlin (streamed)
                pl.BlockSpec((1, Opad), lambda b, t: (0, 0)),         # Linear bias
            ],
            out_specs=pl.BlockSpec((TB, Opad), lambda b, t: (b, 0)),
            scratch_shapes=[
                pltpu.VMEM((TB, H), jnp.float32),     # h
                pltpu.VMEM((TB, H), jnp.float32),     # c
            ],
        ),
        compiler_params=pltpu.CompilerParams(
            dimension_semantics=("parallel", "arbitrary"),
            vmem_limit_bytes=vmem,
        ),
    )(x, wx4, wh4, b4, wlin, blin)
    return out[:, :O]


def cov_lstm_reference(x, params):
    """Pure-JAX replica of the PyTorch forward for verification."""
    B, S, I = x.shape
    w_ih, w_hh = params["weight_ih"], params["weight_hh"]
    b_ih, b_hh = params["bias_ih"], params["bias_hh"]
    w_lin, b_lin = params["linear_w"], params["linear_b"]
    H = w_hh.shape[1]
    h = jnp.zeros((B, H), jnp.float32)
    c = jnp.zeros((B, H), jnp.float32)
    outs = []
    for t in range(S):
        xt = x[:, t, :]
        gates = xt @ w_ih.T + b_ih + h @ w_hh.T + b_hh            # (B, 4H)
        i_g = jax.nn.sigmoid(gates[:, 0 * H:1 * H])
        f_g = jax.nn.sigmoid(gates[:, 1 * H:2 * H])
        g_g = jnp.tanh(gates[:, 2 * H:3 * H])
        o_g = jax.nn.sigmoid(gates[:, 3 * H:4 * H])
        c = f_g * c + i_g * g_g
        h = o_g * jnp.tanh(c)
        outs.append(h)
    out_seq = jnp.stack(outs, axis=1)                             # (B, S, H)
    flat = out_seq.reshape(B, S * H)                              # matches x.reshape(-1, H*S)
    return flat @ w_lin.T + b_lin


def init_params(key, seq, input_size, hidden_size, output_size):
    H, I, S, O = hidden_size, input_size, seq, output_size
    ks = jax.random.split(key, 6)
    scale = 1.0 / jnp.sqrt(jnp.float32(H))
    u = lambda k, shape: jax.random.uniform(k, shape, jnp.float32, -scale, scale)
    return {
        "weight_ih": u(ks[0], (4 * H, I)),
        "weight_hh": u(ks[1], (4 * H, H)),
        "bias_ih": u(ks[2], (4 * H,)),
        "bias_hh": u(ks[3], (4 * H,)),
        "linear_w": u(ks[4], (O, H * S)),
        "linear_b": u(ks[5], (O,)),
    }


if __name__ == "__main__":
    # batch=16 (two 8-row tiles so the "parallel" axis can split across v7x's
    # two TensorCores), seq=8, input=1, hidden=32 (4H = 128 lane-aligned fused
    # gate width), output=1 -- consistent with CovLSTM(seq=8, input_size=1,
    # hidden_size=32, output_size=1).
    B, S, I, H, O = 16, 8, 1, 32, 1
    key = jax.random.PRNGKey(0)
    kx, kp = jax.random.split(key)
    x = jax.random.normal(kx, (B, S, I), jnp.float32)
    params = init_params(kp, seq=S, input_size=I, hidden_size=H, output_size=O)
    ref = cov_lstm_reference(x, params)

    # Exact f32-operand path: tight check against the f32 reference.
    out_f32 = jax.block_until_ready(
        cov_lstm_forward(x, params, matmul_dtype=jnp.float32))
    assert out_f32.shape == (B, O)
    assert jnp.allclose(out_f32, ref, atol=1e-4, rtol=1e-4), (out_f32, ref)

    # Default path: bf16 MXU operands (f32 state / gate math / accumulation);
    # tolerance loosened accordingly (weight rounding compounds over S steps).
    out_bf16 = jax.block_until_ready(cov_lstm_forward(x, params))
    assert out_bf16.shape == (B, O)
    assert jnp.allclose(out_bf16, ref, atol=2e-2, rtol=2e-2), (out_bf16, ref)

    print("KERNEL_OK")
</pallas_src>

<mosaic_0001>
module attributes {stable_mosaic.version = 11 : i64} {
  func.func @_cov_lstm_kernel(%arg0: i32, %arg1: i32, %arg2: memref<8x8x1xf32, #tpu.memory_space<vmem>>, %arg3: memref<1x128xf32, #tpu.memory_space<vmem>>, %arg4: memref<32x128xf32, #tpu.memory_space<vmem>>, %arg5: memref<1x128xf32, #tpu.memory_space<vmem>>, %arg6: memref<8x32x128xf32, #tpu.memory_space<vmem>>, %arg7: memref<1x128xf32, #tpu.memory_space<vmem>>, %arg8: memref<8x128xf32, #tpu.memory_space<vmem>>, %arg9: memref<8x32xf32, #tpu.memory_space<vmem>>, %arg10: memref<8x32xf32, #tpu.memory_space<vmem>>) attributes {dimension_semantics = [#tpu.dimension_semantics<parallel>, #tpu.dimension_semantics<arbitrary>], iteration_bounds = array<i64: 2, 1>, scalar_prefetch = 0 : i64, scratch_operands = 2 : i64, tpu.core_type = #tpu.core_type<tc>, window_params = [{transform_indices = @transform_0, window_bounds = array<i64: 8, 8, 1>}, {pipeline_mode = #tpu.pipeline_mode<synchronous>, transform_indices = @transform_1, window_bounds = array<i64: 1, 128>}, {pipeline_mode = #tpu.pipeline_mode<synchronous>, transform_indices = @transform_2, window_bounds = array<i64: 32, 128>}, {pipeline_mode = #tpu.pipeline_mode<synchronous>, transform_indices = @transform_3, window_bounds = array<i64: 1, 128>}, {transform_indices = @transform_4, window_bounds = array<i64: 8, 32, 128>}, {pipeline_mode = #tpu.pipeline_mode<synchronous>, transform_indices = @transform_5, window_bounds = array<i64: 1, 128>}, {transform_indices = @transform_6, window_bounds = array<i64: 8, 128>}]} {
    %c0_i32 = arith.constant 0 : i32
    %0 = arith.cmpi eq, %arg1, %c0_i32 : i32
    %1 = arith.extui %0 : i1 to i32
    %c0_i32_0 = arith.constant 0 : i32
    %2 = arith.cmpi ne, %1, %c0_i32_0 : i32
    scf.if %2 {
      %cst_125 = arith.constant 0.000000e+00 : f32
      %259 = vector.broadcast %cst_125 : f32 to vector<8x32xf32>
      %c0_126 = arith.constant 0 : index
      %c0_127 = arith.constant 0 : index
      %260 = vector.load %arg9[%c0_126, %c0_127] : memref<8x32xf32, #tpu.memory_space<vmem>>, vector<8x32xf32>
      tpu.vector_store %arg9[%c0_126, %c0_127], %259 {strides = array<i32>} : memref<8x32xf32, #tpu.memory_space<vmem>>, vector<8x32xf32>,
      %cst_128 = arith.constant 0.000000e+00 : f32
      %261 = vector.broadcast %cst_128 : f32 to vector<8x32xf32>
      %c0_129 = arith.constant 0 : index
      %c0_130 = arith.constant 0 : index
      %262 = vector.load %arg10[%c0_129, %c0_130] : memref<8x32xf32, #tpu.memory_space<vmem>>, vector<8x32xf32>
      tpu.vector_store %arg10[%c0_129, %c0_130], %261 {strides = array<i32>} : memref<8x32xf32, #tpu.memory_space<vmem>>, vector<8x32xf32>,
      %c0_131 = arith.constant 0 : index
      %c0_132 = arith.constant 0 : index
      %263 = vector.load %arg7[%c0_131, %c0_132] : memref<1x128xf32, #tpu.memory_space<vmem>>, vector<1x128xf32>
      %264 = vector.shape_cast %263 : vector<1x128xf32> to vector<1x128xf32>
      %265 = vector.broadcast %264 : vector<1x128xf32> to vector<8x128xf32>
      %c0_133 = arith.constant 0 : index
      %c0_134 = arith.constant 0 : index
      %266 = vector.load %arg8[%c0_133, %c0_134] : memref<8x128xf32, #tpu.memory_space<vmem>>, vector<8x128xf32>
      tpu.vector_store %arg8[%c0_133, %c0_134], %265 {strides = array<i32>} : memref<8x128xf32, #tpu.memory_space<vmem>>, vector<8x128xf32>,
    } else {
    }
    %c0 = arith.constant 0 : index
    %c0_1 = arith.constant 0 : index
    %3 = vector.load %arg9[%c0, %c0_1] : memref<8x32xf32, #tpu.memory_space<vmem>>, vector<8x32xf32>
    %c0_2 = arith.constant 0 : index
    %c0_3 = arith.constant 0 : index
    %4 = vector.load %arg10[%c0_2, %c0_3] : memref<8x32xf32, #tpu.memory_space<vmem>>, vector<8x32xf32>
    %cst = arith.constant 0.000000e+00 : f32
    %5 = vector.broadcast %cst : f32 to vector<8x128xf32>
    %c0_4 = arith.constant 0 : index
    %c0_5 = arith.constant 0 : index
    %c0_6 = arith.constant 0 : index
    %6 = vector.load %arg2[%c0_4, %c0_5, %c0_6] : memref<8x8x1xf32, #tpu.memory_space<vmem>>, vector<8x1x1xf32>
    %7 = vector.shape_cast %6 : vector<8x1x1xf32> to vector<8x1xf32>
    %c0_7 = arith.constant 0 : index
    %c0_8 = arith.constant 0 : index
    %8 = vector.load %arg3[%c0_7, %c0_8] : memref<1x128xf32, #tpu.memory_space<vmem>>, vector<1x128xf32>
    %9 = vector.broadcast %7 : vector<8x1xf32> to vector<8x128xf32>
    %10 = vector.broadcast %8 : vector<1x128xf32> to vector<8x128xf32>
    %11 = arith.mulf %9, %10 : vector<8x128xf32>
    %c0_9 = arith.constant 0 : index
    %c0_10 = arith.constant 0 : index
    %12 = vector.load %arg5[%c0_9, %c0_10] : memref<1x128xf32, #tpu.memory_space<vmem>>, vector<1x128xf32>
    %13 = vector.broadcast %12 : vector<1x128xf32> to vector<8x128xf32>
    %14 = arith.addf %11, %13 : vector<8x128xf32>
    %c0_11 = arith.constant 0 : index
    %c0_12 = arith.constant 0 : index
    %15 = vector.load %arg4[%c0_11, %c0_12] : memref<32x128xf32, #tpu.memory_space<vmem>>, vector<32x128xf32>
    %cst_13 = arith.constant dense<0.000000e+00> : vector<8x128xf32>
    %16 = tpu.matmul %3, %15, %cst_13 {dimension_numbers = #tpu.dot_dimension_numbers<[1], [0], [0], [1], [0, 0, 1, 1], [], []>} : vector<8x32xf32>, vector<32x128xf32>, vector<8x128xf32> -> vector<8x128xf32>
    %17 = arith.addf %14, %16 : vector<8x128xf32>
    %18 = arith.negf %17 : vector<8x128xf32>
    %19 = math.exp %18 : vector<8x128xf32>
    %cst_14 = arith.constant 1.000000e+00 : f32
    %20 = vector.broadcast %cst_14 : f32 to vector<8x128xf32>
    %21 = arith.addf %20, %19 : vector<8x128xf32>
    %22 = arith.divf %20, %21 : vector<8x128xf32>
    %23 = math.tanh %17 : vector<8x128xf32>
    %24 = vector.extract_strided_slice %22 {offsets = [0, 0], sizes = [8, 32], strides = [1, 1]} : vector<8x128xf32> to vector<8x32xf32>
    %25 = vector.extract_strided_slice %22 {offsets = [0, 32], sizes = [8, 32], strides = [1, 1]} : vector<8x128xf32> to vector<8x32xf32>
    %26 = vector.extract_strided_slice %23 {offsets = [0, 64], sizes = [8, 32], strides = [1, 1]} : vector<8x128xf32> to vector<8x32xf32>
    %27 = vector.extract_strided_slice %22 {offsets = [0, 96], sizes = [8, 32], strides = [1, 1]} : vector<8x128xf32> to vector<8x32xf32>
    %28 = arith.mulf %25, %4 : vector<8x32xf32>
    %29 = arith.mulf %24, %26 : vector<8x32xf32>
    %30 = arith.addf %28, %29 : vector<8x32xf32>
    %31 = math.tanh %30 : vector<8x32xf32>
    %32 = arith.mulf %27, %31 : vector<8x32xf32>
    %c0_15 = arith.constant 0 : index
    %c0_16 = arith.constant 0 : index
    %c0_17 = arith.constant 0 : index
    %33 = vector.load %arg6[%c0_15, %c0_16, %c0_17] : memref<8x32x128xf32, #tpu.memory_space<vmem>>, vector<1x32x128xf32>
    %34 = vector.shape_cast %33 : vector<1x32x128xf32> to vector<32x128xf32>
    %cst_18 = arith.constant dense<0.000000e+00> : vector<8x128xf32>
    %35 = tpu.matmul %32, %34, %cst_18 {dimension_numbers = #tpu.dot_dimension_numbers<[1], [0], [0], [1], [0, 0, 1, 1], [], []>} : vector<8x32xf32>, vector<32x128xf32>, vector<8x128xf32> -> vector<8x128xf32>
    %36 = arith.addf %5, %35 : vector<8x128xf32>
    %c0_19 = arith.constant 0 : index
    %c1 = arith.constant 1 : index
    %c0_20 = arith.constant 0 : index
    %37 = vector.load %arg2[%c0_19, %c1, %c0_20] : memref<8x8x1xf32, #tpu.memory_space<vmem>>, vector<8x1x1xf32>
    %38 = vector.shape_cast %37 : vector<8x1x1xf32> to vector<8x1xf32>
    %c0_21 = arith.constant 0 : index
    %c0_22 = arith.constant 0 : index
    %39 = vector.load %arg3[%c0_21, %c0_22] : memref<1x128xf32, #tpu.memory_space<vmem>>, vector<1x128xf32>
    %40 = vector.broadcast %38 : vector<8x1xf32> to vector<8x128xf32>
    %41 = vector.broadcast %39 : vector<1x128xf32> to vector<8x128xf32>
    %42 = arith.mulf %40, %41 : vector<8x128xf32>
    %c0_23 = arith.constant 0 : index
    %c0_24 = arith.constant 0 : index
    %43 = vector.load %arg5[%c0_23, %c0_24] : memref<1x128xf32, #tpu.memory_space<vmem>>, vector<1x128xf32>
    %44 = vector.broadcast %43 : vector<1x128xf32> to vector<8x128xf32>
    %45 = arith.addf %42, %44 : vector<8x128xf32>
    %c0_25 = arith.constant 0 : index
    %c0_26 = arith.constant 0 : index
    %46 = vector.load %arg4[%c0_25, %c0_26] : memref<32x128xf32, #tpu.memory_space<vmem>>, vector<32x128xf32>
    %cst_27 = arith.constant dense<0.000000e+00> : vector<8x128xf32>
    %47 = tpu.matmul %32, %46, %cst_27 {dimension_numbers = #tpu.dot_dimension_numbers<[1], [0], [0], [1], [0, 0, 1, 1], [], []>} : vector<8x32xf32>, vector<32x128xf32>, vector<8x128xf32> -> vector<8x128xf32>
    %48 = arith.addf %45, %47 : vector<8x128xf32>
    %49 = arith.negf %48 : vector<8x128xf32>
    %50 = math.exp %49 : vector<8x128xf32>
    %cst_28 = arith.constant 1.000000e+00 : f32
    %51 = vector.broadcast %cst_28 : f32 to vector<8x128xf32>
    %52 = arith.addf %51, %50 : vector<8x128xf32>
    %53 = arith.divf %51, %52 : vector<8x128xf32>
    %54 = math.tanh %48 : vector<8x128xf32>
    %55 = vector.extract_strided_slice %53 {offsets = [0, 0], sizes = [8, 32], strides = [1, 1]} : vector<8x128xf32> to vector<8x32xf32>
    %56 = vector.extract_strided_slice %53 {offsets = [0, 32], sizes = [8, 32], strides = [1, 1]} : vector<8x128xf32> to vector<8x32xf32>
    %57 = vector.extract_strided_slice %54 {offsets = [0, 64], sizes = [8, 32], strides = [1, 1]} : vector<8x128xf32> to vector<8x32xf32>
    %58 = vector.extract_strided_slice %53 {offsets = [0, 96], sizes = [8, 32], strides = [1, 1]} : vector<8x128xf32> to vector<8x32xf32>
    %59 = arith.mulf %56, %30 : vector<8x32xf32>
    %60 = arith.mulf %55, %57 : vector<8x32xf32>
    %61 = arith.addf %59, %60 : vector<8x32xf32>
    %62 = math.tanh %61 : vector<8x32xf32>
    %63 = arith.mulf %58, %62 : vector<8x32xf32>
    %c1_29 = arith.constant 1 : index
    %c0_30 = arith.constant 0 : index
    %c0_31 = arith.constant 0 : index
    %64 = vector.load %arg6[%c1_29, %c0_30, %c0_31] : memref<8x32x128xf32, #tpu.memory_space<vmem>>, vector<1x32x128xf32>
    %65 = vector.shape_cast %64 : vector<1x32x128xf32> to vector<32x128xf32>
    %cst_32 = arith.constant dense<0.000000e+00> : vector<8x128xf32>
    %66 = tpu.matmul %63, %65, %cst_32 {dimension_numbers = #tpu.dot_dimension_numbers<[1], [0], [0], [1], [0, 0, 1, 1], [], []>} : vector<8x32xf32>, vector<32x128xf32>, vector<8x128xf32> -> vector<8x128xf32>
    %67 = arith.addf %36, %66 : vector<8x128xf32>
    %c0_33 = arith.constant 0 : index
    %c2 = arith.constant 2 : index
    %c0_34 = arith.constant 0 : index
    %68 = vector.load %arg2[%c0_33, %c2, %c0_34] : memref<8x8x1xf32, #tpu.memory_space<vmem>>, vector<8x1x1xf32>
    %69 = vector.shape_cast %68 : vector<8x1x1xf32> to vector<8x1xf32>
    %c0_35 = arith.constant 0 : index
    %c0_36 = arith.constant 0 : index
    %70 = vector.load %arg3[%c0_35, %c0_36] : memref<1x128xf32, #tpu.memory_space<vmem>>, vector<1x128xf32>
    %71 = vector.broadcast %69 : vector<8x1xf32> to vector<8x128xf32>
    %72 = vector.broadcast %70 : vector<1x128xf32> to vector<8x128xf32>
    %73 = arith.mulf %71, %72 : vector<8x128xf32>
    %c0_37 = arith.constant 0 : index
    %c0_38 = arith.constant 0 : index
    %74 = vector.load %arg5[%c0_37, %c0_38] : memref<1x128xf32, #tpu.memory_space<vmem>>, vector<1x128xf32>
    %75 = vector.broadcast %74 : vector<1x128xf32> to vector<8x128xf32>
    %76 = arith.addf %73, %75 : vector<8x128xf32>
    %c0_39 = arith.constant 0 : index
    %c0_40 = arith.constant 0 : index
    %77 = vector.load %arg4[%c0_39, %c0_40] : memref<32x128xf32, #tpu.memory_space<vmem>>, vector<32x128xf32>
    %cst_41 = arith.constant dense<0.000000e+00> : vector<8x128xf32>
    %78 = tpu.matmul %63, %77, %cst_41 {dimension_numbers = #tpu.dot_dimension_numbers<[1], [0], [0], [1], [0, 0, 1, 1], [], []>} : vector<8x32xf32>, vector<32x128xf32>, vector<8x128xf32> -> vector<8x128xf32>
    %79 = arith.addf %76, %78 : vector<8x128xf32>
    %80 = arith.negf %79 : vector<8x128xf32>
    %81 = math.exp %80 : vector<8x128xf32>
    %cst_42 = arith.constant 1.000000e+00 : f32
    %82 = vector.broadcast %cst_42 : f32 to vector<8x128xf32>
    %83 = arith.addf %82, %81 : vector<8x128xf32>
    %84 = arith.divf %82, %83 : vector<8x128xf32>
    %85 = math.tanh %79 : vector<8x128xf32>
    %86 = vector.extract_strided_slice %84 {offsets = [0, 0], sizes = [8, 32], strides = [1, 1]} : vector<8x128xf32> to vector<8x32xf32>
    %87 = vector.extract_strided_slice %84 {offsets = [0, 32], sizes = [8, 32], strides = [1, 1]} : vector<8x128xf32> to vector<8x32xf32>
    %88 = vector.extract_strided_slice %85 {offsets = [0, 64], sizes = [8, 32], strides = [1, 1]} : vector<8x128xf32> to vector<8x32xf32>
    %89 = vector.extract_strided_slice %84 {offsets = [0, 96], sizes = [8, 32], strides = [1, 1]} : vector<8x128xf32> to vector<8x32xf32>
    %90 = arith.mulf %87, %61 : vector<8x32xf32>
    %91 = arith.mulf %86, %88 : vector<8x32xf32>
    %92 = arith.addf %90, %91 : vector<8x32xf32>
    %93 = math.tanh %92 : vector<8x32xf32>
    %94 = arith.mulf %89, %93 : vector<8x32xf32>
    %c2_43 = arith.constant 2 : index
    %c0_44 = arith.constant 0 : index
    %c0_45 = arith.constant 0 : index
    %95 = vector.load %arg6[%c2_43, %c0_44, %c0_45] : memref<8x32x128xf32, #tpu.memory_space<vmem>>, vector<1x32x128xf32>
    %96 = vector.shape_cast %95 : vector<1x32x128xf32> to vector<32x128xf32>
    %cst_46 = arith.constant dense<0.000000e+00> : vector<8x128xf32>
    %97 = tpu.matmul %94, %96, %cst_46 {dimension_numbers = #tpu.dot_dimension_numbers<[1], [0], [0], [1], [0, 0, 1, 1], [], []>} : vector<8x32xf32>, vector<32x128xf32>, vector<8x128xf32> -> vector<8x128xf32>
    %98 = arith.addf %67, %97 : vector<8x128xf32>
    %c0_47 = arith.constant 0 : index
    %c3 = arith.constant 3 : index
    %c0_48 = arith.constant 0 : index
    %99 = vector.load %arg2[%c0_47, %c3, %c0_48] : memref<8x8x1xf32, #tpu.memory_space<vmem>>, vector<8x1x1xf32>
    %100 = vector.shape_cast %99 : vector<8x1x1xf32> to vector<8x1xf32>
    %c0_49 = arith.constant 0 : index
    %c0_50 = arith.constant 0 : index
    %101 = vector.load %arg3[%c0_49, %c0_50] : memref<1x128xf32, #tpu.memory_space<vmem>>, vector<1x128xf32>
    %102 = vector.broadcast %100 : vector<8x1xf32> to vector<8x128xf32>
    %103 = vector.broadcast %101 : vector<1x128xf32> to vector<8x128xf32>
    %104 = arith.mulf %102, %103 : vector<8x128xf32>
    %c0_51 = arith.constant 0 : index
    %c0_52 = arith.constant 0 : index
    %105 = vector.load %arg5[%c0_51, %c0_52] : memref<1x128xf32, #tpu.memory_space<vmem>>, vector<1x128xf32>
    %106 = vector.broadcast %105 : vector<1x128xf32> to vector<8x128xf32>
    %107 = arith.addf %104, %106 : vector<8x128xf32>
    %c0_53 = arith.constant 0 : index
    %c0_54 = arith.constant 0 : index
    %108 = vector.load %arg4[%c0_53, %c0_54] : memref<32x128xf32, #tpu.memory_space<vmem>>, vector<32x128xf32>
    %cst_55 = arith.constant dense<0.000000e+00> : vector<8x128xf32>
    %109 = tpu.matmul %94, %108, %cst_55 {dimension_numbers = #tpu.dot_dimension_numbers<[1], [0], [0], [1], [0, 0, 1, 1], [], []>} : vector<8x32xf32>, vector<32x128xf32>, vector<8x128xf32> -> vector<8x128xf32>
    %110 = arith.addf %107, %109 : vector<8x128xf32>
    %111 = arith.negf %110 : vector<8x128xf32>
    %112 = math.exp %111 : vector<8x128xf32>
    %cst_56 = arith.constant 1.000000e+00 : f32
    %113 = vector.broadcast %cst_56 : f32 to vector<8x128xf32>
    %114 = arith.addf %113, %112 : vector<8x128xf32>
    %115 = arith.divf %113, %114 : vector<8x128xf32>
    %116 = math.tanh %110 : vector<8x128xf32>
    %117 = vector.extract_strided_slice %115 {offsets = [0, 0], sizes = [8, 32], strides = [1, 1]} : vector<8x128xf32> to vector<8x32xf32>
    %118 = vector.extract_strided_slice %115 {offsets = [0, 32], sizes = [8, 32], strides = [1, 1]} : vector<8x128xf32> to vector<8x32xf32>
    %119 = vector.extract_strided_slice %116 {offsets = [0, 64], sizes = [8, 32], strides = [1, 1]} : vector<8x128xf32> to vector<8x32xf32>
    %120 = vector.extract_strided_slice %115 {offsets = [0, 96], sizes = [8, 32], strides = [1, 1]} : vector<8x128xf32> to vector<8x32xf32>
    %121 = arith.mulf %118, %92 : vector<8x32xf32>
    %122 = arith.mulf %117, %119 : vector<8x32xf32>
    %123 = arith.addf %121, %122 : vector<8x32xf32>
    %124 = math.tanh %123 : vector<8x32xf32>
    %125 = arith.mulf %120, %124 : vector<8x32xf32>
    %c3_57 = arith.constant 3 : index
    %c0_58 = arith.constant 0 : index
    %c0_59 = arith.constant 0 : index
    %126 = vector.load %arg6[%c3_57, %c0_58, %c0_59] : memref<8x32x128xf32, #tpu.memory_space<vmem>>, vector<1x32x128xf32>
    %127 = vector.shape_cast %126 : vector<1x32x128xf32> to vector<32x128xf32>
    %cst_60 = arith.constant dense<0.000000e+00> : vector<8x128xf32>
    %128 = tpu.matmul %125, %127, %cst_60 {dimension_numbers = #tpu.dot_dimension_numbers<[1], [0], [0], [1], [0, 0, 1, 1], [], []>} : vector<8x32xf32>, vector<32x128xf32>, vector<8x128xf32> -> vector<8x128xf32>
    %129 = arith.addf %98, %128 : vector<8x128xf32>
    %c0_61 = arith.constant 0 : index
    %c4 = arith.constant 4 : index
    %c0_62 = arith.constant 0 : index
    %130 = vector.load %arg2[%c0_61, %c4, %c0_62] : memref<8x8x1xf32, #tpu.memory_space<vmem>>, vector<8x1x1xf32>
    %131 = vector.shape_cast %130 : vector<8x1x1xf32> to vector<8x1xf32>
    %c0_63 = arith.constant 0 : index
    %c0_64 = arith.constant 0 : index
    %132 = vector.load %arg3[%c0_63, %c0_64] : memref<1x128xf32, #tpu.memory_space<vmem>>, vector<1x128xf32>
    %133 = vector.broadcast %131 : vector<8x1xf32> to vector<8x128xf32>
    %134 = vector.broadcast %132 : vector<1x128xf32> to vector<8x128xf32>
    %135 = arith.mulf %133, %134 : vector<8x128xf32>
    %c0_65 = arith.constant 0 : index
    %c0_66 = arith.constant 0 : index
    %136 = vector.load %arg5[%c0_65, %c0_66] : memref<1x128xf32, #tpu.memory_space<vmem>>, vector<1x128xf32>
    %137 = vector.broadcast %136 : vector<1x128xf32> to vector<8x128xf32>
    %138 = arith.addf %135, %137 : vector<8x128xf32>
    %c0_67 = arith.constant 0 : index
    %c0_68 = arith.constant 0 : index
    %139 = vector.load %arg4[%c0_67, %c0_68] : memref<32x128xf32, #tpu.memory_space<vmem>>, vector<32x128xf32>
    %cst_69 = arith.constant dense<0.000000e+00> : vector<8x128xf32>
    %140 = tpu.matmul %125, %139, %cst_69 {dimension_numbers = #tpu.dot_dimension_numbers<[1], [0], [0], [1], [0, 0, 1, 1], [], []>} : vector<8x32xf32>, vector<32x128xf32>, vector<8x128xf32> -> vector<8x128xf32>
    %141 = arith.addf %138, %140 : vector<8x128xf32>
    %142 = arith.negf %141 : vector<8x128xf32>
    %143 = math.exp %142 : vector<8x128xf32>
    %cst_70 = arith.constant 1.000000e+00 : f32
    %144 = vector.broadcast %cst_70 : f32 to vector<8x128xf32>
    %145 = arith.addf %144, %143 : vector<8x128xf32>
    %146 = arith.divf %144, %145 : vector<8x128xf32>
    %147 = math.tanh %141 : vector<8x128xf32>
    %148 = vector.extract_strided_slice %146 {offsets = [0, 0], sizes = [8, 32], strides = [1, 1]} : vector<8x128xf32> to vector<8x32xf32>
    %149 = vector.extract_strided_slice %146 {offsets = [0, 32], sizes = [8, 32], strides = [1, 1]} : vector<8x128xf32> to vector<8x32xf32>
    %150 = vector.extract_strided_slice %147 {offsets = [0, 64], sizes = [8, 32], strides = [1, 1]} : vector<8x128xf32> to vector<8x32xf32>
    %151 = vector.extract_strided_slice %146 {offsets = [0, 96], sizes = [8, 32], strides = [1, 1]} : vector<8x128xf32> to vector<8x32xf32>
    %152 = arith.mulf %149, %123 : vector<8x32xf32>
    %153 = arith.mulf %148, %150 : vector<8x32xf32>
    %154 = arith.addf %152, %153 : vector<8x32xf32>
    %155 = math.tanh %154 : vector<8x32xf32>
    %156 = arith.mulf %151, %155 : vector<8x32xf32>
    %c4_71 = arith.constant 4 : index
    %c0_72 = arith.constant 0 : index
    %c0_73 = arith.constant 0 : index
    %157 = vector.load %arg6[%c4_71, %c0_72, %c0_73] : memref<8x32x128xf32, #tpu.memory_space<vmem>>, vector<1x32x128xf32>
    %158 = vector.shape_cast %157 : vector<1x32x128xf32> to vector<32x128xf32>
    %cst_74 = arith.constant dense<0.000000e+00> : vector<8x128xf32>
    %159 = tpu.matmul %156, %158, %cst_74 {dimension_numbers = #tpu.dot_dimension_numbers<[1], [0], [0], [1], [0, 0, 1, 1], [], []>} : vector<8x32xf32>, vector<32x128xf32>, vector<8x128xf32> -> vector<8x128xf32>
    %160 = arith.addf %129, %159 : vector<8x128xf32>
    %c0_75 = arith.constant 0 : index
    %c5 = arith.constant 5 : index
    %c0_76 = arith.constant 0 : index
    %161 = vector.load %arg2[%c0_75, %c5, %c0_76] : memref<8x8x1xf32, #tpu.memory_space<vmem>>, vector<8x1x1xf32>
    %162 = vector.shape_cast %161 : vector<8x1x1xf32> to vector<8x1xf32>
    %c0_77 = arith.constant 0 : index
    %c0_78 = arith.constant 0 : index
    %163 = vector.load %arg3[%c0_77, %c0_78] : memref<1x128xf32, #tpu.memory_space<vmem>>, vector<1x128xf32>
    %164 = vector.broadcast %162 : vector<8x1xf32> to vector<8x128xf32>
    %165 = vector.broadcast %163 : vector<1x128xf32> to vector<8x128xf32>
    %166 = arith.mulf %164, %165 : vector<8x128xf32>
    %c0_79 = arith.constant 0 : index
    %c0_80 = arith.constant 0 : index
    %167 = vector.load %arg5[%c0_79, %c0_80] : memref<1x128xf32, #tpu.memory_space<vmem>>, vector<1x128xf32>
    %168 = vector.broadcast %167 : vector<1x128xf32> to vector<8x128xf32>
    %169 = arith.addf %166, %168 : vector<8x128xf32>
    %c0_81 = arith.constant 0 : index
    %c0_82 = arith.constant 0 : index
    %170 = vector.load %arg4[%c0_81, %c0_82] : memref<32x128xf32, #tpu.memory_space<vmem>>, vector<32x128xf32>
    %cst_83 = arith.constant dense<0.000000e+00> : vector<8x128xf32>
    %171 = tpu.matmul %156, %170, %cst_83 {dimension_numbers = #tpu.dot_dimension_numbers<[1], [0], [0], [1], [0, 0, 1, 1], [], []>} : vector<8x32xf32>, vector<32x128xf32>, vector<8x128xf32> -> vector<8x128xf32>
    %172 = arith.addf %169, %171 : vector<8x128xf32>
    %173 = arith.negf %172 : vector<8x128xf32>
    %174 = math.exp %173 : vector<8x128xf32>
    %cst_84 = arith.constant 1.000000e+00 : f32
    %175 = vector.broadcast %cst_84 : f32 to vector<8x128xf32>
    %176 = arith.addf %175, %174 : vector<8x128xf32>
    %177 = arith.divf %175, %176 : vector<8x128xf32>
    %178 = math.tanh %172 : vector<8x128xf32>
    %179 = vector.extract_strided_slice %177 {offsets = [0, 0], sizes = [8, 32], strides = [1, 1]} : vector<8x128xf32> to vector<8x32xf32>
    %180 = vector.extract_strided_slice %177 {offsets = [0, 32], sizes = [8, 32], strides = [1, 1]} : vector<8x128xf32> to vector<8x32xf32>
    %181 = vector.extract_strided_slice %178 {offsets = [0, 64], sizes = [8, 32], strides = [1, 1]} : vector<8x128xf32> to vector<8x32xf32>
    %182 = vector.extract_strided_slice %177 {offsets = [0, 96], sizes = [8, 32], strides = [1, 1]} : vector<8x128xf32> to vector<8x32xf32>
    %183 = arith.mulf %180, %154 : vector<8x32xf32>
    %184 = arith.mulf %179, %181 : vector<8x32xf32>
    %185 = arith.addf %183, %184 : vector<8x32xf32>
    %186 = math.tanh %185 : vector<8x32xf32>
    %187 = arith.mulf %182, %186 : vector<8x32xf32>
    %c5_85 = arith.constant 5 : index
    %c0_86 = arith.constant 0 : index
    %c0_87 = arith.constant 0 : index
    %188 = vector.load %arg6[%c5_85, %c0_86, %c0_87] : memref<8x32x128xf32, #tpu.memory_space<vmem>>, vector<1x32x128xf32>
    %189 = vector.shape_cast %188 : vector<1x32x128xf32> to vector<32x128xf32>
    %cst_88 = arith.constant dense<0.000000e+00> : vector<8x128xf32>
    %190 = tpu.matmul %187, %189, %cst_88 {dimension_numbers = #tpu.dot_dimension_numbers<[1], [0], [0], [1], [0, 0, 1, 1], [], []>} : vector<8x32xf32>, vector<32x128xf32>, vector<8x128xf32> -> vector<8x128xf32>
    %191 = arith.addf %160, %190 : vector<8x128xf32>
    %c0_89 = arith.constant 0 : index
    %c6 = arith.constant 6 : index
    %c0_90 = arith.constant 0 : index
    %192 = vector.load %arg2[%c0_89, %c6, %c0_90] : memref<8x8x1xf32, #tpu.memory_space<vmem>>, vector<8x1x1xf32>
    %193 = vector.shape_cast %192 : vector<8x1x1xf32> to vector<8x1xf32>
    %c0_91 = arith.constant 0 : index
    %c0_92 = arith.constant 0 : index
    %194 = vector.load %arg3[%c0_91, %c0_92] : memref<1x128xf32, #tpu.memory_space<vmem>>, vector<1x128xf32>
    %195 = vector.broadcast %193 : vector<8x1xf32> to vector<8x128xf32>
    %196 = vector.broadcast %194 : vector<1x128xf32> to vector<8x128xf32>
    %197 = arith.mulf %195, %196 : vector<8x128xf32>
    %c0_93 = arith.constant 0 : index
    %c0_94 = arith.constant 0 : index
    %198 = vector.load %arg5[%c0_93, %c0_94] : memref<1x128xf32, #tpu.memory_space<vmem>>, vector<1x128xf32>
    %199 = vector.broadcast %198 : vector<1x128xf32> to vector<8x128xf32>
    %200 = arith.addf %197, %199 : vector<8x128xf32>
    %c0_95 = arith.constant 0 : index
    %c0_96 = arith.constant 0 : index
    %201 = vector.load %arg4[%c0_95, %c0_96] : memref<32x128xf32, #tpu.memory_space<vmem>>, vector<32x128xf32>
    %cst_97 = arith.constant dense<0.000000e+00> : vector<8x128xf32>
    %202 = tpu.matmul %187, %201, %cst_97 {dimension_numbers = #tpu.dot_dimension_numbers<[1], [0], [0], [1], [0, 0, 1, 1], [], []>} : vector<8x32xf32>, vector<32x128xf32>, vector<8x128xf32> -> vector<8x128xf32>
    %203 = arith.addf %200, %202 : vector<8x128xf32>
    %204 = arith.negf %203 : vector<8x128xf32>
    %205 = math.exp %204 : vector<8x128xf32>
    %cst_98 = arith.constant 1.000000e+00 : f32
    %206 = vector.broadcast %cst_98 : f32 to vector<8x128xf32>
    %207 = arith.addf %206, %205 : vector<8x128xf32>
    %208 = arith.divf %206, %207 : vector<8x128xf32>
    %209 = math.tanh %203 : vector<8x128xf32>
    %210 = vector.extract_strided_slice %208 {offsets = [0, 0], sizes = [8, 32], strides = [1, 1]} : vector<8x128xf32> to vector<8x32xf32>
    %211 = vector.extract_strided_slice %208 {offsets = [0, 32], sizes = [8, 32], strides = [1, 1]} : vector<8x128xf32> to vector<8x32xf32>
    %212 = vector.extract_strided_slice %209 {offsets = [0, 64], sizes = [8, 32], strides = [1, 1]} : vector<8x128xf32> to vector<8x32xf32>
    %213 = vector.extract_strided_slice %208 {offsets = [0, 96], sizes = [8, 32], strides = [1, 1]} : vector<8x128xf32> to vector<8x32xf32>
    %214 = arith.mulf %211, %185 : vector<8x32xf32>
    %215 = arith.mulf %210, %212 : vector<8x32xf32>
    %216 = arith.addf %214, %215 : vector<8x32xf32>
    %217 = math.tanh %216 : vector<8x32xf32>
    %218 = arith.mulf %213, %217 : vector<8x32xf32>
    %c6_99 = arith.constant 6 : index
    %c0_100 = arith.constant 0 : index
    %c0_101 = arith.constant 0 : index
    %219 = vector.load %arg6[%c6_99, %c0_100, %c0_101] : memref<8x32x128xf32, #tpu.memory_space<vmem>>, vector<1x32x128xf32>
    %220 = vector.shape_cast %219 : vector<1x32x128xf32> to vector<32x128xf32>
    %cst_102 = arith.constant dense<0.000000e+00> : vector<8x128xf32>
    %221 = tpu.matmul %218, %220, %cst_102 {dimension_numbers = #tpu.dot_dimension_numbers<[1], [0], [0], [1], [0, 0, 1, 1], [], []>} : vector<8x32xf32>, vector<32x128xf32>, vector<8x128xf32> -> vector<8x128xf32>
    %222 = arith.addf %191, %221 : vector<8x128xf32>
    %c0_103 = arith.constant 0 : index
    %c7 = arith.constant 7 : index
    %c0_104 = arith.constant 0 : index
    %223 = vector.load %arg2[%c0_103, %c7, %c0_104] : memref<8x8x1xf32, #tpu.memory_space<vmem>>, vector<8x1x1xf32>
    %224 = vector.shape_cast %223 : vector<8x1x1xf32> to vector<8x1xf32>
    %c0_105 = arith.constant 0 : index
    %c0_106 = arith.constant 0 : index
    %225 = vector.load %arg3[%c0_105, %c0_106] : memref<1x128xf32, #tpu.memory_space<vmem>>, vector<1x128xf32>
    %226 = vector.broadcast %224 : vector<8x1xf32> to vector<8x128xf32>
    %227 = vector.broadcast %225 : vector<1x128xf32> to vector<8x128xf32>
    %228 = arith.mulf %226, %227 : vector<8x128xf32>
    %c0_107 = arith.constant 0 : index
    %c0_108 = arith.constant 0 : index
    %229 = vector.load %arg5[%c0_107, %c0_108] : memref<1x128xf32, #tpu.memory_space<vmem>>, vector<1x128xf32>
    %230 = vector.broadcast %229 : vector<1x128xf32> to vector<8x128xf32>
    %231 = arith.addf %228, %230 : vector<8x128xf32>
    %c0_109 = arith.constant 0 : index
    %c0_110 = arith.constant 0 : index
    %232 = vector.load %arg4[%c0_109, %c0_110] : memref<32x128xf32, #tpu.memory_space<vmem>>, vector<32x128xf32>
    %cst_111 = arith.constant dense<0.000000e+00> : vector<8x128xf32>
    %233 = tpu.matmul %218, %232, %cst_111 {dimension_numbers = #tpu.dot_dimension_numbers<[1], [0], [0], [1], [0, 0, 1, 1], [], []>} : vector<8x32xf32>, vector<32x128xf32>, vector<8x128xf32> -> vector<8x128xf32>
    %234 = arith.addf %231, %233 : vector<8x128xf32>
    %235 = arith.negf %234 : vector<8x128xf32>
    %236 = math.exp %235 : vector<8x128xf32>
    %cst_112 = arith.constant 1.000000e+00 : f32
    %237 = vector.broadcast %cst_112 : f32 to vector<8x128xf32>
    %238 = arith.addf %237, %236 : vector<8x128xf32>
    %239 = arith.divf %237, %238 : vector<8x128xf32>
    %240 = math.tanh %234 : vector<8x128xf32>
    %241 = vector.extract_strided_slice %239 {offsets = [0, 0], sizes = [8, 32], strides = [1, 1]} : vector<8x128xf32> to vector<8x32xf32>
    %242 = vector.extract_strided_slice %239 {offsets = [0, 32], sizes = [8, 32], strides = [1, 1]} : vector<8x128xf32> to vector<8x32xf32>
    %243 = vector.extract_strided_slice %240 {offsets = [0, 64], sizes = [8, 32], strides = [1, 1]} : vector<8x128xf32> to vector<8x32xf32>
    %244 = vector.extract_strided_slice %239 {offsets = [0, 96], sizes = [8, 32], strides = [1, 1]} : vector<8x128xf32> to vector<8x32xf32>
    %245 = arith.mulf %242, %216 : vector<8x32xf32>
    %246 = arith.mulf %241, %243 : vector<8x32xf32>
    %247 = arith.addf %245, %246 : vector<8x32xf32>
    %248 = math.tanh %247 : vector<8x32xf32>
    %249 = arith.mulf %244, %248 : vector<8x32xf32>
    %c7_113 = arith.constant 7 : index
    %c0_114 = arith.constant 0 : index
    %c0_115 = arith.constant 0 : index
    %250 = vector.load %arg6[%c7_113, %c0_114, %c0_115] : memref<8x32x128xf32, #tpu.memory_space<vmem>>, vector<1x32x128xf32>
    %251 = vector.shape_cast %250 : vector<1x32x128xf32> to vector<32x128xf32>
    %cst_116 = arith.constant dense<0.000000e+00> : vector<8x128xf32>
    %252 = tpu.matmul %249, %251, %cst_116 {dimension_numbers = #tpu.dot_dimension_numbers<[1], [0], [0], [1], [0, 0, 1, 1], [], []>} : vector<8x32xf32>, vector<32x128xf32>, vector<8x128xf32> -> vector<8x128xf32>
    %253 = arith.addf %222, %252 : vector<8x128xf32>
    %c0_117 = arith.constant 0 : index
    %c0_118 = arith.constant 0 : index
    %254 = vector.load %arg9[%c0_117, %c0_118] : memref<8x32xf32, #tpu.memory_space<vmem>>, vector<8x32xf32>
    tpu.vector_store %arg9[%c0_117, %c0_118], %249 {strides = array<i32>} : memref<8x32xf32, #tpu.memory_space<vmem>>, vector<8x32xf32>,
    %c0_119 = arith.constant 0 : index
    %c0_120 = arith.constant 0 : index
    %255 = vector.load %arg10[%c0_119, %c0_120] : memref<8x32xf32, #tpu.memory_space<vmem>>, vector<8x32xf32>
    tpu.vector_store %arg10[%c0_119, %c0_120], %247 {strides = array<i32>} : memref<8x32xf32, #tpu.memory_space<vmem>>, vector<8x32xf32>,
    %c0_121 = arith.constant 0 : index
    %c0_122 = arith.constant 0 : index
    %256 = vector.load %arg8[%c0_121, %c0_122] : memref<8x128xf32, #tpu.memory_space<vmem>>, vector<8x128xf32>
    %257 = arith.addf %256, %253 : vector<8x128xf32>
    %c0_123 = arith.constant 0 : index
    %c0_124 = arith.constant 0 : index
    %258 = vector.load %arg8[%c0_123, %c0_124] : memref<8x128xf32, #tpu.memory_space<vmem>>, vector<8x128xf32>
    tpu.vector_store %arg8[%c0_123, %c0_124], %257 {strides = array<i32>} : memref<8x128xf32, #tpu.memory_space<vmem>>, vector<8x128xf32>,
    return
  }
  func.func @transform_0(%arg0: i32, %arg1: i32) -> (i32, i32, i32) {
    %c0_i32 = arith.constant 0 : i32
    %c0_i32_0 = arith.constant 0 : i32
    return %arg0, %arg1, %c0_i32 : i32, i32, i32
  }
  func.func @transform_1(%arg0: i32, %arg1: i32) -> (i32, i32) {
    %c0_i32 = arith.constant 0 : i32
    %c0_i32_0 = arith.constant 0 : i32
    %c0_i32_1 = arith.constant 0 : i32
    return %c0_i32, %c0_i32_0 : i32, i32
  }
  func.func @transform_2(%arg0: i32, %arg1: i32) -> (i32, i32) {
    %c0_i32 = arith.constant 0 : i32
    %c0_i32_0 = arith.constant 0 : i32
    %c0_i32_1 = arith.constant 0 : i32
    return %c0_i32, %c0_i32_0 : i32, i32
  }
  func.func @transform_3(%arg0: i32, %arg1: i32) -> (i32, i32) {
    %c0_i32 = arith.constant 0 : i32
    %c0_i32_0 = arith.constant 0 : i32
    %c0_i32_1 = arith.constant 0 : i32
    return %c0_i32, %c0_i32_0 : i32, i32
  }
  func.func @transform_4(%arg0: i32, %arg1: i32) -> (i32, i32, i32) {
    %c0_i32 = arith.constant 0 : i32
    %c0_i32_0 = arith.constant 0 : i32
    %c0_i32_1 = arith.constant 0 : i32
    return %arg1, %c0_i32, %c0_i32_0 : i32, i32, i32
  }
  func.func @transform_5(%arg0: i32, %arg1: i32) -> (i32, i32) {
    %c0_i32 = arith.constant 0 : i32
    %c0_i32_0 = arith.constant 0 : i32
    %c0_i32_1 = arith.constant 0 : i32
    return %c0_i32, %c0_i32_0 : i32, i32
  }
  func.func @transform_6(%arg0: i32, %arg1: i32) -> (i32, i32) {
    %c0_i32 = arith.constant 0 : i32
    %c0_i32_0 = arith.constant 0 : i32
    return %arg0, %c0_i32 : i32, i32
  }
}

</mosaic_0001>

<llo_original>
// kernel: tpu_custom_call.1
$region0: #{tpu_custom_call.1}
  #allocation0 [shape = 'u32[]', space=smem, size = 0x4, offset = 0x4, fixed_abs, tag = 'smem constant byte address 0x4 - core index']
  #allocation1 [shape = 'u32[144,128]{1,0:T(1,128)}', space=vmem, size = 0x12000, scoped, tag = 'internal scratch']
  #allocation2 [shape = 'f32[8,32]{1,0:T(8,128)}', space=vmem, size = 0x1000, scoped, tag = 'scratch operand']
  #allocation3 [shape = 'f32[8,32]{1,0:T(8,128)}', space=vmem, size = 0x1000, scoped, tag = 'scratch operand']
  %s0 = inlined_call_operand.vmem [shape: f32[16,8,1], index: 0, kind: input, shape index: {}]
  %s1 = inlined_call_operand.vmem [shape: f32[1,128], index: 1, kind: input, shape index: {}]
  %s2 = inlined_call_operand.vmem [shape: f32[32,128], index: 2, kind: input, shape index: {}]
  %s3 = inlined_call_operand.vmem [shape: f32[1,128], index: 3, kind: input, shape index: {}]
  %s4 = inlined_call_operand.hbm [shape: f32[8,32,128], index: 4, kind: input, shape index: {}]
  %s5 = inlined_call_operand.vmem [shape: f32[1,128], index: 5, kind: input, shape index: {}]
  %s6 = inlined_call_operand.hbm [shape: f32[16,128], index: 6, kind: output, shape index: {}]
  %s7 = sld [smem:[#allocation0]]
  $region65: #{tpu_custom_call.1} parent=0
    _
  %s9 = ssub.s32 1, %s7
  %s10 = scalar_select 0, %s9, %s7
  $region1: #{tpu_custom_call.1} parent=0
    #allocation4 [shape = 'u8[131072]{0}', space=vmem, size = 0x20000, scoped, tag = 'input window, operand 4, single buffered']
    #allocation5 [shape = 's32[2]{0}', space=sflag, size = 0x8, scoped, tag = 'scoped memory for tpu_custom_call.1']
    #allocation6 [shape = 's32[2]{0}', space=sflag, size = 0x8, scoped, tag = 'scoped memory for tpu_custom_call.1']
    #allocation7 [shape = 'u8[8192]{0}', space=vmem, size = 0x2000, scoped, tag = 'output window, operand 0']
    %11 = vsyncpa [#allocation5], 0
    %12 = vsyncpa [#allocation6], 0
    %s13 = scalar_lea.sflag [#allocation6], 1
    %14 = vsyncpa %s13, 0
    loop: start=0, step=1, limit=4
    $region2: #{tpu_custom_call.1} parent=1 // loop_pre_header
      _
    $region3: #{tpu_custom_call.1} parent=1 // loop_header
      %s16 = sphi 0, %s20
      %p17 = scmp.ge.s32.totalorder %s16, 4
      %s23 = sphi 0, %s35
      %s24 = sphi 0, %s31
      %s25 = sphi 0, %s23
      %s26 = sphi 0, %s24
      %s27 = sphi 0, %s25
      %s28 = sphi 0, %s26
      %s40 = sphi 0, %s42
      %s43 = sphi 0, %s40
      %s44 = sphi 0, %s43
      %s60 = sphi 0, %s44
      %s64 = sphi 0, %s64
      %s66 = sphi 0, %s64
      %s67 = sphi 0, %s66
      %s81 = sphi 0, %s67
      %s85 = sphi 0, %s85
      %s87 = sphi 0, %s85
      %s88 = sphi 0, %s87
      %s102 = sphi 0, %s88
      %s106 = sphi 0, %s106
      %s108 = sphi 0, %s106
      %s109 = sphi 0, %s108
      %s123 = sphi 0, %s109
      %s129 = sphi 0, %s131
      %s132 = sphi 0, %s129
      %s133 = sphi 0, %s132
      %s149 = sphi 0, %s133
      %s153 = sphi 0, %s153
      %s155 = sphi 0, %s153
      %s156 = sphi 0, %s155
      %s170 = sphi 0, %s156
      %s176 = sphi 0, %s178
      %s179 = sphi 0, %s176
      %s180 = sphi 0, %s179
      %s196 = sphi 0, %s180
    $region4: #{tpu_custom_call.1} parent=1 // loop_header_branch
      %19 = sbr.rel (%p17) target = $region8
    $region5: #{tpu_custom_call.1} parent=1 // loop_body
      %s21 = ssub.s32 %s16, 1
      %s22 = ssub.s32 %s16, 2
      %s29 = sadd.s32 1, %s24
      %p30 = scmp.ge.s32.totalorder %s29, 1
      %s31 = scalar_select %p30, 0, %s29
      %s32 = sadd.s32 1, %s23
      %s33 = scalar_select %p30, %s32, %s23
      %p34 = scmp.ge.s32.totalorder %s33, 2
      %s35 = scalar_select %p34, 0, %s33
      %s36 = ssub.s32 %s23, %s35
      %s37 = ssub.s32 %s24, %s31
      %s38 = sor.u32 %s36, %s37
      %p39 = scmp.eq.s32.totalorder %s38, 0
      %s41 = sadd.s32 %s40, 1
      %s42 = scalar_select %p39, %s40, %s41
      %p45 = pneg %p39
      %p46 = scmp.eq.s32.totalorder %s16, 1
      %p47 = por %p45, %p46
      %p48 = scmp.ne.s32.totalorder %s40, %s43
      %p49 = scmp.eq.s32.totalorder %s16, 0
      %p50 = por %p48, %p49
      %p51 = scmp.ne.s32.totalorder %s40, %s43
      %p52 = scmp.eq.s32.totalorder %s21, 1
      %p53 = por %p51, %p52
      %p54 = scmp.ne.s32.totalorder %s43, %s44
      %p55 = scmp.eq.s32.totalorder %s21, 0
      %p56 = por %p54, %p55
      %p57 = scmp.ne.s32.totalorder %s43, %s44
      %p58 = scmp.eq.s32.totalorder %s22, 1
      %p59 = por %p57, %p58
      %p61 = scmp.ne.s32.totalorder %s44, %s60
      %p62 = scmp.eq.s32.totalorder %s22, 0
      %p63 = por %p61, %p62
      %s65 = sadd.s32 %s64, 1
      %p68 = scmp.eq.s32.totalorder %s16, 1
      %p69 = scmp.ne.s32.totalorder %s64, %s66
      %p70 = scmp.eq.s32.totalorder %s16, 0
      %p71 = por %p69, %p70
      %p72 = scmp.ne.s32.totalorder %s64, %s66
      %p73 = scmp.eq.s32.totalorder %s21, 1
      %p74 = por %p72, %p73
      %p75 = scmp.ne.s32.totalorder %s66, %s67
      %p76 = scmp.eq.s32.totalorder %s21, 0
      %p77 = por %p75, %p76
      %p78 = scmp.ne.s32.totalorder %s66, %s67
      %p79 = scmp.eq.s32.totalorder %s22, 1
      %p80 = por %p78, %p79
      %p82 = scmp.ne.s32.totalorder %s67, %s81
      %p83 = scmp.eq.s32.totalorder %s22, 0
      %p84 = por %p82, %p83
      %s86 = sadd.s32 %s85, 1
      %p89 = scmp.eq.s32.totalorder %s16, 1
      %p90 = scmp.ne.s32.totalorder %s85, %s87
      %p91 = scmp.eq.s32.totalorder %s16, 0
      %p92 = por %p90, %p91
      %p93 = scmp.ne.s32.totalorder %s85, %s87
      %p94 = scmp.eq.s32.totalorder %s21, 1
      %p95 = por %p93, %p94
      %p96 = scmp.ne.s32.totalorder %s87, %s88
      %p97 = scmp.eq.s32.totalorder %s21, 0
      %p98 = por %p96, %p97
      %p99 = scmp.ne.s32.totalorder %s87, %s88
      %p100 = scmp.eq.s32.totalorder %s22, 1
      %p101 = por %p99, %p100
      %p103 = scmp.ne.s32.totalorder %s88, %s102
      %p104 = scmp.eq.s32.totalorder %s22, 0
      %p105 = por %p103, %p104
      %s107 = sadd.s32 %s106, 1
      %p110 = scmp.eq.s32.totalorder %s16, 1
      %p111 = scmp.ne.s32.totalorder %s106, %s108
      %p112 = scmp.eq.s32.totalorder %s16, 0
      %p113 = por %p111, %p112
      %p114 = scmp.ne.s32.totalorder %s106, %s108
      %p115 = scmp.eq.s32.totalorder %s21, 1
      %p116 = por %p114, %p115
      %p117 = scmp.ne.s32.totalorder %s108, %s109
      %p118 = scmp.eq.s32.totalorder %s21, 0
      %p119 = por %p117, %p118
      %p120 = scmp.ne.s32.totalorder %s108, %s109
      %p121 = scmp.eq.s32.totalorder %s22, 1
      %p122 = por %p120, %p121
      %p124 = scmp.ne.s32.totalorder %s109, %s123
      %p125 = scmp.eq.s32.totalorder %s22, 0
      %p126 = por %p124, %p125
      %s127 = ssub.s32 %s24, %s31
      %p128 = scmp.eq.s32.totalorder %s127, 0
      %s130 = sadd.s32 %s129, 1
      %s131 = scalar_select %p128, %s129, %s130
      %p134 = pneg %p128
      %p135 = scmp.eq.s32.totalorder %s16, 1
      %p136 = por %p134, %p135
      %p137 = scmp.ne.s32.totalorder %s129, %s132
      %p138 = scmp.eq.s32.totalorder %s16, 0
      %p139 = por %p137, %p138
      %p140 = scmp.ne.s32.totalorder %s129, %s132
      %p141 = scmp.eq.s32.totalorder %s21, 1
      %p142 = por %p140, %p141
      %p143 = scmp.ne.s32.totalorder %s132, %s133
      %p144 = scmp.eq.s32.totalorder %s21, 0
      %p145 = por %p143, %p144
      %p146 = scmp.ne.s32.totalorder %s132, %s133
      %p147 = scmp.eq.s32.totalorder %s22, 1
      %p148 = por %p146, %p147
      %p150 = scmp.ne.s32.totalorder %s133, %s149
      %p151 = scmp.eq.s32.totalorder %s22, 0
      %p152 = por %p150, %p151
      %s154 = sadd.s32 %s153, 1
      %p157 = scmp.eq.s32.totalorder %s16, 1
      %p158 = scmp.ne.s32.totalorder %s153, %s155
      %p159 = scmp.eq.s32.totalorder %s16, 0
      %p160 = por %p158, %p159
      %p161 = scmp.ne.s32.totalorder %s153, %s155
      %p162 = scmp.eq.s32.totalorder %s21, 1
      %p163 = por %p161, %p162
      %p164 = scmp.ne.s32.totalorder %s155, %s156
      %p165 = scmp.eq.s32.totalorder %s21, 0
      %p166 = por %p164, %p165
      %p167 = scmp.ne.s32.totalorder %s155, %s156
      %p168 = scmp.eq.s32.totalorder %s22, 1
      %p169 = por %p167, %p168
      %p171 = scmp.ne.s32.totalorder %s156, %s170
      %p172 = scmp.eq.s32.totalorder %s22, 0
      %p173 = por %p171, %p172
      %s174 = ssub.s32 %s23, %s35
      %p175 = scmp.eq.s32.totalorder %s174, 0
      %s177 = sadd.s32 %s176, 1
      %s178 = scalar_select %p175, %s176, %s177
      %p181 = pneg %p175
      %p182 = scmp.eq.s32.totalorder %s16, 1
      %p183 = por %p181, %p182
      %p184 = scmp.ne.s32.totalorder %s176, %s179
      %p185 = scmp.eq.s32.totalorder %s16, 0
      %p186 = por %p184, %p185
      %p187 = scmp.ne.s32.totalorder %s176, %s179
      %p188 = scmp.eq.s32.totalorder %s21, 1
      %p189 = por %p187, %p188
      %p190 = scmp.ne.s32.totalorder %s179, %s180
      %p191 = scmp.eq.s32.totalorder %s21, 0
      %p192 = por %p190, %p191
      %p193 = scmp.ne.s32.totalorder %s179, %s180
      %p194 = scmp.eq.s32.totalorder %s22, 1
      %p195 = por %p193, %p194
      %p197 = scmp.ne.s32.totalorder %s180, %s196
      %p198 = scmp.eq.s32.totalorder %s22, 0
      %p199 = por %p197, %p198
      %p200 = scmp.le.s32.totalorder 1, %s16
      %p201 = scmp.lt.s32.totalorder %s16, 3
      %p202 = pnand %p200, %p201
      %p203 = pneg %p202
      // Predicated region
      $region9: #{tpu_custom_call.1} parent=5 // pred_check
        _
      $region10: #{tpu_custom_call.1} parent=5 // pred_check_branch
        %205 = sbr.rel (%p202) target = $region12
      $region11: #{tpu_custom_call.1} parent=5 // pred_region
        %s206 = ssub.s32 %s16, 1
        // Predicated region
        $region13: #{tpu_custom_call.1} parent=11 // pred_check
          %p207 = pneg %p77
        $region14: #{tpu_custom_call.1} parent=11 // pred_check_branch
          %209 = sbr.rel (%p207) target = $region16
        $region15: #{tpu_custom_call.1} parent=11 // pred_region
          _
        $region16: #{tpu_custom_call.1} parent=11 // pred_fallthru
          _
        // Predicated region
        $region17: #{tpu_custom_call.1} parent=11 // pred_check
          %p210 = pneg %p98
        $region18: #{tpu_custom_call.1} parent=11 // pred_check_branch
          %212 = sbr.rel (%p210) target = $region20
        $region19: #{tpu_custom_call.1} parent=11 // pred_region
          _
        $region20: #{tpu_custom_call.1} parent=11 // pred_fallthru
          _
        // Predicated region
        $region21: #{tpu_custom_call.1} parent=11 // pred_check
          %p213 = pneg %p119
        $region22: #{tpu_custom_call.1} parent=11 // pred_check_branch
          %215 = sbr.rel (%p213) target = $region24
        $region23: #{tpu_custom_call.1} parent=11 // pred_region
          _
        $region24: #{tpu_custom_call.1} parent=11 // pred_fallthru
          _
        // Predicated region
        $region25: #{tpu_custom_call.1} parent=11 // pred_check
          %p216 = pneg %p145
        $region26: #{tpu_custom_call.1} parent=11 // pred_check_branch
          %218 = sbr.rel (%p216) target = $region28
        $region27: #{tpu_custom_call.1} parent=11 // pred_region
          %s219 = smul.u32 8, %s26
          %s221 = ssub.s32 4096, 4096
          %222 = vsyncadd [#allocation5], %s221
          %s223 = smul.addr %s219, 4
          %s224 = smul.addr %s223, 128
          %s225 = scalar_lea.hbm %s4, %s224
          %s226 = sshll.u32 [#allocation4], 4
          %s227 = int_to_ptr.vmem [resolvable:$true] %s226
          %232 = dma.hbm_to_vmem [thread:$0]  %s225, 4096, %s227, [#allocation5], 128, 128, 8
        $region28: #{tpu_custom_call.1} parent=11 // pred_fallthru
          _
        // Predicated region
        $region29: #{tpu_custom_call.1} parent=11 // pred_check
          %p233 = pneg %p166
        $region30: #{tpu_custom_call.1} parent=11 // pred_check_branch
          %235 = sbr.rel (%p233) target = $region32
        $region31: #{tpu_custom_call.1} parent=11 // pred_region
          _
        $region32: #{tpu_custom_call.1} parent=11 // pred_fallthru
          _
      $region12: #{tpu_custom_call.1} parent=5 // pred_fallthru
        _
      %p236 = scmp.lt.s32.totalorder %s16, 2
      // Predicated region
      $region33: #{tpu_custom_call.1} parent=5 // pred_check
        %p237 = pneg %p236
      $region34: #{tpu_custom_call.1} parent=5 // pred_check_branch
        %239 = sbr.rel (%p237) target = $region36
      $region35: #{tpu_custom_call.1} parent=5 // pred_region
        // Predicated region
        $region37: #{tpu_custom_call.1} parent=35 // pred_check
          %p240 = pneg %p50
        $region38: #{tpu_custom_call.1} parent=35 // pred_check_branch
          %242 = sbr.rel (%p240) target = $region40
        $region39: #{tpu_custom_call.1} parent=35 // pred_region
          %s243 = smul.u32 8, %s23
          %p244 = scmp.lt.s32.totalorder %s243, 15
          %s245 = scalar_select %p244, %s243, 15
          %p246 = scmp.lt.s32.totalorder %s24, 0
          %s247 = scalar_select %p246, %s24, 0
          %s248 = sadd.s32 %s247, %s245
          %s249 = smul.addr %s248, 8
          %s250 = scalar_lea.vmem %s0, %s249
          %s251 = smul.u32 8, %s23
        $region40: #{tpu_custom_call.1} parent=35 // pred_fallthru
          _
      $region36: #{tpu_custom_call.1} parent=5 // pred_fallthru
        _
      %p252 = scmp.le.s32.totalorder 1, %s16
      %p253 = scmp.lt.s32.totalorder %s16, 3
      %p254 = pnand %p252, %p253
      %p255 = pneg %p254
      // Predicated region
      $region41: #{tpu_custom_call.1} parent=5 // pred_check
        _
      $region42: #{tpu_custom_call.1} parent=5 // pred_check_branch
        %257 = sbr.rel (%p254) target = $region44
      $region43: #{tpu_custom_call.1} parent=5 // pred_region
        %s258 = ssub.s32 %s16, 1
        // Predicated region
        $region45: #{tpu_custom_call.1} parent=43 // pred_check
          %p259 = pneg %p145
        $region46: #{tpu_custom_call.1} parent=43 // pred_check_branch
          %261 = sbr.rel (%p259) target = $region48
        $region47: #{tpu_custom_call.1} parent=43 // pred_region
          %262 = dma.done [#allocation5], 4096
        $region48: #{tpu_custom_call.1} parent=43 // pred_fallthru
          _
        %s263 = smul.u32 8, %s25
        %p264 = scmp.lt.s32.totalorder %s263, 15
        %s265 = scalar_select %p264, %s263, 15
        %p266 = scmp.lt.s32.totalorder %s26, 0
        %s267 = scalar_select %p266, %s26, 0
        %s268 = sadd.s32 %s267, %s265
        %s269 = smul.addr %s268, 8
        %s270 = scalar_lea.vmem %s0, %s269
        %p271 = pneg %p56
        %p272 = pneg %p53
        %p273 = pneg %p77
        %p274 = pneg %p74
        %p275 = pneg %p98
        %p276 = pneg %p95
        %p277 = pneg %p119
        %p278 = pneg %p116
        %p279 = pneg %p145
        %p280 = pneg %p142
        %p281 = pneg %p166
        %p282 = pneg %p163
        %p283 = pneg %p192
        %p284 = pneg %p189
        %s285 = sand.u32 %s179, 1
        %s286 = scalar_lea.sflag [#allocation6], %s285
        %s287 = sand.u32 %s179, 1
        %s288 = smul.addr %s287, 8
        %s289 = scalar_lea.vmem [#allocation7], %s288
        %s290 = smul.u32 8, %s25
        %p291 = scmp.lt.s32.totalorder %s290, 15
        %s292 = scalar_select %p291, %s290, 15
        %p293 = scmp.lt.s32.totalorder %s26, 0
        %s294 = scalar_select %p293, %s26, 0
        %s295 = sadd.s32 %s294, %s292
        %s296 = smul.addr %s295, 8
        %s297 = scalar_lea.vmem %s0, %s296
        %s298 = smul.u32 8, %s25
        %s299 = smul.u32 8, %s26
        %p300 = scmp.eq.s32.totalorder %s26, 0
        // Predicated region
        $region49: #{tpu_custom_call.1} parent=43 // pred_check
          %p301 = pneg %p300
        $region50: #{tpu_custom_call.1} parent=43 // pred_check_branch
          %303 = sbr.rel (%p301) target = $region52
        $region51: #{tpu_custom_call.1} parent=43 // pred_region
          %vm304 = vcmask 261120
          %305 = vst.msk [vmem:[#allocation2] sm:$0xff] %vm304, 0.0
          %306 = vst.msk [vmem:[#allocation3] sm:$0xff] %vm304, 0.0
          %v307 = vld [vmem:[%s5] sm:$0x1]
          %v309 = vlaneseq
          %v310 = vshrl.u32 %v309, 7
          %v311 = vsub.s32 0, %v310
          %v312 = vrot.slane %v307, %v311
          %314 = vst [vmem:[%s289] sm:$0xff] %v312
        $region52: #{tpu_custom_call.1} parent=43 // pred_fallthru
          _
        %v315 = vld [vmem:[#allocation2] sm:$0xff]
        %v316 = vld [vmem:[#allocation3] sm:$0xff]
        %v317 = vld [vmem:[%s297] sm:$0x1]
        %v318 = vld [vmem:[%s297 + $0x8] sm:$0x1]
        %v319 = vld [vmem:[%s297 + $0x10] sm:$0x1]
        %v320 = vld [vmem:[%s297 + $0x18] sm:$0x1]
        %v321 = vld [vmem:[%s297 + $0x20] sm:$0x1]
        %v322 = vld [vmem:[%s297 + $0x28] sm:$0x1]
        %v323 = vld [vmem:[%s297 + $0x30] sm:$0x1]
        %v324 = vld [vmem:[%s297 + $0x38] sm:$0x1]
        %v325 = vld [vmem:[%s1] sm:$0x1]
        %327 = vset.pattern.permute.xlu0 0
        %328 = vperm.xlu0 %327, %v317
        %v329 = vpop.permute.xlu0 %328
        %332 = vset.pattern.permute.xlu0 0
        %333 = vperm.xlu0 %332, %v318
        %v334 = vpop.permute.xlu0 %333
        %337 = vset.pattern.permute.xlu0 0
        %338 = vperm.xlu0 %337, %v319
        %v339 = vpop.permute.xlu0 %338
        %342 = vset.pattern.permute.xlu0 0
        %343 = vperm.xlu0 %342, %v320
        %v344 = vpop.permute.xlu0 %343
        %347 = vset.pattern.permute.xlu0 0
        %348 = vperm.xlu0 %347, %v321
        %v349 = vpop.permute.xlu0 %348
        %352 = vset.pattern.permute.xlu0 0
        %353 = vperm.xlu0 %352, %v322
        %v354 = vpop.permute.xlu0 %353
        %357 = vset.pattern.permute.xlu0 0
        %358 = vperm.xlu0 %357, %v323
        %v359 = vpop.permute.xlu0 %358
        %362 = vset.pattern.permute.xlu0 0
        %363 = vperm.xlu0 %362, %v324
        %v364 = vpop.permute.xlu0 %363
        %v367 = vlaneseq
        %v368 = vshrl.u32 %v367, 7
        %v369 = vsub.s32 0, %v368
        %v370 = vrot.slane %v325, %v369
        %v372 = vmul.f32 %v329, %v370
        %v373 = vmul.f32 %v334, %v370
        %v374 = vmul.f32 %v339, %v370
        %v375 = vmul.f32 %v344, %v370
        %v376 = vmul.f32 %v349, %v370
        %v377 = vmul.f32 %v354, %v370
        %v378 = vmul.f32 %v359, %v370
        %v379 = vmul.f32 %v364, %v370
        %v380 = vld [vmem:[%s3] sm:$0x1]
        %v382 = vlaneseq
        %v383 = vshrl.u32 %v382, 7
        %v384 = vsub.s32 0, %v383
        %v385 = vrot.slane %v380, %v384
        %v387 = vadd.f32 %v372, %v385
        %v388 = vadd.f32 %v373, %v385
        %v389 = vadd.f32 %v374, %v385
        %v390 = vadd.f32 %v375, %v385
        %v391 = vadd.f32 %v376, %v385
        %v392 = vadd.f32 %v377, %v385
        %v393 = vadd.f32 %v378, %v385
        %v394 = vadd.f32 %v379, %v385
        %v395 = vld [vmem:[%s2] sm:$0xff]
        %v396 = vld [vmem:[%s2 + $0x8] sm:$0xff]
        %v397 = vld [vmem:[%s2 + $0x10] sm:$0xff]
        %v398 = vld [vmem:[%s2 + $0x18] sm:$0xff]
        %vm399 = vcmask 261120
        %v401 = vsel %vm399, %v315, 0
        %403 = vmatprep.subr.mxu0 0.0
        %404 = vmatpush1.msra.mxu0 %v395
        %405 = vmatprep.subr.mxu0 0.0
        %406 = vmatpush1.msra.mxu0 %v396
        %407 = vmatprep.subr.mxu0 0.0
        %408 = vmatpush1.msra.mxu0 %v397
        %409 = vmatprep.subr.mxu0 0.0
        %410 = vmatpush1.msra.mxu0 %v398
        %411 = vmatprep.subr.mxu0 0.0
        %412 = vmatpush1.msra.mxu0 0.0
        %413 = vmatprep.subr.mxu0 0.0
        %414 = vmatpush1.msra.mxu0 0.0
        %415 = vmatprep.subr.mxu0 0.0
        %416 = vmatpush1.msra.mxu0 0.0
        %417 = vmatprep.subr.mxu0 0.0
        %418 = vmatpush1.msra.mxu0 0.0
        %419 = vmatprep.subr.mxu0 0.0
        %420 = vmatpush1.msra.mxu0 0.0
        %421 = vmatprep.subr.mxu0 0.0
        %422 = vmatpush1.msra.mxu0 0.0
        %423 = vmatprep.subr.mxu0 0.0
        %424 = vmatpush1.msra.mxu0 0.0
        %425 = vmatprep.subr.mxu0 0.0
        %426 = vmatpush1.msra.mxu0 0.0
        %427 = vmatprep.subr.mxu0 0.0
        %428 = vmatpush1.msra.mxu0 0.0
        %429 = vmatprep.subr.mxu0 0.0
        %430 = vmatpush1.msra.mxu0 0.0
        %431 = vmatprep.subr.mxu0 0.0
        %432 = vmatpush1.msra.mxu0 0.0
        %433 = vmatprep.subr.mxu0 0.0
        %434 = vmatpush1.msra.mxu0 0.0
        %435 = vmatprep.subr.mxu0 0.0
        %436 = vmatpush1.msra.mxu0 0.0
        %437 = vmatprep.subr.mxu0 0.0
        %438 = vmatpush1.msra.mxu0 0.0
        %439 = vmatprep.subr.mxu0 0.0
        %440 = vmatpush1.msra.mxu0 0.0
        %441 = vmatprep.subr.mxu0 0.0
        %442 = vmatpush1.msra.mxu0 0.0
        %443 = vmatprep.subr.mxu0 0.0
        %444 = vmatpush1.msra.mxu0 0.0
        %445 = vmatprep.subr.mxu0 0.0
        %446 = vmatpush1.msra.mxu0 0.0
        %447 = vmatprep.subr.mxu0 0.0
        %448 = vmatpush1.msra.mxu0 0.0
        %449 = vmatprep.subr.mxu0 0.0
        %450 = vmatpush1.msra.mxu0 0.0
        %451 = vmatprep.subr.mxu0 0.0
        %452 = vmatpush1.msra.mxu0 0.0
        %453 = vmatprep.subr.mxu0 0.0
        %454 = vmatpush1.msra.mxu0 0.0
        %455 = vmatprep.subr.mxu0 0.0
        %456 = vmatpush1.msra.mxu0 0.0
        %457 = vmatprep.subr.mxu0 0.0
        %458 = vmatpush1.msra.mxu0 0.0
        %459 = vmatprep.subr.mxu0 0.0
        %460 = vmatpush1.msra.mxu0 0.0
        %461 = vmatprep.subr.mxu0 0.0
        %462 = vmatpush1.msra.mxu0 0.0
        %463 = vmatprep.subr.mxu0 0.0
        %464 = vmatpush1.msra.mxu0 0.0
        %465 = vmatprep.subr.mxu0 0.0
        %466 = vmatpush1.msra.mxu0 0.0
        %467 = vmatprep.mubr.f32.mxu0 0.0
        %468 = vmatmul.mubr.f32.gmra.mrb[0].mxu0 %v401
        %v469 = vpop.f32.mrb[0].mxu0
        %v470 = vadd.f32 0.0, %v469
        %v471 = vpop.f32.mrb[0].mxu0
        %472 = vdwg.mxu0
        %v474 = vrot.slane %v470, 1
        %v475 = vrot.slane %v470, 2
        %v476 = vrot.slane %v470, 3
        %v477 = vrot.slane %v470, 4
        %v478 = vrot.slane %v470, 5
        %v479 = vrot.slane %v470, 6
        %v480 = vrot.slane %v470, 7
        %v489 = vadd.f32 %v387, %v470
        %v490 = vadd.f32 %v388, %v474
        %v491 = vadd.f32 %v389, %v475
        %v492 = vadd.f32 %v390, %v476
        %v493 = vadd.f32 %v391, %v477
        %v494 = vadd.f32 %v392, %v478
        %v495 = vadd.f32 %v393, %v479
        %v496 = vadd.f32 %v394, %v480
        %v497 = vxor.u32 %v489, 2147483648
        %v498 = vxor.u32 %v490, 2147483648
        %v499 = vxor.u32 %v491, 2147483648
        %v500 = vxor.u32 %v492, 2147483648
        %v501 = vxor.u32 %v493, 2147483648
        %v502 = vxor.u32 %v494, 2147483648
        %v503 = vxor.u32 %v495, 2147483648
        %v504 = vxor.u32 %v496, 2147483648
        %v505 = vmul.f32 %v497, 1.442695
        %v506 = vpow.pop %v505
        %v507 = vmul.f32 %v498, 1.442695
        %v508 = vpow.pop %v507
        %v509 = vmul.f32 %v499, 1.442695
        %v510 = vpow.pop %v509
        %v511 = vmul.f32 %v500, 1.442695
        %v512 = vpow.pop %v511
        %v513 = vmul.f32 %v501, 1.442695
        %v514 = vpow.pop %v513
        %v515 = vmul.f32 %v502, 1.442695
        %v516 = vpow.pop %v515
        %v517 = vmul.f32 %v503, 1.442695
        %v518 = vpow.pop %v517
        %v519 = vmul.f32 %v504, 1.442695
        %v520 = vpow.pop %v519
        %v521 = vadd.f32 %v506, 1.0
        %v522 = vadd.f32 %v508, 1.0
        %v523 = vadd.f32 %v510, 1.0
        %v524 = vadd.f32 %v512, 1.0
        %v525 = vadd.f32 %v514, 1.0
        %v526 = vadd.f32 %v516, 1.0
        %v527 = vadd.f32 %v518, 1.0
        %v528 = vadd.f32 %v520, 1.0
        %v529 = vrcp.pop %v521
        %v530 = vmul.f32 1.0, %v529
        %v531 = vrcp.pop %v522
        %v532 = vmul.f32 1.0, %v531
        %v533 = vrcp.pop %v523
        %v534 = vmul.f32 1.0, %v533
        %v535 = vrcp.pop %v524
        %v536 = vmul.f32 1.0, %v535
        %v537 = vrcp.pop %v525
        %v538 = vmul.f32 1.0, %v537
        %v539 = vrcp.pop %v526
        %v540 = vmul.f32 1.0, %v539
        %v541 = vrcp.pop %v527
        %v542 = vmul.f32 1.0, %v541
        %v543 = vrcp.pop %v528
        %v544 = vmul.f32 1.0, %v543
        %v545 = vtanh.pop %v489
        %v546 = vtanh.pop %v490
        %v547 = vtanh.pop %v491
        %v548 = vtanh.pop %v492
        %v549 = vtanh.pop %v493
        %v550 = vtanh.pop %v494
        %v551 = vtanh.pop %v495
        %v552 = vtanh.pop %v496
        %v554 = vrot.slane %v316, 1
        %v555 = vrot.slane %v316, 2
        %v556 = vrot.slane %v316, 3
        %v557 = vrot.slane %v316, 4
        %v558 = vrot.slane %v316, 5
        %v559 = vrot.slane %v316, 6
        %v560 = vrot.slane %v316, 7
        %561 = vrot.lane.b32.xlu0 %v316, 32
        %v562 = vpop.permute.xlu0 %561
        %563 = vrot.lane.b32.xlu0 %v554, 32
        %v564 = vpop.permute.xlu0 %563
        %565 = vrot.lane.b32.xlu0 %v555, 32
        %v566 = vpop.permute.xlu0 %565
        %567 = vrot.lane.b32.xlu0 %v556, 32
        %v568 = vpop.permute.xlu0 %567
        %569 = vrot.lane.b32.xlu0 %v557, 32
        %v570 = vpop.permute.xlu0 %569
        %571 = vrot.lane.b32.xlu0 %v558, 32
        %v572 = vpop.permute.xlu0 %571
        %573 = vrot.lane.b32.xlu0 %v559, 32
        %v574 = vpop.permute.xlu0 %573
        %575 = vrot.lane.b32.xlu0 %v560, 32
        %v576 = vpop.permute.xlu0 %575
        %v585 = vmul.f32 %v530, %v562
        %v586 = vmul.f32 %v532, %v564
        %v587 = vmul.f32 %v534, %v566
        %v588 = vmul.f32 %v536, %v568
        %v589 = vmul.f32 %v538, %v570
        %v590 = vmul.f32 %v540, %v572
        %v591 = vmul.f32 %v542, %v574
        %v592 = vmul.f32 %v544, %v576
        %601 = vrot.lane.b32.xlu0 %v545, 64
        %v602 = vpop.permute.xlu0 %601
        %603 = vrot.lane.b32.xlu0 %v546, 64
        %v604 = vpop.permute.xlu0 %603
        %605 = vrot.lane.b32.xlu0 %v547, 64
        %v606 = vpop.permute.xlu0 %605
        %607 = vrot.lane.b32.xlu0 %v548, 64
        %v608 = vpop.permute.xlu0 %607
        %609 = vrot.lane.b32.xlu0 %v549, 64
        %v610 = vpop.permute.xlu0 %609
        %611 = vrot.lane.b32.xlu0 %v550, 64
        %v612 = vpop.permute.xlu0 %611
        %613 = vrot.lane.b32.xlu0 %v551, 64
        %v614 = vpop.permute.xlu0 %613
        %615 = vrot.lane.b32.xlu0 %v552, 64
        %v616 = vpop.permute.xlu0 %615
        %v625 = vmul.f32 %v530, %v602
        %v626 = vmul.f32 %v532, %v604
        %v627 = vmul.f32 %v534, %v606
        %v628 = vmul.f32 %v536, %v608
        %v629 = vmul.f32 %v538, %v610
        %v630 = vmul.f32 %v540, %v612
        %v631 = vmul.f32 %v542, %v614
        %v632 = vmul.f32 %v544, %v616
        %641 = vrot.lane.b32.xlu0 %v625, 32
        %v642 = vpop.permute.xlu0 %641
        %643 = vrot.lane.b32.xlu0 %v626, 32
        %v644 = vpop.permute.xlu0 %643
        %645 = vrot.lane.b32.xlu0 %v627, 32
        %v646 = vpop.permute.xlu0 %645
        %647 = vrot.lane.b32.xlu0 %v628, 32
        %v648 = vpop.permute.xlu0 %647
        %649 = vrot.lane.b32.xlu0 %v629, 32
        %v650 = vpop.permute.xlu0 %649
        %651 = vrot.lane.b32.xlu0 %v630, 32
        %v652 = vpop.permute.xlu0 %651
        %653 = vrot.lane.b32.xlu0 %v631, 32
        %v654 = vpop.permute.xlu0 %653
        %655 = vrot.lane.b32.xlu0 %v632, 32
        %v656 = vpop.permute.xlu0 %655
        %v665 = vadd.f32 %v585, %v642
        %v666 = vadd.f32 %v586, %v644
        %v667 = vadd.f32 %v587, %v646
        %v668 = vadd.f32 %v588, %v648
        %v669 = vadd.f32 %v589, %v650
        %v670 = vadd.f32 %v590, %v652
        %v671 = vadd.f32 %v591, %v654
        %v672 = vadd.f32 %v592, %v656
        %v673 = vtanh.pop %v665
        %v674 = vtanh.pop %v666
        %v675 = vtanh.pop %v667
        %v676 = vtanh.pop %v668
        %v677 = vtanh.pop %v669
        %v678 = vtanh.pop %v670
        %v679 = vtanh.pop %v671
        %v680 = vtanh.pop %v672
        %689 = vrot.lane.b32.xlu0 %v673, 64
        %v690 = vpop.permute.xlu0 %689
        %691 = vrot.lane.b32.xlu0 %v674, 64
        %v692 = vpop.permute.xlu0 %691
        %693 = vrot.lane.b32.xlu0 %v675, 64
        %v694 = vpop.permute.xlu0 %693
        %695 = vrot.lane.b32.xlu0 %v676, 64
        %v696 = vpop.permute.xlu0 %695
        %697 = vrot.lane.b32.xlu0 %v677, 64
        %v698 = vpop.permute.xlu0 %697
        %699 = vrot.lane.b32.xlu0 %v678, 64
        %v700 = vpop.permute.xlu0 %699
        %701 = vrot.lane.b32.xlu0 %v679, 64
        %v702 = vpop.permute.xlu0 %701
        %703 = vrot.lane.b32.xlu0 %v680, 64
        %v704 = vpop.permute.xlu0 %703
        %v713 = vmul.f32 %v530, %v690
        %v714 = vmul.f32 %v532, %v692
        %v715 = vmul.f32 %v534, %v694
        %v716 = vmul.f32 %v536, %v696
        %v717 = vmul.f32 %v538, %v698
        %v718 = vmul.f32 %v540, %v700
        %v719 = vmul.f32 %v542, %v702
        %v720 = vmul.f32 %v544, %v704
        %v721 = vld [vmem:[#allocation4] sm:$0xff]
        %v722 = vld [vmem:[#allocation4 + $0x8] sm:$0xff]
        %v723 = vld [vmem:[#allocation4 + $0x10] sm:$0xff]
        %v724 = vld [vmem:[#allocation4 + $0x18] sm:$0xff]
        %v725 = vld [vmem:[%s297 + $0x1] sm:$0x1]
        %v726 = vld [vmem:[%s297 + $0x9] sm:$0x1]
        %v727 = vld [vmem:[%s297 + $0x11] sm:$0x1]
        %v728 = vld [vmem:[%s297 + $0x19] sm:$0x1]
        %v729 = vld [vmem:[%s297 + $0x21] sm:$0x1]
        %v730 = vld [vmem:[%s297 + $0x29] sm:$0x1]
        %v731 = vld [vmem:[%s297 + $0x31] sm:$0x1]
        %v732 = vld [vmem:[%s297 + $0x39] sm:$0x1]
        %734 = vset.pattern.permute.xlu0 0
        %735 = vperm.xlu0 %734, %v725
        %v736 = vpop.permute.xlu0 %735
        %739 = vset.pattern.permute.xlu0 0
        %740 = vperm.xlu0 %739, %v726
        %v741 = vpop.permute.xlu0 %740
        %744 = vset.pattern.permute.xlu0 0
        %745 = vperm.xlu0 %744, %v727
        %v746 = vpop.permute.xlu0 %745
        %749 = vset.pattern.permute.xlu0 0
        %750 = vperm.xlu0 %749, %v728
        %v751 = vpop.permute.xlu0 %750
        %754 = vset.pattern.permute.xlu0 0
        %755 = vperm.xlu0 %754, %v729
        %v756 = vpop.permute.xlu0 %755
        %759 = vset.pattern.permute.xlu0 0
        %760 = vperm.xlu0 %759, %v730
        %v761 = vpop.permute.xlu0 %760
        %764 = vset.pattern.permute.xlu0 0
        %765 = vperm.xlu0 %764, %v731
        %v766 = vpop.permute.xlu0 %765
        %769 = vset.pattern.permute.xlu0 0
        %770 = vperm.xlu0 %769, %v732
        %v771 = vpop.permute.xlu0 %770
        %v773 = vmul.f32 %v736, %v370
        %v774 = vmul.f32 %v741, %v370
        %v775 = vmul.f32 %v746, %v370
        %v776 = vmul.f32 %v751, %v370
        %v777 = vmul.f32 %v756, %v370
        %v778 = vmul.f32 %v761, %v370
        %v779 = vmul.f32 %v766, %v370
        %v780 = vmul.f32 %v771, %v370
        %v781 = vadd.f32 %v773, %v385
        %v782 = vadd.f32 %v774, %v385
        %v783 = vadd.f32 %v775, %v385
        %v784 = vadd.f32 %v776, %v385
        %v785 = vadd.f32 %v777, %v385
        %v786 = vadd.f32 %v778, %v385
        %v787 = vadd.f32 %v779, %v385
        %v788 = vadd.f32 %v780, %v385
        %v797 = vrot.slane %v714, 7
        %vm798 = vcmask 1041409
        %v799 = vsel %vm798, %v797, %v713
        %v800 = vrot.slane %v715, 6
        %vm801 = vcmask 1042434
        %v802 = vsel %vm801, %v800, %v799
        %v803 = vrot.slane %v716, 5
        %vm804 = vcmask 1043459
        %v805 = vsel %vm804, %v803, %v802
        %v806 = vrot.slane %v717, 4
        %vm807 = vcmask 1044484
        %v808 = vsel %vm807, %v806, %v805
        %v809 = vrot.slane %v718, 3
        %vm810 = vcmask 1045509
        %v811 = vsel %vm810, %v809, %v808
        %v812 = vrot.slane %v719, 2
        %vm813 = vcmask 1046534
        %v814 = vsel %vm813, %v812, %v811
        %v815 = vrot.slane %v720, 1
        %vm816 = vcmask 1047559
        %v817 = vsel %vm816, %v815, %v814
        %818 = vrot.lane.b32.xlu0 %v817, 32
        %v819 = vpop.permute.xlu0 %818
        %v820 = vsel %vm399, %v819, 0
        %822 = vmatprep.subr.mxu0 0.0
        %823 = vmatpush1.msra.mxu0 %v395
        %824 = vmatprep.subr.mxu0 0.0
        %825 = vmatpush1.msra.mxu0 %v396
        %826 = vmatprep.subr.mxu0 0.0
        %827 = vmatpush1.msra.mxu0 %v397
        %828 = vmatprep.subr.mxu0 0.0
        %829 = vmatpush1.msra.mxu0 %v398
        %830 = vmatprep.subr.mxu0 0.0
        %831 = vmatpush1.msra.mxu0 0.0
        %832 = vmatprep.subr.mxu0 0.0
        %833 = vmatpush1.msra.mxu0 0.0
        %834 = vmatprep.subr.mxu0 0.0
        %835 = vmatpush1.msra.mxu0 0.0
        %836 = vmatprep.subr.mxu0 0.0
        %837 = vmatpush1.msra.mxu0 0.0
        %838 = vmatprep.subr.mxu0 0.0
        %839 = vmatpush1.msra.mxu0 0.0
        %840 = vmatprep.subr.mxu0 0.0
        %841 = vmatpush1.msra.mxu0 0.0
        %842 = vmatprep.subr.mxu0 0.0
        %843 = vmatpush1.msra.mxu0 0.0
        %844 = vmatprep.subr.mxu0 0.0
        %845 = vmatpush1.msra.mxu0 0.0
        %846 = vmatprep.subr.mxu0 0.0
        %847 = vmatpush1.msra.mxu0 0.0
        %848 = vmatprep.subr.mxu0 0.0
        %849 = vmatpush1.msra.mxu0 0.0
        %850 = vmatprep.subr.mxu0 0.0
        %851 = vmatpush1.msra.mxu0 0.0
        %852 = vmatprep.subr.mxu0 0.0
        %853 = vmatpush1.msra.mxu0 0.0
        %854 = vmatprep.subr.mxu0 0.0
        %855 = vmatpush1.msra.mxu0 0.0
        %856 = vmatprep.subr.mxu0 0.0
        %857 = vmatpush1.msra.mxu0 0.0
        %858 = vmatprep.subr.mxu0 0.0
        %859 = vmatpush1.msra.mxu0 0.0
        %860 = vmatprep.subr.mxu0 0.0
        %861 = vmatpush1.msra.mxu0 0.0
        %862 = vmatprep.subr.mxu0 0.0
        %863 = vmatpush1.msra.mxu0 0.0
        %864 = vmatprep.subr.mxu0 0.0
        %865 = vmatpush1.msra.mxu0 0.0
        %866 = vmatprep.subr.mxu0 0.0
        %867 = vmatpush1.msra.mxu0 0.0
        %868 = vmatprep.subr.mxu0 0.0
        %869 = vmatpush1.msra.mxu0 0.0
        %870 = vmatprep.subr.mxu0 0.0
        %871 = vmatpush1.msra.mxu0 0.0
        %872 = vmatprep.subr.mxu0 0.0
        %873 = vmatpush1.msra.mxu0 0.0
        %874 = vmatprep.subr.mxu0 0.0
        %875 = vmatpush1.msra.mxu0 0.0
        %876 = vmatprep.subr.mxu0 0.0
        %877 = vmatpush1.msra.mxu0 0.0
        %878 = vmatprep.subr.mxu0 0.0
        %879 = vmatpush1.msra.mxu0 0.0
        %880 = vmatprep.subr.mxu0 0.0
        %881 = vmatpush1.msra.mxu0 0.0
        %882 = vmatprep.subr.mxu0 0.0
        %883 = vmatpush1.msra.mxu0 0.0
        %884 = vmatprep.subr.mxu0 0.0
        %885 = vmatpush1.msra.mxu0 0.0
        %886 = vmatprep.mubr.f32.mxu0 0.0
        %887 = vmatmul.mubr.f32.gmra.mrb[0].mxu0 %v820
        %v888 = vpop.f32.mrb[0].mxu0
        %v889 = vadd.f32 0.0, %v888
        %v890 = vpop.f32.mrb[0].mxu0
        %891 = vdwg.mxu0
        %v893 = vrot.slane %v889, 1
        %v894 = vrot.slane %v889, 2
        %v895 = vrot.slane %v889, 3
        %v896 = vrot.slane %v889, 4
        %v897 = vrot.slane %v889, 5
        %v898 = vrot.slane %v889, 6
        %v899 = vrot.slane %v889, 7
        %v908 = vadd.f32 %v781, %v889
        %v909 = vadd.f32 %v782, %v893
        %v910 = vadd.f32 %v783, %v894
        %v911 = vadd.f32 %v784, %v895
        %v912 = vadd.f32 %v785, %v896
        %v913 = vadd.f32 %v786, %v897
        %v914 = vadd.f32 %v787, %v898
        %v915 = vadd.f32 %v788, %v899
        %v916 = vxor.u32 %v908, 2147483648
        %v917 = vxor.u32 %v909, 2147483648
        %v918 = vxor.u32 %v910, 2147483648
        %v919 = vxor.u32 %v911, 2147483648
        %v920 = vxor.u32 %v912, 2147483648
        %v921 = vxor.u32 %v913, 2147483648
        %v922 = vxor.u32 %v914, 2147483648
        %v923 = vxor.u32 %v915, 2147483648
        %v924 = vmul.f32 %v916, 1.442695
        %v925 = vpow.pop %v924
        %v926 = vmul.f32 %v917, 1.442695
        %v927 = vpow.pop %v926
        %v928 = vmul.f32 %v918, 1.442695
        %v929 = vpow.pop %v928
        %v930 = vmul.f32 %v919, 1.442695
        %v931 = vpow.pop %v930
        %v932 = vmul.f32 %v920, 1.442695
        %v933 = vpow.pop %v932
        %v934 = vmul.f32 %v921, 1.442695
        %v935 = vpow.pop %v934
        %v936 = vmul.f32 %v922, 1.442695
        %v937 = vpow.pop %v936
        %v938 = vmul.f32 %v923, 1.442695
        %v939 = vpow.pop %v938
        %v940 = vadd.f32 %v925, 1.0
        %v941 = vadd.f32 %v927, 1.0
        %v942 = vadd.f32 %v929, 1.0
        %v943 = vadd.f32 %v931, 1.0
        %v944 = vadd.f32 %v933, 1.0
        %v945 = vadd.f32 %v935, 1.0
        %v946 = vadd.f32 %v937, 1.0
        %v947 = vadd.f32 %v939, 1.0
        %v948 = vrcp.pop %v940
        %v949 = vmul.f32 1.0, %v948
        %v950 = vrcp.pop %v941
        %v951 = vmul.f32 1.0, %v950
        %v952 = vrcp.pop %v942
        %v953 = vmul.f32 1.0, %v952
        %v954 = vrcp.pop %v943
        %v955 = vmul.f32 1.0, %v954
        %v956 = vrcp.pop %v944
        %v957 = vmul.f32 1.0, %v956
        %v958 = vrcp.pop %v945
        %v959 = vmul.f32 1.0, %v958
        %v960 = vrcp.pop %v946
        %v961 = vmul.f32 1.0, %v960
        %v962 = vrcp.pop %v947
        %v963 = vmul.f32 1.0, %v962
        %v964 = vtanh.pop %v908
        %v965 = vtanh.pop %v909
        %v966 = vtanh.pop %v910
        %v967 = vtanh.pop %v911
        %v968 = vtanh.pop %v912
        %v969 = vtanh.pop %v913
        %v970 = vtanh.pop %v914
        %v971 = vtanh.pop %v915
        %v972 = vmul.f32 %v949, %v665
        %v973 = vmul.f32 %v951, %v666
        %v974 = vmul.f32 %v953, %v667
        %v975 = vmul.f32 %v955, %v668
        %v976 = vmul.f32 %v957, %v669
        %v977 = vmul.f32 %v959, %v670
        %v978 = vmul.f32 %v961, %v671
        %v979 = vmul.f32 %v963, %v672
        %988 = vrot.lane.b32.xlu0 %v964, 64
        %v989 = vpop.permute.xlu0 %988
        %990 = vrot.lane.b32.xlu0 %v965, 64
        %v991 = vpop.permute.xlu0 %990
        %992 = vrot.lane.b32.xlu0 %v966, 64
        %v993 = vpop.permute.xlu0 %992
        %994 = vrot.lane.b32.xlu0 %v967, 64
        %v995 = vpop.permute.xlu0 %994
        %996 = vrot.lane.b32.xlu0 %v968, 64
        %v997 = vpop.permute.xlu0 %996
        %998 = vrot.lane.b32.xlu0 %v969, 64
        %v999 = vpop.permute.xlu0 %998
        %1000 = vrot.lane.b32.xlu0 %v970, 64
        %v1001 = vpop.permute.xlu0 %1000
        %1002 = vrot.lane.b32.xlu0 %v971, 64
        %v1003 = vpop.permute.xlu0 %1002
        %v1012 = vmul.f32 %v949, %v989
        %v1013 = vmul.f32 %v951, %v991
        %v1014 = vmul.f32 %v953, %v993
        %v1015 = vmul.f32 %v955, %v995
        %v1016 = vmul.f32 %v957, %v997
        %v1017 = vmul.f32 %v959, %v999
        %v1018 = vmul.f32 %v961, %v1001
        %v1019 = vmul.f32 %v963, %v1003
        %1028 = vrot.lane.b32.xlu0 %v1012, 32
        %v1029 = vpop.permute.xlu0 %1028
        %1030 = vrot.lane.b32.xlu0 %v1013, 32
        %v1031 = vpop.permute.xlu0 %1030
        %1032 = vrot.lane.b32.xlu0 %v1014, 32
        %v1033 = vpop.permute.xlu0 %1032
        %1034 = vrot.lane.b32.xlu0 %v1015, 32
        %v1035 = vpop.permute.xlu0 %1034
        %1036 = vrot.lane.b32.xlu0 %v1016, 32
        %v1037 = vpop.permute.xlu0 %1036
        %1038 = vrot.lane.b32.xlu0 %v1017, 32
        %v1039 = vpop.permute.xlu0 %1038
        %1040 = vrot.lane.b32.xlu0 %v1018, 32
        %v1041 = vpop.permute.xlu0 %1040
        %1042 = vrot.lane.b32.xlu0 %v1019, 32
        %v1043 = vpop.permute.xlu0 %1042
        %v1052 = vadd.f32 %v972, %v1029
        %v1053 = vadd.f32 %v973, %v1031
        %v1054 = vadd.f32 %v974, %v1033
        %v1055 = vadd.f32 %v975, %v1035
        %v1056 = vadd.f32 %v976, %v1037
        %v1057 = vadd.f32 %v977, %v1039
        %v1058 = vadd.f32 %v978, %v1041
        %v1059 = vadd.f32 %v979, %v1043
        %v1060 = vtanh.pop %v1052
        %v1061 = vtanh.pop %v1053
        %v1062 = vtanh.pop %v1054
        %v1063 = vtanh.pop %v1055
        %v1064 = vtanh.pop %v1056
        %v1065 = vtanh.pop %v1057
        %v1066 = vtanh.pop %v1058
        %v1067 = vtanh.pop %v1059
        %1076 = vrot.lane.b32.xlu0 %v1060, 64
        %v1077 = vpop.permute.xlu0 %1076
        %1078 = vrot.lane.b32.xlu0 %v1061, 64
        %v1079 = vpop.permute.xlu0 %1078
        %1080 = vrot.lane.b32.xlu0 %v1062, 64
        %v1081 = vpop.permute.xlu0 %1080
        %1082 = vrot.lane.b32.xlu0 %v1063, 64
        %v1083 = vpop.permute.xlu0 %1082
        %1084 = vrot.lane.b32.xlu0 %v1064, 64
        %v1085 = vpop.permute.xlu0 %1084
        %1086 = vrot.lane.b32.xlu0 %v1065, 64
        %v1087 = vpop.permute.xlu0 %1086
        %1088 = vrot.lane.b32.xlu0 %v1066, 64
        %v1089 = vpop.permute.xlu0 %1088
        %1090 = vrot.lane.b32.xlu0 %v1067, 64
        %v1091 = vpop.permute.xlu0 %1090
        %v1100 = vmul.f32 %v949, %v1077
        %v1101 = vmul.f32 %v951, %v1079
        %v1102 = vmul.f32 %v953, %v1081
        %v1103 = vmul.f32 %v955, %v1083
        %v1104 = vmul.f32 %v957, %v1085
        %v1105 = vmul.f32 %v959, %v1087
        %v1106 = vmul.f32 %v961, %v1089
        %v1107 = vmul.f32 %v963, %v1091
        %s1108 = scalar_lea.vmem [#allocation4], 32
        %v1109 = vld [vmem:[%s1108] sm:$0xff]
        %v1110 = vld [vmem:[%s1108 + $0x8] sm:$0xff]
        %v1111 = vld [vmem:[%s1108 + $0x10] sm:$0xff]
        %v1112 = vld [vmem:[%s1108 + $0x18] sm:$0xff]
        %v1121 = vrot.slane %v1101, 7
        %v1122 = vsel %vm798, %v1121, %v1100
        %v1123 = vrot.slane %v1102, 6
        %v1124 = vsel %vm801, %v1123, %v1122
        %v1125 = vrot.slane %v1103, 5
        %v1126 = vsel %vm804, %v1125, %v1124
        %v1127 = vrot.slane %v1104, 4
        %v1128 = vsel %vm807, %v1127, %v1126
        %v1129 = vrot.slane %v1105, 3
        %v1130 = vsel %vm810, %v1129, %v1128
        %v1131 = vrot.slane %v1106, 2
        %v1132 = vsel %vm813, %v1131, %v1130
        %v1133 = vrot.slane %v1107, 1
        %v1134 = vsel %vm816, %v1133, %v1132
        %1135 = vrot.lane.b32.xlu0 %v1134, 32
        %v1136 = vpop.permute.xlu0 %1135
        %v1137 = vsel %vm399, %v1136, 0
        %1139 = vmatprep.subr.mxu0 0.0
        %1140 = vmatpush1.msra.mxu0 %v1109
        %1141 = vmatprep.subr.mxu0 0.0
        %1142 = vmatpush1.msra.mxu0 %v1110
        %1143 = vmatprep.subr.mxu0 0.0
        %1144 = vmatpush1.msra.mxu0 %v1111
        %1145 = vmatprep.subr.mxu0 0.0
        %1146 = vmatpush1.msra.mxu0 %v1112
        %1147 = vmatprep.subr.mxu0 0.0
        %1148 = vmatpush1.msra.mxu0 0.0
        %1149 = vmatprep.subr.mxu0 0.0
        %1150 = vmatpush1.msra.mxu0 0.0
        %1151 = vmatprep.subr.mxu0 0.0
        %1152 = vmatpush1.msra.mxu0 0.0
        %1153 = vmatprep.subr.mxu0 0.0
        %1154 = vmatpush1.msra.mxu0 0.0
        %1155 = vmatprep.subr.mxu0 0.0
        %1156 = vmatpush1.msra.mxu0 0.0
        %1157 = vmatprep.subr.mxu0 0.0
        %1158 = vmatpush1.msra.mxu0 0.0
        %1159 = vmatprep.subr.mxu0 0.0
        %1160 = vmatpush1.msra.mxu0 0.0
        %1161 = vmatprep.subr.mxu0 0.0
        %1162 = vmatpush1.msra.mxu0 0.0
        %1163 = vmatprep.subr.mxu0 0.0
        %1164 = vmatpush1.msra.mxu0 0.0
        %1165 = vmatprep.subr.mxu0 0.0
        %1166 = vmatpush1.msra.mxu0 0.0
        %1167 = vmatprep.subr.mxu0 0.0
        %1168 = vmatpush1.msra.mxu0 0.0
        %1169 = vmatprep.subr.mxu0 0.0
        %1170 = vmatpush1.msra.mxu0 0.0
        %1171 = vmatprep.subr.mxu0 0.0
        %1172 = vmatpush1.msra.mxu0 0.0
        %1173 = vmatprep.subr.mxu0 0.0
        %1174 = vmatpush1.msra.mxu0 0.0
        %1175 = vmatprep.subr.mxu0 0.0
        %1176 = vmatpush1.msra.mxu0 0.0
        %1177 = vmatprep.subr.mxu0 0.0
        %1178 = vmatpush1.msra.mxu0 0.0
        %1179 = vmatprep.subr.mxu0 0.0
        %1180 = vmatpush1.msra.mxu0 0.0
        %1181 = vmatprep.subr.mxu0 0.0
        %1182 = vmatpush1.msra.mxu0 0.0
        %1183 = vmatprep.subr.mxu0 0.0
        %1184 = vmatpush1.msra.mxu0 0.0
        %1185 = vmatprep.subr.mxu0 0.0
        %1186 = vmatpush1.msra.mxu0 0.0
        %1187 = vmatprep.subr.mxu0 0.0
        %1188 = vmatpush1.msra.mxu0 0.0
        %1189 = vmatprep.subr.mxu0 0.0
        %1190 = vmatpush1.msra.mxu0 0.0
        %1191 = vmatprep.subr.mxu0 0.0
        %1192 = vmatpush1.msra.mxu0 0.0
        %1193 = vmatprep.subr.mxu0 0.0
        %1194 = vmatpush1.msra.mxu0 0.0
        %1195 = vmatprep.subr.mxu0 0.0
        %1196 = vmatpush1.msra.mxu0 0.0
        %1197 = vmatprep.subr.mxu0 0.0
        %1198 = vmatpush1.msra.mxu0 0.0
        %1199 = vmatprep.subr.mxu0 0.0
        %1200 = vmatpush1.msra.mxu0 0.0
        %1201 = vmatprep.subr.mxu0 0.0
        %1202 = vmatpush1.msra.mxu0 0.0
        %1203 = vmatprep.mubr.f32.mxu0 0.0
        %1204 = vmatmul.mubr.f32.gmra.mrb[0].mxu0 %v1137
        %v1205 = vpop.f32.mrb[0].mxu0
        %v1206 = vadd.f32 0.0, %v1205
        %v1207 = vpop.f32.mrb[0].mxu0
        %1208 = vdwg.mxu0
        %1209 = vmatprep.subr.mxu0 0.0
        %1210 = vmatpush1.msra.mxu0 %v721
        %1211 = vmatprep.subr.mxu0 0.0
        %1212 = vmatpush1.msra.mxu0 %v722
        %1213 = vmatprep.subr.mxu0 0.0
        %1214 = vmatpush1.msra.mxu0 %v723
        %1215 = vmatprep.subr.mxu0 0.0
        %1216 = vmatpush1.msra.mxu0 %v724
        %1217 = vmatprep.subr.mxu0 0.0
        %1218 = vmatpush1.msra.mxu0 0.0
        %1219 = vmatprep.subr.mxu0 0.0
        %1220 = vmatpush1.msra.mxu0 0.0
        %1221 = vmatprep.subr.mxu0 0.0
        %1222 = vmatpush1.msra.mxu0 0.0
        %1223 = vmatprep.subr.mxu0 0.0
        %1224 = vmatpush1.msra.mxu0 0.0
        %1225 = vmatprep.subr.mxu0 0.0
        %1226 = vmatpush1.msra.mxu0 0.0
        %1227 = vmatprep.subr.mxu0 0.0
        %1228 = vmatpush1.msra.mxu0 0.0
        %1229 = vmatprep.subr.mxu0 0.0
        %1230 = vmatpush1.msra.mxu0 0.0
        %1231 = vmatprep.subr.mxu0 0.0
        %1232 = vmatpush1.msra.mxu0 0.0
        %1233 = vmatprep.subr.mxu0 0.0
        %1234 = vmatpush1.msra.mxu0 0.0
        %1235 = vmatprep.subr.mxu0 0.0
        %1236 = vmatpush1.msra.mxu0 0.0
        %1237 = vmatprep.subr.mxu0 0.0
        %1238 = vmatpush1.msra.mxu0 0.0
        %1239 = vmatprep.subr.mxu0 0.0
        %1240 = vmatpush1.msra.mxu0 0.0
        %1241 = vmatprep.subr.mxu0 0.0
        %1242 = vmatpush1.msra.mxu0 0.0
        %1243 = vmatprep.subr.mxu0 0.0
        %1244 = vmatpush1.msra.mxu0 0.0
        %1245 = vmatprep.subr.mxu0 0.0
        %1246 = vmatpush1.msra.mxu0 0.0
        %1247 = vmatprep.subr.mxu0 0.0
        %1248 = vmatpush1.msra.mxu0 0.0
        %1249 = vmatprep.subr.mxu0 0.0
        %1250 = vmatpush1.msra.mxu0 0.0
        %1251 = vmatprep.subr.mxu0 0.0
        %1252 = vmatpush1.msra.mxu0 0.0
        %1253 = vmatprep.subr.mxu0 0.0
        %1254 = vmatpush1.msra.mxu0 0.0
        %1255 = vmatprep.subr.mxu0 0.0
        %1256 = vmatpush1.msra.mxu0 0.0
        %1257 = vmatprep.subr.mxu0 0.0
        %1258 = vmatpush1.msra.mxu0 0.0
        %1259 = vmatprep.subr.mxu0 0.0
        %1260 = vmatpush1.msra.mxu0 0.0
        %1261 = vmatprep.subr.mxu0 0.0
        %1262 = vmatpush1.msra.mxu0 0.0
        %1263 = vmatprep.subr.mxu0 0.0
        %1264 = vmatpush1.msra.mxu0 0.0
        %1265 = vmatprep.subr.mxu0 0.0
        %1266 = vmatpush1.msra.mxu0 0.0
        %1267 = vmatprep.subr.mxu0 0.0
        %1268 = vmatpush1.msra.mxu0 0.0
        %1269 = vmatprep.subr.mxu0 0.0
        %1270 = vmatpush1.msra.mxu0 0.0
        %1271 = vmatprep.subr.mxu0 0.0
        %1272 = vmatpush1.msra.mxu0 0.0
        %1273 = vmatprep.mubr.f32.mxu0 0.0
        %1274 = vmatmul.mubr.f32.gmra.mrb[0].mxu0 %v820
        %v1275 = vpop.f32.mrb[0].mxu0
        %v1276 = vadd.f32 %v1206, %v1275
        %v1277 = vpop.f32.mrb[0].mxu0
        %1278 = vdwg.mxu0
        %v1279 = vld [vmem:[%s297 + $0x2] sm:$0x1]
        %v1280 = vld [vmem:[%s297 + $0xa] sm:$0x1]
        %v1281 = vld [vmem:[%s297 + $0x12] sm:$0x1]
        %v1282 = vld [vmem:[%s297 + $0x1a] sm:$0x1]
        %v1283 = vld [vmem:[%s297 + $0x22] sm:$0x1]
        %v1284 = vld [vmem:[%s297 + $0x2a] sm:$0x1]
        %v1285 = vld [vmem:[%s297 + $0x32] sm:$0x1]
        %v1286 = vld [vmem:[%s297 + $0x3a] sm:$0x1]
        %1288 = vset.pattern.permute.xlu0 0
        %1289 = vperm.xlu0 %1288, %v1279
        %v1290 = vpop.permute.xlu0 %1289
        %1293 = vset.pattern.permute.xlu0 0
        %1294 = vperm.xlu0 %1293, %v1280
        %v1295 = vpop.permute.xlu0 %1294
        %1298 = vset.pattern.permute.xlu0 0
        %1299 = vperm.xlu0 %1298, %v1281
        %v1300 = vpop.permute.xlu0 %1299
        %1303 = vset.pattern.permute.xlu0 0
        %1304 = vperm.xlu0 %1303, %v1282
        %v1305 = vpop.permute.xlu0 %1304
        %1308 = vset.pattern.permute.xlu0 0
        %1309 = vperm.xlu0 %1308, %v1283
        %v1310 = vpop.permute.xlu0 %1309
        %1313 = vset.pattern.permute.xlu0 0
        %1314 = vperm.xlu0 %1313, %v1284
        %v1315 = vpop.permute.xlu0 %1314
        %1318 = vset.pattern.permute.xlu0 0
        %1319 = vperm.xlu0 %1318, %v1285
        %v1320 = vpop.permute.xlu0 %1319
        %1323 = vset.pattern.permute.xlu0 0
        %1324 = vperm.xlu0 %1323, %v1286
        %v1325 = vpop.permute.xlu0 %1324
        %v1327 = vmul.f32 %v1290, %v370
        %v1328 = vmul.f32 %v1295, %v370
        %v1329 = vmul.f32 %v1300, %v370
        %v1330 = vmul.f32 %v1305, %v370
        %v1331 = vmul.f32 %v1310, %v370
        %v1332 = vmul.f32 %v1315, %v370
        %v1333 = vmul.f32 %v1320, %v370
        %v1334 = vmul.f32 %v1325, %v370
        %v1335 = vadd.f32 %v1327, %v385
        %v1336 = vadd.f32 %v1328, %v385
        %v1337 = vadd.f32 %v1329, %v385
        %v1338 = vadd.f32 %v1330, %v385
        %v1339 = vadd.f32 %v1331, %v385
        %v1340 = vadd.f32 %v1332, %v385
        %v1341 = vadd.f32 %v1333, %v385
        %v1342 = vadd.f32 %v1334, %v385
        %1343 = vmatprep.subr.mxu0 0.0
        %1344 = vmatpush1.msra.mxu0 %v395
        %1345 = vmatprep.subr.mxu0 0.0
        %1346 = vmatpush1.msra.mxu0 %v396
        %1347 = vmatprep.subr.mxu0 0.0
        %1348 = vmatpush1.msra.mxu0 %v397
        %1349 = vmatprep.subr.mxu0 0.0
        %1350 = vmatpush1.msra.mxu0 %v398
        %1351 = vmatprep.subr.mxu0 0.0
        %1352 = vmatpush1.msra.mxu0 0.0
        %1353 = vmatprep.subr.mxu0 0.0
        %1354 = vmatpush1.msra.mxu0 0.0
        %1355 = vmatprep.subr.mxu0 0.0
        %1356 = vmatpush1.msra.mxu0 0.0
        %1357 = vmatprep.subr.mxu0 0.0
        %1358 = vmatpush1.msra.mxu0 0.0
        %1359 = vmatprep.subr.mxu0 0.0
        %1360 = vmatpush1.msra.mxu0 0.0
        %1361 = vmatprep.subr.mxu0 0.0
        %1362 = vmatpush1.msra.mxu0 0.0
        %1363 = vmatprep.subr.mxu0 0.0
        %1364 = vmatpush1.msra.mxu0 0.0
        %1365 = vmatprep.subr.mxu0 0.0
        %1366 = vmatpush1.msra.mxu0 0.0
        %1367 = vmatprep.subr.mxu0 0.0
        %1368 = vmatpush1.msra.mxu0 0.0
        %1369 = vmatprep.subr.mxu0 0.0
        %1370 = vmatpush1.msra.mxu0 0.0
        %1371 = vmatprep.subr.mxu0 0.0
        %1372 = vmatpush1.msra.mxu0 0.0
        %1373 = vmatprep.subr.mxu0 0.0
        %1374 = vmatpush1.msra.mxu0 0.0
        %1375 = vmatprep.subr.mxu0 0.0
        %1376 = vmatpush1.msra.mxu0 0.0
        %1377 = vmatprep.subr.mxu0 0.0
        %1378 = vmatpush1.msra.mxu0 0.0
        %1379 = vmatprep.subr.mxu0 0.0
        %1380 = vmatpush1.msra.mxu0 0.0
        %1381 = vmatprep.subr.mxu0 0.0
        %1382 = vmatpush1.msra.mxu0 0.0
        %1383 = vmatprep.subr.mxu0 0.0
        %1384 = vmatpush1.msra.mxu0 0.0
        %1385 = vmatprep.subr.mxu0 0.0
        %1386 = vmatpush1.msra.mxu0 0.0
        %1387 = vmatprep.subr.mxu0 0.0
        %1388 = vmatpush1.msra.mxu0 0.0
        %1389 = vmatprep.subr.mxu0 0.0
        %1390 = vmatpush1.msra.mxu0 0.0
        %1391 = vmatprep.subr.mxu0 0.0
        %1392 = vmatpush1.msra.mxu0 0.0
        %1393 = vmatprep.subr.mxu0 0.0
        %1394 = vmatpush1.msra.mxu0 0.0
        %1395 = vmatprep.subr.mxu0 0.0
        %1396 = vmatpush1.msra.mxu0 0.0
        %1397 = vmatprep.subr.mxu0 0.0
        %1398 = vmatpush1.msra.mxu0 0.0
        %1399 = vmatprep.subr.mxu0 0.0
        %1400 = vmatpush1.msra.mxu0 0.0
        %1401 = vmatprep.subr.mxu0 0.0
        %1402 = vmatpush1.msra.mxu0 0.0
        %1403 = vmatprep.subr.mxu0 0.0
        %1404 = vmatpush1.msra.mxu0 0.0
        %1405 = vmatprep.subr.mxu0 0.0
        %1406 = vmatpush1.msra.mxu0 0.0
        %1407 = vmatprep.mubr.f32.mxu0 0.0
        %1408 = vmatmul.mubr.f32.gmra.mrb[0].mxu0 %v1137
        %v1409 = vpop.f32.mrb[0].mxu0
        %v1410 = vadd.f32 0.0, %v1409
        %v1411 = vpop.f32.mrb[0].mxu0
        %1412 = vdwg.mxu0
        %v1414 = vrot.slane %v1410, 1
        %v1415 = vrot.slane %v1410, 2
        %v1416 = vrot.slane %v1410, 3
        %v1417 = vrot.slane %v1410, 4
        %v1418 = vrot.slane %v1410, 5
        %v1419 = vrot.slane %v1410, 6
        %v1420 = vrot.slane %v1410, 7
        %v1429 = vadd.f32 %v1335, %v1410
        %v1430 = vadd.f32 %v1336, %v1414
        %v1431 = vadd.f32 %v1337, %v1415
        %v1432 = vadd.f32 %v1338, %v1416
        %v1433 = vadd.f32 %v1339, %v1417
        %v1434 = vadd.f32 %v1340, %v1418
        %v1435 = vadd.f32 %v1341, %v1419
        %v1436 = vadd.f32 %v1342, %v1420
        %v1437 = vxor.u32 %v1429, 2147483648
        %v1438 = vxor.u32 %v1430, 2147483648
        %v1439 = vxor.u32 %v1431, 2147483648
        %v1440 = vxor.u32 %v1432, 2147483648
        %v1441 = vxor.u32 %v1433, 2147483648
        %v1442 = vxor.u32 %v1434, 2147483648
        %v1443 = vxor.u32 %v1435, 2147483648
        %v1444 = vxor.u32 %v1436, 2147483648
        %v1445 = vmul.f32 %v1437, 1.442695
        %v1446 = vpow.pop %v1445
        %v1447 = vmul.f32 %v1438, 1.442695
        %v1448 = vpow.pop %v1447
        %v1449 = vmul.f32 %v1439, 1.442695
        %v1450 = vpow.pop %v1449
        %v1451 = vmul.f32 %v1440, 1.442695
        %v1452 = vpow.pop %v1451
        %v1453 = vmul.f32 %v1441, 1.442695
        %v1454 = vpow.pop %v1453
        %v1455 = vmul.f32 %v1442, 1.442695
        %v1456 = vpow.pop %v1455
        %v1457 = vmul.f32 %v1443, 1.442695
        %v1458 = vpow.pop %v1457
        %v1459 = vmul.f32 %v1444, 1.442695
        %v1460 = vpow.pop %v1459
        %v1461 = vadd.f32 %v1446, 1.0
        %v1462 = vadd.f32 %v1448, 1.0
        %v1463 = vadd.f32 %v1450, 1.0
        %v1464 = vadd.f32 %v1452, 1.0
        %v1465 = vadd.f32 %v1454, 1.0
        %v1466 = vadd.f32 %v1456, 1.0
        %v1467 = vadd.f32 %v1458, 1.0
        %v1468 = vadd.f32 %v1460, 1.0
        %v1469 = vrcp.pop %v1461
        %v1470 = vmul.f32 1.0, %v1469
        %v1471 = vrcp.pop %v1462
        %v1472 = vmul.f32 1.0, %v1471
        %v1473 = vrcp.pop %v1463
        %v1474 = vmul.f32 1.0, %v1473
        %v1475 = vrcp.pop %v1464
        %v1476 = vmul.f32 1.0, %v1475
        %v1477 = vrcp.pop %v1465
        %v1478 = vmul.f32 1.0, %v1477
        %v1479 = vrcp.pop %v1466
        %v1480 = vmul.f32 1.0, %v1479
        %v1481 = vrcp.pop %v1467
        %v1482 = vmul.f32 1.0, %v1481
        %v1483 = vrcp.pop %v1468
        %v1484 = vmul.f32 1.0, %v1483
        %v1485 = vtanh.pop %v1429
        %v1486 = vtanh.pop %v1430
        %v1487 = vtanh.pop %v1431
        %v1488 = vtanh.pop %v1432
        %v1489 = vtanh.pop %v1433
        %v1490 = vtanh.pop %v1434
        %v1491 = vtanh.pop %v1435
        %v1492 = vtanh.pop %v1436
        %v1493 = vmul.f32 %v1470, %v1052
        %v1494 = vmul.f32 %v1472, %v1053
        %v1495 = vmul.f32 %v1474, %v1054
        %v1496 = vmul.f32 %v1476, %v1055
        %v1497 = vmul.f32 %v1478, %v1056
        %v1498 = vmul.f32 %v1480, %v1057
        %v1499 = vmul.f32 %v1482, %v1058
        %v1500 = vmul.f32 %v1484, %v1059
        %1509 = vrot.lane.b32.xlu0 %v1485, 64
        %v1510 = vpop.permute.xlu0 %1509
        %1511 = vrot.lane.b32.xlu0 %v1486, 64
        %v1512 = vpop.permute.xlu0 %1511
        %1513 = vrot.lane.b32.xlu0 %v1487, 64
        %v1514 = vpop.permute.xlu0 %1513
        %1515 = vrot.lane.b32.xlu0 %v1488, 64
        %v1516 = vpop.permute.xlu0 %1515
        %1517 = vrot.lane.b32.xlu0 %v1489, 64
        %v1518 = vpop.permute.xlu0 %1517
        %1519 = vrot.lane.b32.xlu0 %v1490, 64
        %v1520 = vpop.permute.xlu0 %1519
        %1521 = vrot.lane.b32.xlu0 %v1491, 64
        %v1522 = vpop.permute.xlu0 %1521
        %1523 = vrot.lane.b32.xlu0 %v1492, 64
        %v1524 = vpop.permute.xlu0 %1523
        %v1533 = vmul.f32 %v1470, %v1510
        %v1534 = vmul.f32 %v1472, %v1512
        %v1535 = vmul.f32 %v1474, %v1514
        %v1536 = vmul.f32 %v1476, %v1516
        %v1537 = vmul.f32 %v1478, %v1518
        %v1538 = vmul.f32 %v1480, %v1520
        %v1539 = vmul.f32 %v1482, %v1522
        %v1540 = vmul.f32 %v1484, %v1524
        %1549 = vrot.lane.b32.xlu0 %v1533, 32
        %v1550 = vpop.permute.xlu0 %1549
        %1551 = vrot.lane.b32.xlu0 %v1534, 32
        %v1552 = vpop.permute.xlu0 %1551
        %1553 = vrot.lane.b32.xlu0 %v1535, 32
        %v1554 = vpop.permute.xlu0 %1553
        %1555 = vrot.lane.b32.xlu0 %v1536, 32
        %v1556 = vpop.permute.xlu0 %1555
        %1557 = vrot.lane.b32.xlu0 %v1537, 32
        %v1558 = vpop.permute.xlu0 %1557
        %1559 = vrot.lane.b32.xlu0 %v1538, 32
        %v1560 = vpop.permute.xlu0 %1559
        %1561 = vrot.lane.b32.xlu0 %v1539, 32
        %v1562 = vpop.permute.xlu0 %1561
        %1563 = vrot.lane.b32.xlu0 %v1540, 32
        %v1564 = vpop.permute.xlu0 %1563
        %v1573 = vadd.f32 %v1493, %v1550
        %v1574 = vadd.f32 %v1494, %v1552
        %v1575 = vadd.f32 %v1495, %v1554
        %v1576 = vadd.f32 %v1496, %v1556
        %v1577 = vadd.f32 %v1497, %v1558
        %v1578 = vadd.f32 %v1498, %v1560
        %v1579 = vadd.f32 %v1499, %v1562
        %v1580 = vadd.f32 %v1500, %v1564
        %v1581 = vtanh.pop %v1573
        %v1582 = vtanh.pop %v1574
        %v1583 = vtanh.pop %v1575
        %v1584 = vtanh.pop %v1576
        %v1585 = vtanh.pop %v1577
        %v1586 = vtanh.pop %v1578
        %v1587 = vtanh.pop %v1579
        %v1588 = vtanh.pop %v1580
        %1597 = vrot.lane.b32.xlu0 %v1581, 64
        %v1598 = vpop.permute.xlu0 %1597
        %1599 = vrot.lane.b32.xlu0 %v1582, 64
        %v1600 = vpop.permute.xlu0 %1599
        %1601 = vrot.lane.b32.xlu0 %v1583, 64
        %v1602 = vpop.permute.xlu0 %1601
        %1603 = vrot.lane.b32.xlu0 %v1584, 64
        %v1604 = vpop.permute.xlu0 %1603
        %1605 = vrot.lane.b32.xlu0 %v1585, 64
        %v1606 = vpop.permute.xlu0 %1605
        %1607 = vrot.lane.b32.xlu0 %v1586, 64
        %v1608 = vpop.permute.xlu0 %1607
        %1609 = vrot.lane.b32.xlu0 %v1587, 64
        %v1610 = vpop.permute.xlu0 %1609
        %1611 = vrot.lane.b32.xlu0 %v1588, 64
        %v1612 = vpop.permute.xlu0 %1611
        %v1621 = vmul.f32 %v1470, %v1598
        %v1622 = vmul.f32 %v1472, %v1600
        %v1623 = vmul.f32 %v1474, %v1602
        %v1624 = vmul.f32 %v1476, %v1604
        %v1625 = vmul.f32 %v1478, %v1606
        %v1626 = vmul.f32 %v1480, %v1608
        %v1627 = vmul.f32 %v1482, %v1610
        %v1628 = vmul.f32 %v1484, %v1612
        %s1629 = scalar_lea.vmem [#allocation4], 64
        %v1630 = vld [vmem:[%s1629] sm:$0xff]
        %v1631 = vld [vmem:[%s1629 + $0x8] sm:$0xff]
        %v1632 = vld [vmem:[%s1629 + $0x10] sm:$0xff]
        %v1633 = vld [vmem:[%s1629 + $0x18] sm:$0xff]
        %v1642 = vrot.slane %v1622, 7
        %v1643 = vsel %vm798, %v1642, %v1621
        %v1644 = vrot.slane %v1623, 6
        %v1645 = vsel %vm801, %v1644, %v1643
        %v1646 = vrot.slane %v1624, 5
        %v1647 = vsel %vm804, %v1646, %v1645
        %v1648 = vrot.slane %v1625, 4
        %v1649 = vsel %vm807, %v1648, %v1647
        %v1650 = vrot.slane %v1626, 3
        %v1651 = vsel %vm810, %v1650, %v1649
        %v1652 = vrot.slane %v1627, 2
        %v1653 = vsel %vm813, %v1652, %v1651
        %v1654 = vrot.slane %v1628, 1
        %v1655 = vsel %vm816, %v1654, %v1653
        %1656 = vrot.lane.b32.xlu0 %v1655, 32
        %v1657 = vpop.permute.xlu0 %1656
        %v1658 = vsel %vm399, %v1657, 0
        %1660 = vmatprep.subr.mxu0 0.0
        %1661 = vmatpush1.msra.mxu0 %v1630
        %1662 = vmatprep.subr.mxu0 0.0
        %1663 = vmatpush1.msra.mxu0 %v1631
        %1664 = vmatprep.subr.mxu0 0.0
        %1665 = vmatpush1.msra.mxu0 %v1632
        %1666 = vmatprep.subr.mxu0 0.0
        %1667 = vmatpush1.msra.mxu0 %v1633
        %1668 = vmatprep.subr.mxu0 0.0
        %1669 = vmatpush1.msra.mxu0 0.0
        %1670 = vmatprep.subr.mxu0 0.0
        %1671 = vmatpush1.msra.mxu0 0.0
        %1672 = vmatprep.subr.mxu0 0.0
        %1673 = vmatpush1.msra.mxu0 0.0
        %1674 = vmatprep.subr.mxu0 0.0
        %1675 = vmatpush1.msra.mxu0 0.0
        %1676 = vmatprep.subr.mxu0 0.0
        %1677 = vmatpush1.msra.mxu0 0.0
        %1678 = vmatprep.subr.mxu0 0.0
        %1679 = vmatpush1.msra.mxu0 0.0
        %1680 = vmatprep.subr.mxu0 0.0
        %1681 = vmatpush1.msra.mxu0 0.0
        %1682 = vmatprep.subr.mxu0 0.0
        %1683 = vmatpush1.msra.mxu0 0.0
        %1684 = vmatprep.subr.mxu0 0.0
        %1685 = vmatpush1.msra.mxu0 0.0
        %1686 = vmatprep.subr.mxu0 0.0
        %1687 = vmatpush1.msra.mxu0 0.0
        %1688 = vmatprep.subr.mxu0 0.0
        %1689 = vmatpush1.msra.mxu0 0.0
        %1690 = vmatprep.subr.mxu0 0.0
        %1691 = vmatpush1.msra.mxu0 0.0
        %1692 = vmatprep.subr.mxu0 0.0
        %1693 = vmatpush1.msra.mxu0 0.0
        %1694 = vmatprep.subr.mxu0 0.0
        %1695 = vmatpush1.msra.mxu0 0.0
        %1696 = vmatprep.subr.mxu0 0.0
        %1697 = vmatpush1.msra.mxu0 0.0
        %1698 = vmatprep.subr.mxu0 0.0
        %1699 = vmatpush1.msra.mxu0 0.0
        %1700 = vmatprep.subr.mxu0 0.0
        %1701 = vmatpush1.msra.mxu0 0.0
        %1702 = vmatprep.subr.mxu0 0.0
        %1703 = vmatpush1.msra.mxu0 0.0
        %1704 = vmatprep.subr.mxu0 0.0
        %1705 = vmatpush1.msra.mxu0 0.0
        %1706 = vmatprep.subr.mxu0 0.0
        %1707 = vmatpush1.msra.mxu0 0.0
        %1708 = vmatprep.subr.mxu0 0.0
        %1709 = vmatpush1.msra.mxu0 0.0
        %1710 = vmatprep.subr.mxu0 0.0
        %1711 = vmatpush1.msra.mxu0 0.0
        %1712 = vmatprep.subr.mxu0 0.0
        %1713 = vmatpush1.msra.mxu0 0.0
        %1714 = vmatprep.subr.mxu0 0.0
        %1715 = vmatpush1.msra.mxu0 0.0
        %1716 = vmatprep.subr.mxu0 0.0
        %1717 = vmatpush1.msra.mxu0 0.0
        %1718 = vmatprep.subr.mxu0 0.0
        %1719 = vmatpush1.msra.mxu0 0.0
        %1720 = vmatprep.subr.mxu0 0.0
        %1721 = vmatpush1.msra.mxu0 0.0
        %1722 = vmatprep.subr.mxu0 0.0
        %1723 = vmatpush1.msra.mxu0 0.0
        %1724 = vmatprep.mubr.f32.mxu0 0.0
        %1725 = vmatmul.mubr.f32.gmra.mrb[0].mxu0 %v1658
        %v1726 = vpop.f32.mrb[0].mxu0
        %v1727 = vadd.f32 0.0, %v1726
        %v1728 = vpop.f32.mrb[0].mxu0
        %1729 = vdwg.mxu0
        %v1730 = vadd.f32 %v1276, %v1727
        %v1731 = vld [vmem:[%s297 + $0x3] sm:$0x1]
        %v1732 = vld [vmem:[%s297 + $0xb] sm:$0x1]
        %v1733 = vld [vmem:[%s297 + $0x13] sm:$0x1]
        %v1734 = vld [vmem:[%s297 + $0x1b] sm:$0x1]
        %v1735 = vld [vmem:[%s297 + $0x23] sm:$0x1]
        %v1736 = vld [vmem:[%s297 + $0x2b] sm:$0x1]
        %v1737 = vld [vmem:[%s297 + $0x33] sm:$0x1]
        %v1738 = vld [vmem:[%s297 + $0x3b] sm:$0x1]
        %1740 = vset.pattern.permute.xlu0 0
        %1741 = vperm.xlu0 %1740, %v1731
        %v1742 = vpop.permute.xlu0 %1741
        %1745 = vset.pattern.permute.xlu0 0
        %1746 = vperm.xlu0 %1745, %v1732
        %v1747 = vpop.permute.xlu0 %1746
        %1750 = vset.pattern.permute.xlu0 0
        %1751 = vperm.xlu0 %1750, %v1733
        %v1752 = vpop.permute.xlu0 %1751
        %1755 = vset.pattern.permute.xlu0 0
        %1756 = vperm.xlu0 %1755, %v1734
        %v1757 = vpop.permute.xlu0 %1756
        %1760 = vset.pattern.permute.xlu0 0
        %1761 = vperm.xlu0 %1760, %v1735
        %v1762 = vpop.permute.xlu0 %1761
        %1765 = vset.pattern.permute.xlu0 0
        %1766 = vperm.xlu0 %1765, %v1736
        %v1767 = vpop.permute.xlu0 %1766
        %1770 = vset.pattern.permute.xlu0 0
        %1771 = vperm.xlu0 %1770, %v1737
        %v1772 = vpop.permute.xlu0 %1771
        %1775 = vset.pattern.permute.xlu0 0
        %1776 = vperm.xlu0 %1775, %v1738
        %v1777 = vpop.permute.xlu0 %1776
        %v1779 = vmul.f32 %v1742, %v370
        %v1780 = vmul.f32 %v1747, %v370
        %v1781 = vmul.f32 %v1752, %v370
        %v1782 = vmul.f32 %v1757, %v370
        %v1783 = vmul.f32 %v1762, %v370
        %v1784 = vmul.f32 %v1767, %v370
        %v1785 = vmul.f32 %v1772, %v370
        %v1786 = vmul.f32 %v1777, %v370
        %v1787 = vadd.f32 %v1779, %v385
        %v1788 = vadd.f32 %v1780, %v385
        %v1789 = vadd.f32 %v1781, %v385
        %v1790 = vadd.f32 %v1782, %v385
        %v1791 = vadd.f32 %v1783, %v385
        %v1792 = vadd.f32 %v1784, %v385
        %v1793 = vadd.f32 %v1785, %v385
        %v1794 = vadd.f32 %v1786, %v385
        %1795 = vmatprep.subr.mxu0 0.0
        %1796 = vmatpush1.msra.mxu0 %v395
        %1797 = vmatprep.subr.mxu0 0.0
        %1798 = vmatpush1.msra.mxu0 %v396
        %1799 = vmatprep.subr.mxu0 0.0
        %1800 = vmatpush1.msra.mxu0 %v397
        %1801 = vmatprep.subr.mxu0 0.0
        %1802 = vmatpush1.msra.mxu0 %v398
        %1803 = vmatprep.subr.mxu0 0.0
        %1804 = vmatpush1.msra.mxu0 0.0
        %1805 = vmatprep.subr.mxu0 0.0
        %1806 = vmatpush1.msra.mxu0 0.0
        %1807 = vmatprep.subr.mxu0 0.0
        %1808 = vmatpush1.msra.mxu0 0.0
        %1809 = vmatprep.subr.mxu0 0.0
        %1810 = vmatpush1.msra.mxu0 0.0
        %1811 = vmatprep.subr.mxu0 0.0
        %1812 = vmatpush1.msra.mxu0 0.0
        %1813 = vmatprep.subr.mxu0 0.0
        %1814 = vmatpush1.msra.mxu0 0.0
        %1815 = vmatprep.subr.mxu0 0.0
        %1816 = vmatpush1.msra.mxu0 0.0
        %1817 = vmatprep.subr.mxu0 0.0
        %1818 = vmatpush1.msra.mxu0 0.0
        %1819 = vmatprep.subr.mxu0 0.0
        %1820 = vmatpush1.msra.mxu0 0.0
        %1821 = vmatprep.subr.mxu0 0.0
        %1822 = vmatpush1.msra.mxu0 0.0
        %1823 = vmatprep.subr.mxu0 0.0
        %1824 = vmatpush1.msra.mxu0 0.0
        %1825 = vmatprep.subr.mxu0 0.0
        %1826 = vmatpush1.msra.mxu0 0.0
        %1827 = vmatprep.subr.mxu0 0.0
        %1828 = vmatpush1.msra.mxu0 0.0
        %1829 = vmatprep.subr.mxu0 0.0
        %1830 = vmatpush1.msra.mxu0 0.0
        %1831 = vmatprep.subr.mxu0 0.0
        %1832 = vmatpush1.msra.mxu0 0.0
        %1833 = vmatprep.subr.mxu0 0.0
        %1834 = vmatpush1.msra.mxu0 0.0
        %1835 = vmatprep.subr.mxu0 0.0
        %1836 = vmatpush1.msra.mxu0 0.0
        %1837 = vmatprep.subr.mxu0 0.0
        %1838 = vmatpush1.msra.mxu0 0.0
        %1839 = vmatprep.subr.mxu0 0.0
        %1840 = vmatpush1.msra.mxu0 0.0
        %1841 = vmatprep.subr.mxu0 0.0
        %1842 = vmatpush1.msra.mxu0 0.0
        %1843 = vmatprep.subr.mxu0 0.0
        %1844 = vmatpush1.msra.mxu0 0.0
        %1845 = vmatprep.subr.mxu0 0.0
        %1846 = vmatpush1.msra.mxu0 0.0
        %1847 = vmatprep.subr.mxu0 0.0
        %1848 = vmatpush1.msra.mxu0 0.0
        %1849 = vmatprep.subr.mxu0 0.0
        %1850 = vmatpush1.msra.mxu0 0.0
        %1851 = vmatprep.subr.mxu0 0.0
        %1852 = vmatpush1.msra.mxu0 0.0
        %1853 = vmatprep.subr.mxu0 0.0
        %1854 = vmatpush1.msra.mxu0 0.0
        %1855 = vmatprep.subr.mxu0 0.0
        %1856 = vmatpush1.msra.mxu0 0.0
        %1857 = vmatprep.subr.mxu0 0.0
        %1858 = vmatpush1.msra.mxu0 0.0
        %1859 = vmatprep.mubr.f32.mxu0 0.0
        %1860 = vmatmul.mubr.f32.gmra.mrb[0].mxu0 %v1658
        %v1861 = vpop.f32.mrb[0].mxu0
        %v1862 = vadd.f32 0.0, %v1861
        %v1863 = vpop.f32.mrb[0].mxu0
        %1864 = vdwg.mxu0
        %v1866 = vrot.slane %v1862, 1
        %v1867 = vrot.slane %v1862, 2
        %v1868 = vrot.slane %v1862, 3
        %v1869 = vrot.slane %v1862, 4
        %v1870 = vrot.slane %v1862, 5
        %v1871 = vrot.slane %v1862, 6
        %v1872 = vrot.slane %v1862, 7
        %v1881 = vadd.f32 %v1787, %v1862
        %v1882 = vadd.f32 %v1788, %v1866
        %v1883 = vadd.f32 %v1789, %v1867
        %v1884 = vadd.f32 %v1790, %v1868
        %v1885 = vadd.f32 %v1791, %v1869
        %v1886 = vadd.f32 %v1792, %v1870
        %v1887 = vadd.f32 %v1793, %v1871
        %v1888 = vadd.f32 %v1794, %v1872
        %v1889 = vxor.u32 %v1881, 2147483648
        %v1890 = vxor.u32 %v1882, 2147483648
        %v1891 = vxor.u32 %v1883, 2147483648
        %v1892 = vxor.u32 %v1884, 2147483648
        %v1893 = vxor.u32 %v1885, 2147483648
        %v1894 = vxor.u32 %v1886, 2147483648
        %v1895 = vxor.u32 %v1887, 2147483648
        %v1896 = vxor.u32 %v1888, 2147483648
        %v1897 = vmul.f32 %v1889, 1.442695
        %v1898 = vpow.pop %v1897
        %v1899 = vmul.f32 %v1890, 1.442695
        %v1900 = vpow.pop %v1899
        %v1901 = vmul.f32 %v1891, 1.442695
        %v1902 = vpow.pop %v1901
        %v1903 = vmul.f32 %v1892, 1.442695
        %v1904 = vpow.pop %v1903
        %v1905 = vmul.f32 %v1893, 1.442695
        %v1906 = vpow.pop %v1905
        %v1907 = vmul.f32 %v1894, 1.442695
        %v1908 = vpow.pop %v1907
        %v1909 = vmul.f32 %v1895, 1.442695
        %v1910 = vpow.pop %v1909
        %v1911 = vmul.f32 %v1896, 1.442695
        %v1912 = vpow.pop %v1911
        %v1913 = vadd.f32 %v1898, 1.0
        %v1914 = vadd.f32 %v1900, 1.0
        %v1915 = vadd.f32 %v1902, 1.0
        %v1916 = vadd.f32 %v1904, 1.0
        %v1917 = vadd.f32 %v1906, 1.0
        %v1918 = vadd.f32 %v1908, 1.0
        %v1919 = vadd.f32 %v1910, 1.0
        %v1920 = vadd.f32 %v1912, 1.0
        %v1921 = vrcp.pop %v1913
        %v1922 = vmul.f32 1.0, %v1921
        %v1923 = vrcp.pop %v1914
        %v1924 = vmul.f32 1.0, %v1923
        %v1925 = vrcp.pop %v1915
        %v1926 = vmul.f32 1.0, %v1925
        %v1927 = vrcp.pop %v1916
        %v1928 = vmul.f32 1.0, %v1927
        %v1929 = vrcp.pop %v1917
        %v1930 = vmul.f32 1.0, %v1929
        %v1931 = vrcp.pop %v1918
        %v1932 = vmul.f32 1.0, %v1931
        %v1933 = vrcp.pop %v1919
        %v1934 = vmul.f32 1.0, %v1933
        %v1935 = vrcp.pop %v1920
        %v1936 = vmul.f32 1.0, %v1935
        %v1937 = vtanh.pop %v1881
        %v1938 = vtanh.pop %v1882
        %v1939 = vtanh.pop %v1883
        %v1940 = vtanh.pop %v1884
        %v1941 = vtanh.pop %v1885
        %v1942 = vtanh.pop %v1886
        %v1943 = vtanh.pop %v1887
        %v1944 = vtanh.pop %v1888
        %v1945 = vmul.f32 %v1922, %v1573
        %v1946 = vmul.f32 %v1924, %v1574
        %v1947 = vmul.f32 %v1926, %v1575
        %v1948 = vmul.f32 %v1928, %v1576
        %v1949 = vmul.f32 %v1930, %v1577
        %v1950 = vmul.f32 %v1932, %v1578
        %v1951 = vmul.f32 %v1934, %v1579
        %v1952 = vmul.f32 %v1936, %v1580
        %1961 = vrot.lane.b32.xlu0 %v1937, 64
        %v1962 = vpop.permute.xlu0 %1961
        %1963 = vrot.lane.b32.xlu0 %v1938, 64
        %v1964 = vpop.permute.xlu0 %1963
        %1965 = vrot.lane.b32.xlu0 %v1939, 64
        %v1966 = vpop.permute.xlu0 %1965
        %1967 = vrot.lane.b32.xlu0 %v1940, 64
        %v1968 = vpop.permute.xlu0 %1967
        %1969 = vrot.lane.b32.xlu0 %v1941, 64
        %v1970 = vpop.permute.xlu0 %1969
        %1971 = vrot.lane.b32.xlu0 %v1942, 64
        %v1972 = vpop.permute.xlu0 %1971
        %1973 = vrot.lane.b32.xlu0 %v1943, 64
        %v1974 = vpop.permute.xlu0 %1973
        %1975 = vrot.lane.b32.xlu0 %v1944, 64
        %v1976 = vpop.permute.xlu0 %1975
        %v1985 = vmul.f32 %v1922, %v1962
        %v1986 = vmul.f32 %v1924, %v1964
        %v1987 = vmul.f32 %v1926, %v1966
        %v1988 = vmul.f32 %v1928, %v1968
        %v1989 = vmul.f32 %v1930, %v1970
        %v1990 = vmul.f32 %v1932, %v1972
        %v1991 = vmul.f32 %v1934, %v1974
        %v1992 = vmul.f32 %v1936, %v1976
        %2001 = vrot.lane.b32.xlu0 %v1985, 32
        %v2002 = vpop.permute.xlu0 %2001
        %2003 = vrot.lane.b32.xlu0 %v1986, 32
        %v2004 = vpop.permute.xlu0 %2003
        %2005 = vrot.lane.b32.xlu0 %v1987, 32
        %v2006 = vpop.permute.xlu0 %2005
        %2007 = vrot.lane.b32.xlu0 %v1988, 32
        %v2008 = vpop.permute.xlu0 %2007
        %2009 = vrot.lane.b32.xlu0 %v1989, 32
        %v2010 = vpop.permute.xlu0 %2009
        %2011 = vrot.lane.b32.xlu0 %v1990, 32
        %v2012 = vpop.permute.xlu0 %2011
        %2013 = vrot.lane.b32.xlu0 %v1991, 32
        %v2014 = vpop.permute.xlu0 %2013
        %2015 = vrot.lane.b32.xlu0 %v1992, 32
        %v2016 = vpop.permute.xlu0 %2015
        %v2025 = vadd.f32 %v1945, %v2002
        %v2026 = vadd.f32 %v1946, %v2004
        %v2027 = vadd.f32 %v1947, %v2006
        %v2028 = vadd.f32 %v1948, %v2008
        %v2029 = vadd.f32 %v1949, %v2010
        %v2030 = vadd.f32 %v1950, %v2012
        %v2031 = vadd.f32 %v1951, %v2014
        %v2032 = vadd.f32 %v1952, %v2016
        %v2033 = vtanh.pop %v2025
        %v2034 = vtanh.pop %v2026
        %v2035 = vtanh.pop %v2027
        %v2036 = vtanh.pop %v2028
        %v2037 = vtanh.pop %v2029
        %v2038 = vtanh.pop %v2030
        %v2039 = vtanh.pop %v2031
        %v2040 = vtanh.pop %v2032
        %2049 = vrot.lane.b32.xlu0 %v2033, 64
        %v2050 = vpop.permute.xlu0 %2049
        %2051 = vrot.lane.b32.xlu0 %v2034, 64
        %v2052 = vpop.permute.xlu0 %2051
        %2053 = vrot.lane.b32.xlu0 %v2035, 64
        %v2054 = vpop.permute.xlu0 %2053
        %2055 = vrot.lane.b32.xlu0 %v2036, 64
        %v2056 = vpop.permute.xlu0 %2055
        %2057 = vrot.lane.b32.xlu0 %v2037, 64
        %v2058 = vpop.permute.xlu0 %2057
        %2059 = vrot.lane.b32.xlu0 %v2038, 64
        %v2060 = vpop.permute.xlu0 %2059
        %2061 = vrot.lane.b32.xlu0 %v2039, 64
        %v2062 = vpop.permute.xlu0 %2061
        %2063 = vrot.lane.b32.xlu0 %v2040, 64
        %v2064 = vpop.permute.xlu0 %2063
        %v2073 = vmul.f32 %v1922, %v2050
        %v2074 = vmul.f32 %v1924, %v2052
        %v2075 = vmul.f32 %v1926, %v2054
        %v2076 = vmul.f32 %v1928, %v2056
        %v2077 = vmul.f32 %v1930, %v2058
        %v2078 = vmul.f32 %v1932, %v2060
        %v2079 = vmul.f32 %v1934, %v2062
        %v2080 = vmul.f32 %v1936, %v2064
        %s2081 = scalar_lea.vmem [#allocation4], 96
        %v2082 = vld [vmem:[%s2081] sm:$0xff]
        %v2083 = vld [vmem:[%s2081 + $0x8] sm:$0xff]
        %v2084 = vld [vmem:[%s2081 + $0x10] sm:$0xff]
        %v2085 = vld [vmem:[%s2081 + $0x18] sm:$0xff]
        %v2094 = vrot.slane %v2074, 7
        %v2095 = vsel %vm798, %v2094, %v2073
        %v2096 = vrot.slane %v2075, 6
        %v2097 = vsel %vm801, %v2096, %v2095
        %v2098 = vrot.slane %v2076, 5
        %v2099 = vsel %vm804, %v2098, %v2097
        %v2100 = vrot.slane %v2077, 4
        %v2101 = vsel %vm807, %v2100, %v2099
        %v2102 = vrot.slane %v2078, 3
        %v2103 = vsel %vm810, %v2102, %v2101
        %v2104 = vrot.slane %v2079, 2
        %v2105 = vsel %vm813, %v2104, %v2103
        %v2106 = vrot.slane %v2080, 1
        %v2107 = vsel %vm816, %v2106, %v2105
        %2108 = vrot.lane.b32.xlu0 %v2107, 32
        %v2109 = vpop.permute.xlu0 %2108
        %v2110 = vsel %vm399, %v2109, 0
        %2112 = vmatprep.subr.mxu0 0.0
        %2113 = vmatpush1.msra.mxu0 %v2082
        %2114 = vmatprep.subr.mxu0 0.0
        %2115 = vmatpush1.msra.mxu0 %v2083
        %2116 = vmatprep.subr.mxu0 0.0
        %2117 = vmatpush1.msra.mxu0 %v2084
        %2118 = vmatprep.subr.mxu0 0.0
        %2119 = vmatpush1.msra.mxu0 %v2085
        %2120 = vmatprep.subr.mxu0 0.0
        %2121 = vmatpush1.msra.mxu0 0.0
        %2122 = vmatprep.subr.mxu0 0.0
        %2123 = vmatpush1.msra.mxu0 0.0
        %2124 = vmatprep.subr.mxu0 0.0
        %2125 = vmatpush1.msra.mxu0 0.0
        %2126 = vmatprep.subr.mxu0 0.0
        %2127 = vmatpush1.msra.mxu0 0.0
        %2128 = vmatprep.subr.mxu0 0.0
        %2129 = vmatpush1.msra.mxu0 0.0
        %2130 = vmatprep.subr.mxu0 0.0
        %2131 = vmatpush1.msra.mxu0 0.0
        %2132 = vmatprep.subr.mxu0 0.0
        %2133 = vmatpush1.msra.mxu0 0.0
        %2134 = vmatprep.subr.mxu0 0.0
        %2135 = vmatpush1.msra.mxu0 0.0
        %2136 = vmatprep.subr.mxu0 0.0
        %2137 = vmatpush1.msra.mxu0 0.0
        %2138 = vmatprep.subr.mxu0 0.0
        %2139 = vmatpush1.msra.mxu0 0.0
        %2140 = vmatprep.subr.mxu0 0.0
        %2141 = vmatpush1.msra.mxu0 0.0
        %2142 = vmatprep.subr.mxu0 0.0
        %2143 = vmatpush1.msra.mxu0 0.0
        %2144 = vmatprep.subr.mxu0 0.0
        %2145 = vmatpush1.msra.mxu0 0.0
        %2146 = vmatprep.subr.mxu0 0.0
        %2147 = vmatpush1.msra.mxu0 0.0
        %2148 = vmatprep.subr.mxu0 0.0
        %2149 = vmatpush1.msra.mxu0 0.0
        %2150 = vmatprep.subr.mxu0 0.0
        %2151 = vmatpush1.msra.mxu0 0.0
        %2152 = vmatprep.subr.mxu0 0.0
        %2153 = vmatpush1.msra.mxu0 0.0
        %2154 = vmatprep.subr.mxu0 0.0
        %2155 = vmatpush1.msra.mxu0 0.0
        %2156 = vmatprep.subr.mxu0 0.0
        %2157 = vmatpush1.msra.mxu0 0.0
        %2158 = vmatprep.subr.mxu0 0.0
        %2159 = vmatpush1.msra.mxu0 0.0
        %2160 = vmatprep.subr.mxu0 0.0
        %2161 = vmatpush1.msra.mxu0 0.0
        %2162 = vmatprep.subr.mxu0 0.0
        %2163 = vmatpush1.msra.mxu0 0.0
        %2164 = vmatprep.subr.mxu0 0.0
        %2165 = vmatpush1.msra.mxu0 0.0
        %2166 = vmatprep.subr.mxu0 0.0
        %2167 = vmatpush1.msra.mxu0 0.0
        %2168 = vmatprep.subr.mxu0 0.0
        %2169 = vmatpush1.msra.mxu0 0.0
        %2170 = vmatprep.subr.mxu0 0.0
        %2171 = vmatpush1.msra.mxu0 0.0
        %2172 = vmatprep.subr.mxu0 0.0
        %2173 = vmatpush1.msra.mxu0 0.0
        %2174 = vmatprep.subr.mxu0 0.0
        %2175 = vmatpush1.msra.mxu0 0.0
        %2176 = vmatprep.mubr.f32.mxu0 0.0
        %2177 = vmatmul.mubr.f32.gmra.mrb[0].mxu0 %v2110
        %v2178 = vpop.f32.mrb[0].mxu0
        %v2179 = vadd.f32 0.0, %v2178
        %v2180 = vpop.f32.mrb[0].mxu0
        %2181 = vdwg.mxu0
        %v2182 = vadd.f32 %v1730, %v2179
        %v2183 = vld [vmem:[%s297 + $0x4] sm:$0x1]
        %v2184 = vld [vmem:[%s297 + $0xc] sm:$0x1]
        %v2185 = vld [vmem:[%s297 + $0x14] sm:$0x1]
        %v2186 = vld [vmem:[%s297 + $0x1c] sm:$0x1]
        %v2187 = vld [vmem:[%s297 + $0x24] sm:$0x1]
        %v2188 = vld [vmem:[%s297 + $0x2c] sm:$0x1]
        %v2189 = vld [vmem:[%s297 + $0x34] sm:$0x1]
        %v2190 = vld [vmem:[%s297 + $0x3c] sm:$0x1]
        %2192 = vset.pattern.permute.xlu0 0
        %2193 = vperm.xlu0 %2192, %v2183
        %v2194 = vpop.permute.xlu0 %2193
        %2197 = vset.pattern.permute.xlu0 0
        %2198 = vperm.xlu0 %2197, %v2184
        %v2199 = vpop.permute.xlu0 %2198
        %2202 = vset.pattern.permute.xlu0 0
        %2203 = vperm.xlu0 %2202, %v2185
        %v2204 = vpop.permute.xlu0 %2203
        %2207 = vset.pattern.permute.xlu0 0
        %2208 = vperm.xlu0 %2207, %v2186
        %v2209 = vpop.permute.xlu0 %2208
        %2212 = vset.pattern.permute.xlu0 0
        %2213 = vperm.xlu0 %2212, %v2187
        %v2214 = vpop.permute.xlu0 %2213
        %2217 = vset.pattern.permute.xlu0 0
        %2218 = vperm.xlu0 %2217, %v2188
        %v2219 = vpop.permute.xlu0 %2218
        %2222 = vset.pattern.permute.xlu0 0
        %2223 = vperm.xlu0 %2222, %v2189
        %v2224 = vpop.permute.xlu0 %2223
        %2227 = vset.pattern.permute.xlu0 0
        %2228 = vperm.xlu0 %2227, %v2190
        %v2229 = vpop.permute.xlu0 %2228
        %v2231 = vmul.f32 %v2194, %v370
        %v2232 = vmul.f32 %v2199, %v370
        %v2233 = vmul.f32 %v2204, %v370
        %v2234 = vmul.f32 %v2209, %v370
        %v2235 = vmul.f32 %v2214, %v370
        %v2236 = vmul.f32 %v2219, %v370
        %v2237 = vmul.f32 %v2224, %v370
        %v2238 = vmul.f32 %v2229, %v370
        %v2239 = vadd.f32 %v2231, %v385
        %v2240 = vadd.f32 %v2232, %v385
        %v2241 = vadd.f32 %v2233, %v385
        %v2242 = vadd.f32 %v2234, %v385
        %v2243 = vadd.f32 %v2235, %v385
        %v2244 = vadd.f32 %v2236, %v385
        %v2245 = vadd.f32 %v2237, %v385
        %v2246 = vadd.f32 %v2238, %v385
        %2247 = vmatprep.subr.mxu0 0.0
        %2248 = vmatpush1.msra.mxu0 %v395
        %2249 = vmatprep.subr.mxu0 0.0
        %2250 = vmatpush1.msra.mxu0 %v396
        %2251 = vmatprep.subr.mxu0 0.0
        %2252 = vmatpush1.msra.mxu0 %v397
        %2253 = vmatprep.subr.mxu0 0.0
        %2254 = vmatpush1.msra.mxu0 %v398
        %2255 = vmatprep.subr.mxu0 0.0
        %2256 = vmatpush1.msra.mxu0 0.0
        %2257 = vmatprep.subr.mxu0 0.0
        %2258 = vmatpush1.msra.mxu0 0.0
        %2259 = vmatprep.subr.mxu0 0.0
        %2260 = vmatpush1.msra.mxu0 0.0
        %2261 = vmatprep.subr.mxu0 0.0
        %2262 = vmatpush1.msra.mxu0 0.0
        %2263 = vmatprep.subr.mxu0 0.0
        %2264 = vmatpush1.msra.mxu0 0.0
        %2265 = vmatprep.subr.mxu0 0.0
        %2266 = vmatpush1.msra.mxu0 0.0
        %2267 = vmatprep.subr.mxu0 0.0
        %2268 = vmatpush1.msra.mxu0 0.0
        %2269 = vmatprep.subr.mxu0 0.0
        %2270 = vmatpush1.msra.mxu0 0.0
        %2271 = vmatprep.subr.mxu0 0.0
        %2272 = vmatpush1.msra.mxu0 0.0
        %2273 = vmatprep.subr.mxu0 0.0
        %2274 = vmatpush1.msra.mxu0 0.0
        %2275 = vmatprep.subr.mxu0 0.0
        %2276 = vmatpush1.msra.mxu0 0.0
        %2277 = vmatprep.subr.mxu0 0.0
        %2278 = vmatpush1.msra.mxu0 0.0
        %2279 = vmatprep.subr.mxu0 0.0
        %2280 = vmatpush1.msra.mxu0 0.0
        %2281 = vmatprep.subr.mxu0 0.0
        %2282 = vmatpush1.msra.mxu0 0.0
        %2283 = vmatprep.subr.mxu0 0.0
        %2284 = vmatpush1.msra.mxu0 0.0
        %2285 = vmatprep.subr.mxu0 0.0
        %2286 = vmatpush1.msra.mxu0 0.0
        %2287 = vmatprep.subr.mxu0 0.0
        %2288 = vmatpush1.msra.mxu0 0.0
        %2289 = vmatprep.subr.mxu0 0.0
        %2290 = vmatpush1.msra.mxu0 0.0
        %2291 = vmatprep.subr.mxu0 0.0
        %2292 = vmatpush1.msra.mxu0 0.0
        %2293 = vmatprep.subr.mxu0 0.0
        %2294 = vmatpush1.msra.mxu0 0.0
        %2295 = vmatprep.subr.mxu0 0.0
        %2296 = vmatpush1.msra.mxu0 0.0
        %2297 = vmatprep.subr.mxu0 0.0
        %2298 = vmatpush1.msra.mxu0 0.0
        %2299 = vmatprep.subr.mxu0 0.0
        %2300 = vmatpush1.msra.mxu0 0.0
        %2301 = vmatprep.subr.mxu0 0.0
        %2302 = vmatpush1.msra.mxu0 0.0
        %2303 = vmatprep.subr.mxu0 0.0
        %2304 = vmatpush1.msra.mxu0 0.0
        %2305 = vmatprep.subr.mxu0 0.0
        %2306 = vmatpush1.msra.mxu0 0.0
        %2307 = vmatprep.subr.mxu0 0.0
        %2308 = vmatpush1.msra.mxu0 0.0
        %2309 = vmatprep.subr.mxu0 0.0
        %2310 = vmatpush1.msra.mxu0 0.0
        %2311 = vmatprep.mubr.f32.mxu0 0.0
        %2312 = vmatmul.mubr.f32.gmra.mrb[0].mxu0 %v2110
        %v2313 = vpop.f32.mrb[0].mxu0
        %v2314 = vadd.f32 0.0, %v2313
        %v2315 = vpop.f32.mrb[0].mxu0
        %2316 = vdwg.mxu0
        %v2318 = vrot.slane %v2314, 1
        %v2319 = vrot.slane %v2314, 2
        %v2320 = vrot.slane %v2314, 3
        %v2321 = vrot.slane %v2314, 4
        %v2322 = vrot.slane %v2314, 5
        %v2323 = vrot.slane %v2314, 6
        %v2324 = vrot.slane %v2314, 7
        %v2333 = vadd.f32 %v2239, %v2314
        %v2334 = vadd.f32 %v2240, %v2318
        %v2335 = vadd.f32 %v2241, %v2319
        %v2336 = vadd.f32 %v2242, %v2320
        %v2337 = vadd.f32 %v2243, %v2321
        %v2338 = vadd.f32 %v2244, %v2322
        %v2339 = vadd.f32 %v2245, %v2323
        %v2340 = vadd.f32 %v2246, %v2324
        %v2341 = vxor.u32 %v2333, 2147483648
        %v2342 = vxor.u32 %v2334, 2147483648
        %v2343 = vxor.u32 %v2335, 2147483648
        %v2344 = vxor.u32 %v2336, 2147483648
        %v2345 = vxor.u32 %v2337, 2147483648
        %v2346 = vxor.u32 %v2338, 2147483648
        %v2347 = vxor.u32 %v2339, 2147483648
        %v2348 = vxor.u32 %v2340, 2147483648
        %v2349 = vmul.f32 %v2341, 1.442695
        %v2350 = vpow.pop %v2349
        %v2351 = vmul.f32 %v2342, 1.442695
        %v2352 = vpow.pop %v2351
        %v2353 = vmul.f32 %v2343, 1.442695
        %v2354 = vpow.pop %v2353
        %v2355 = vmul.f32 %v2344, 1.442695
        %v2356 = vpow.pop %v2355
        %v2357 = vmul.f32 %v2345, 1.442695
        %v2358 = vpow.pop %v2357
        %v2359 = vmul.f32 %v2346, 1.442695
        %v2360 = vpow.pop %v2359
        %v2361 = vmul.f32 %v2347, 1.442695
        %v2362 = vpow.pop %v2361
        %v2363 = vmul.f32 %v2348, 1.442695
        %v2364 = vpow.pop %v2363
        %v2365 = vadd.f32 %v2350, 1.0
        %v2366 = vadd.f32 %v2352, 1.0
        %v2367 = vadd.f32 %v2354, 1.0
        %v2368 = vadd.f32 %v2356, 1.0
        %v2369 = vadd.f32 %v2358, 1.0
        %v2370 = vadd.f32 %v2360, 1.0
        %v2371 = vadd.f32 %v2362, 1.0
        %v2372 = vadd.f32 %v2364, 1.0
        %v2373 = vrcp.pop %v2365
        %v2374 = vmul.f32 1.0, %v2373
        %v2375 = vrcp.pop %v2366
        %v2376 = vmul.f32 1.0, %v2375
        %v2377 = vrcp.pop %v2367
        %v2378 = vmul.f32 1.0, %v2377
        %v2379 = vrcp.pop %v2368
        %v2380 = vmul.f32 1.0, %v2379
        %v2381 = vrcp.pop %v2369
        %v2382 = vmul.f32 1.0, %v2381
        %v2383 = vrcp.pop %v2370
        %v2384 = vmul.f32 1.0, %v2383
        %v2385 = vrcp.pop %v2371
        %v2386 = vmul.f32 1.0, %v2385
        %v2387 = vrcp.pop %v2372
        %v2388 = vmul.f32 1.0, %v2387
        %v2389 = vtanh.pop %v2333
        %v2390 = vtanh.pop %v2334
        %v2391 = vtanh.pop %v2335
        %v2392 = vtanh.pop %v2336
        %v2393 = vtanh.pop %v2337
        %v2394 = vtanh.pop %v2338
        %v2395 = vtanh.pop %v2339
        %v2396 = vtanh.pop %v2340
        %v2397 = vmul.f32 %v2374, %v2025
        %v2398 = vmul.f32 %v2376, %v2026
        %v2399 = vmul.f32 %v2378, %v2027
        %v2400 = vmul.f32 %v2380, %v2028
        %v2401 = vmul.f32 %v2382, %v2029
        %v2402 = vmul.f32 %v2384, %v2030
        %v2403 = vmul.f32 %v2386, %v2031
        %v2404 = vmul.f32 %v2388, %v2032
        %2413 = vrot.lane.b32.xlu0 %v2389, 64
        %v2414 = vpop.permute.xlu0 %2413
        %2415 = vrot.lane.b32.xlu0 %v2390, 64
        %v2416 = vpop.permute.xlu0 %2415
        %2417 = vrot.lane.b32.xlu0 %v2391, 64
        %v2418 = vpop.permute.xlu0 %2417
        %2419 = vrot.lane.b32.xlu0 %v2392, 64
        %v2420 = vpop.permute.xlu0 %2419
        %2421 = vrot.lane.b32.xlu0 %v2393, 64
        %v2422 = vpop.permute.xlu0 %2421
        %2423 = vrot.lane.b32.xlu0 %v2394, 64
        %v2424 = vpop.permute.xlu0 %2423
        %2425 = vrot.lane.b32.xlu0 %v2395, 64
        %v2426 = vpop.permute.xlu0 %2425
        %2427 = vrot.lane.b32.xlu0 %v2396, 64
        %v2428 = vpop.permute.xlu0 %2427
        %v2437 = vmul.f32 %v2374, %v2414
        %v2438 = vmul.f32 %v2376, %v2416
        %v2439 = vmul.f32 %v2378, %v2418
        %v2440 = vmul.f32 %v2380, %v2420
        %v2441 = vmul.f32 %v2382, %v2422
        %v2442 = vmul.f32 %v2384, %v2424
        %v2443 = vmul.f32 %v2386, %v2426
        %v2444 = vmul.f32 %v2388, %v2428
        %2453 = vrot.lane.b32.xlu0 %v2437, 32
        %v2454 = vpop.permute.xlu0 %2453
        %2455 = vrot.lane.b32.xlu0 %v2438, 32
        %v2456 = vpop.permute.xlu0 %2455
        %2457 = vrot.lane.b32.xlu0 %v2439, 32
        %v2458 = vpop.permute.xlu0 %2457
        %2459 = vrot.lane.b32.xlu0 %v2440, 32
        %v2460 = vpop.permute.xlu0 %2459
        %2461 = vrot.lane.b32.xlu0 %v2441, 32
        %v2462 = vpop.permute.xlu0 %2461
        %2463 = vrot.lane.b32.xlu0 %v2442, 32
        %v2464 = vpop.permute.xlu0 %2463
        %2465 = vrot.lane.b32.xlu0 %v2443, 32
        %v2466 = vpop.permute.xlu0 %2465
        %2467 = vrot.lane.b32.xlu0 %v2444, 32
        %v2468 = vpop.permute.xlu0 %2467
        %v2477 = vadd.f32 %v2397, %v2454
        %v2478 = vadd.f32 %v2398, %v2456
        %v2479 = vadd.f32 %v2399, %v2458
        %v2480 = vadd.f32 %v2400, %v2460
        %v2481 = vadd.f32 %v2401, %v2462
        %v2482 = vadd.f32 %v2402, %v2464
        %v2483 = vadd.f32 %v2403, %v2466
        %v2484 = vadd.f32 %v2404, %v2468
        %v2485 = vtanh.pop %v2477
        %v2486 = vtanh.pop %v2478
        %v2487 = vtanh.pop %v2479
        %v2488 = vtanh.pop %v2480
        %v2489 = vtanh.pop %v2481
        %v2490 = vtanh.pop %v2482
        %v2491 = vtanh.pop %v2483
        %v2492 = vtanh.pop %v2484
        %2501 = vrot.lane.b32.xlu0 %v2485, 64
        %v2502 = vpop.permute.xlu0 %2501
        %2503 = vrot.lane.b32.xlu0 %v2486, 64
        %v2504 = vpop.permute.xlu0 %2503
        %2505 = vrot.lane.b32.xlu0 %v2487, 64
        %v2506 = vpop.permute.xlu0 %2505
        %2507 = vrot.lane.b32.xlu0 %v2488, 64
        %v2508 = vpop.permute.xlu0 %2507
        %2509 = vrot.lane.b32.xlu0 %v2489, 64
        %v2510 = vpop.permute.xlu0 %2509
        %2511 = vrot.lane.b32.xlu0 %v2490, 64
        %v2512 = vpop.permute.xlu0 %2511
        %2513 = vrot.lane.b32.xlu0 %v2491, 64
        %v2514 = vpop.permute.xlu0 %2513
        %2515 = vrot.lane.b32.xlu0 %v2492, 64
        %v2516 = vpop.permute.xlu0 %2515
        %v2525 = vmul.f32 %v2374, %v2502
        %v2526 = vmul.f32 %v2376, %v2504
        %v2527 = vmul.f32 %v2378, %v2506
        %v2528 = vmul.f32 %v2380, %v2508
        %v2529 = vmul.f32 %v2382, %v2510
        %v2530 = vmul.f32 %v2384, %v2512
        %v2531 = vmul.f32 %v2386, %v2514
        %v2532 = vmul.f32 %v2388, %v2516
        %s2533 = scalar_lea.vmem [#allocation4], 128
        %v2534 = vld [vmem:[%s2533] sm:$0xff]
        %v2535 = vld [vmem:[%s2533 + $0x8] sm:$0xff]
        %v2536 = vld [vmem:[%s2533 + $0x10] sm:$0xff]
        %v2537 = vld [vmem:[%s2533 + $0x18] sm:$0xff]
        %v2546 = vrot.slane %v2526, 7
        %v2547 = vsel %vm798, %v2546, %v2525
        %v2548 = vrot.slane %v2527, 6
        %v2549 = vsel %vm801, %v2548, %v2547
        %v2550 = vrot.slane %v2528, 5
        %v2551 = vsel %vm804, %v2550, %v2549
        %v2552 = vrot.slane %v2529, 4
        %v2553 = vsel %vm807, %v2552, %v2551
        %v2554 = vrot.slane %v2530, 3
        %v2555 = vsel %vm810, %v2554, %v2553
        %v2556 = vrot.slane %v2531, 2
        %v2557 = vsel %vm813, %v2556, %v2555
        %v2558 = vrot.slane %v2532, 1
        %v2559 = vsel %vm816, %v2558, %v2557
        %2560 = vrot.lane.b32.xlu0 %v2559, 32
        %v2561 = vpop.permute.xlu0 %2560
        %v2562 = vsel %vm399, %v2561, 0
        %2564 = vmatprep.subr.mxu0 0.0
        %2565 = vmatpush1.msra.mxu0 %v2534
        %2566 = vmatprep.subr.mxu0 0.0
        %2567 = vmatpush1.msra.mxu0 %v2535
        %2568 = vmatprep.subr.mxu0 0.0
        %2569 = vmatpush1.msra.mxu0 %v2536
        %2570 = vmatprep.subr.mxu0 0.0
        %2571 = vmatpush1.msra.mxu0 %v2537
        %2572 = vmatprep.subr.mxu0 0.0
        %2573 = vmatpush1.msra.mxu0 0.0
        %2574 = vmatprep.subr.mxu0 0.0
        %2575 = vmatpush1.msra.mxu0 0.0
        %2576 = vmatprep.subr.mxu0 0.0
        %2577 = vmatpush1.msra.mxu0 0.0
        %2578 = vmatprep.subr.mxu0 0.0
        %2579 = vmatpush1.msra.mxu0 0.0
        %2580 = vmatprep.subr.mxu0 0.0
        %2581 = vmatpush1.msra.mxu0 0.0
        %2582 = vmatprep.subr.mxu0 0.0
        %2583 = vmatpush1.msra.mxu0 0.0
        %2584 = vmatprep.subr.mxu0 0.0
        %2585 = vmatpush1.msra.mxu0 0.0
        %2586 = vmatprep.subr.mxu0 0.0
        %2587 = vmatpush1.msra.mxu0 0.0
        %2588 = vmatprep.subr.mxu0 0.0
        %2589 = vmatpush1.msra.mxu0 0.0
        %2590 = vmatprep.subr.mxu0 0.0
        %2591 = vmatpush1.msra.mxu0 0.0
        %2592 = vmatprep.subr.mxu0 0.0
        %2593 = vmatpush1.msra.mxu0 0.0
        %2594 = vmatprep.subr.mxu0 0.0
        %2595 = vmatpush1.msra.mxu0 0.0
        %2596 = vmatprep.subr.mxu0 0.0
        %2597 = vmatpush1.msra.mxu0 0.0
        %2598 = vmatprep.subr.mxu0 0.0
        %2599 = vmatpush1.msra.mxu0 0.0
        %2600 = vmatprep.subr.mxu0 0.0
        %2601 = vmatpush1.msra.mxu0 0.0
        %2602 = vmatprep.subr.mxu0 0.0
        %2603 = vmatpush1.msra.mxu0 0.0
        %2604 = vmatprep.subr.mxu0 0.0
        %2605 = vmatpush1.msra.mxu0 0.0
        %2606 = vmatprep.subr.mxu0 0.0
        %2607 = vmatpush1.msra.mxu0 0.0
        %2608 = vmatprep.subr.mxu0 0.0
        %2609 = vmatpush1.msra.mxu0 0.0
        %2610 = vmatprep.subr.mxu0 0.0
        %2611 = vmatpush1.msra.mxu0 0.0
        %2612 = vmatprep.subr.mxu0 0.0
        %2613 = vmatpush1.msra.mxu0 0.0
        %2614 = vmatprep.subr.mxu0 0.0
        %2615 = vmatpush1.msra.mxu0 0.0
        %2616 = vmatprep.subr.mxu0 0.0
        %2617 = vmatpush1.msra.mxu0 0.0
        %2618 = vmatprep.subr.mxu0 0.0
        %2619 = vmatpush1.msra.mxu0 0.0
        %2620 = vmatprep.subr.mxu0 0.0
        %2621 = vmatpush1.msra.mxu0 0.0
        %2622 = vmatprep.subr.mxu0 0.0
        %2623 = vmatpush1.msra.mxu0 0.0
        %2624 = vmatprep.subr.mxu0 0.0
        %2625 = vmatpush1.msra.mxu0 0.0
        %2626 = vmatprep.subr.mxu0 0.0
        %2627 = vmatpush1.msra.mxu0 0.0
        %2628 = vmatprep.mubr.f32.mxu0 0.0
        %2629 = vmatmul.mubr.f32.gmra.mrb[0].mxu0 %v2562
        %v2630 = vpop.f32.mrb[0].mxu0
        %v2631 = vadd.f32 0.0, %v2630
        %v2632 = vpop.f32.mrb[0].mxu0
        %2633 = vdwg.mxu0
        %v2634 = vadd.f32 %v2182, %v2631
        %v2635 = vld [vmem:[%s297 + $0x5] sm:$0x1]
        %v2636 = vld [vmem:[%s297 + $0xd] sm:$0x1]
        %v2637 = vld [vmem:[%s297 + $0x15] sm:$0x1]
        %v2638 = vld [vmem:[%s297 + $0x1d] sm:$0x1]
        %v2639 = vld [vmem:[%s297 + $0x25] sm:$0x1]
        %v2640 = vld [vmem:[%s297 + $0x2d] sm:$0x1]
        %v2641 = vld [vmem:[%s297 + $0x35] sm:$0x1]
        %v2642 = vld [vmem:[%s297 + $0x3d] sm:$0x1]
        %2644 = vset.pattern.permute.xlu0 0
        %2645 = vperm.xlu0 %2644, %v2635
        %v2646 = vpop.permute.xlu0 %2645
        %2649 = vset.pattern.permute.xlu0 0
        %2650 = vperm.xlu0 %2649, %v2636
        %v2651 = vpop.permute.xlu0 %2650
        %2654 = vset.pattern.permute.xlu0 0
        %2655 = vperm.xlu0 %2654, %v2637
        %v2656 = vpop.permute.xlu0 %2655
        %2659 = vset.pattern.permute.xlu0 0
        %2660 = vperm.xlu0 %2659, %v2638
        %v2661 = vpop.permute.xlu0 %2660
        %2664 = vset.pattern.permute.xlu0 0
        %2665 = vperm.xlu0 %2664, %v2639
        %v2666 = vpop.permute.xlu0 %2665
        %2669 = vset.pattern.permute.xlu0 0
        %2670 = vperm.xlu0 %2669, %v2640
        %v2671 = vpop.permute.xlu0 %2670
        %2674 = vset.pattern.permute.xlu0 0
        %2675 = vperm.xlu0 %2674, %v2641
        %v2676 = vpop.permute.xlu0 %2675
        %2679 = vset.pattern.permute.xlu0 0
        %2680 = vperm.xlu0 %2679, %v2642
        %v2681 = vpop.permute.xlu0 %2680
        %v2683 = vmul.f32 %v2646, %v370
        %v2684 = vmul.f32 %v2651, %v370
        %v2685 = vmul.f32 %v2656, %v370
        %v2686 = vmul.f32 %v2661, %v370
        %v2687 = vmul.f32 %v2666, %v370
        %v2688 = vmul.f32 %v2671, %v370
        %v2689 = vmul.f32 %v2676, %v370
        %v2690 = vmul.f32 %v2681, %v370
        %v2691 = vadd.f32 %v2683, %v385
        %v2692 = vadd.f32 %v2684, %v385
        %v2693 = vadd.f32 %v2685, %v385
        %v2694 = vadd.f32 %v2686, %v385
        %v2695 = vadd.f32 %v2687, %v385
        %v2696 = vadd.f32 %v2688, %v385
        %v2697 = vadd.f32 %v2689, %v385
        %v2698 = vadd.f32 %v2690, %v385
        %2699 = vmatprep.subr.mxu0 0.0
        %2700 = vmatpush1.msra.mxu0 %v395
        %2701 = vmatprep.subr.mxu0 0.0
        %2702 = vmatpush1.msra.mxu0 %v396
        %2703 = vmatprep.subr.mxu0 0.0
        %2704 = vmatpush1.msra.mxu0 %v397
        %2705 = vmatprep.subr.mxu0 0.0
        %2706 = vmatpush1.msra.mxu0 %v398
        %2707 = vmatprep.subr.mxu0 0.0
        %2708 = vmatpush1.msra.mxu0 0.0
        %2709 = vmatprep.subr.mxu0 0.0
        %2710 = vmatpush1.msra.mxu0 0.0
        %2711 = vmatprep.subr.mxu0 0.0
        %2712 = vmatpush1.msra.mxu0 0.0
        %2713 = vmatprep.subr.mxu0 0.0
        %2714 = vmatpush1.msra.mxu0 0.0
        %2715 = vmatprep.subr.mxu0 0.0
        %2716 = vmatpush1.msra.mxu0 0.0
        %2717 = vmatprep.subr.mxu0 0.0
        %2718 = vmatpush1.msra.mxu0 0.0
        %2719 = vmatprep.subr.mxu0 0.0
        %2720 = vmatpush1.msra.mxu0 0.0
        %2721 = vmatprep.subr.mxu0 0.0
        %2722 = vmatpush1.msra.mxu0 0.0
        %2723 = vmatprep.subr.mxu0 0.0
        %2724 = vmatpush1.msra.mxu0 0.0
        %2725 = vmatprep.subr.mxu0 0.0
        %2726 = vmatpush1.msra.mxu0 0.0
        %2727 = vmatprep.subr.mxu0 0.0
        %2728 = vmatpush1.msra.mxu0 0.0
        %2729 = vmatprep.subr.mxu0 0.0
        %2730 = vmatpush1.msra.mxu0 0.0
        %2731 = vmatprep.subr.mxu0 0.0
        %2732 = vmatpush1.msra.mxu0 0.0
        %2733 = vmatprep.subr.mxu0 0.0
        %2734 = vmatpush1.msra.mxu0 0.0
        %2735 = vmatprep.subr.mxu0 0.0
        %2736 = vmatpush1.msra.mxu0 0.0
        %2737 = vmatprep.subr.mxu0 0.0
        %2738 = vmatpush1.msra.mxu0 0.0
        %2739 = vmatprep.subr.mxu0 0.0
        %2740 = vmatpush1.msra.mxu0 0.0
        %2741 = vmatprep.subr.mxu0 0.0
        %2742 = vmatpush1.msra.mxu0 0.0
        %2743 = vmatprep.subr.mxu0 0.0
        %2744 = vmatpush1.msra.mxu0 0.0
        %2745 = vmatprep.subr.mxu0 0.0
        %2746 = vmatpush1.msra.mxu0 0.0
        %2747 = vmatprep.subr.mxu0 0.0
        %2748 = vmatpush1.msra.mxu0 0.0
        %2749 = vmatprep.subr.mxu0 0.0
        %2750 = vmatpush1.msra.mxu0 0.0
        %2751 = vmatprep.subr.mxu0 0.0
        %2752 = vmatpush1.msra.mxu0 0.0
        %2753 = vmatprep.subr.mxu0 0.0
        %2754 = vmatpush1.msra.mxu0 0.0
        %2755 = vmatprep.subr.mxu0 0.0
        %2756 = vmatpush1.msra.mxu0 0.0
        %2757 = vmatprep.subr.mxu0 0.0
        %2758 = vmatpush1.msra.mxu0 0.0
        %2759 = vmatprep.subr.mxu0 0.0
        %2760 = vmatpush1.msra.mxu0 0.0
        %2761 = vmatprep.subr.mxu0 0.0
        %2762 = vmatpush1.msra.mxu0 0.0
        %2763 = vmatprep.mubr.f32.mxu0 0.0
        %2764 = vmatmul.mubr.f32.gmra.mrb[0].mxu0 %v2562
        %v2765 = vpop.f32.mrb[0].mxu0
        %v2766 = vadd.f32 0.0, %v2765
        %v2767 = vpop.f32.mrb[0].mxu0
        %2768 = vdwg.mxu0
        %v2770 = vrot.slane %v2766, 1
        %v2771 = vrot.slane %v2766, 2
        %v2772 = vrot.slane %v2766, 3
        %v2773 = vrot.slane %v2766, 4
        %v2774 = vrot.slane %v2766, 5
        %v2775 = vrot.slane %v2766, 6
        %v2776 = vrot.slane %v2766, 7
        %v2785 = vadd.f32 %v2691, %v2766
        %v2786 = vadd.f32 %v2692, %v2770
        %v2787 = vadd.f32 %v2693, %v2771
        %v2788 = vadd.f32 %v2694, %v2772
        %v2789 = vadd.f32 %v2695, %v2773
        %v2790 = vadd.f32 %v2696, %v2774
        %v2791 = vadd.f32 %v2697, %v2775
        %v2792 = vadd.f32 %v2698, %v2776
        %v2793 = vxor.u32 %v2785, 2147483648
        %v2794 = vxor.u32 %v2786, 2147483648
        %v2795 = vxor.u32 %v2787, 2147483648
        %v2796 = vxor.u32 %v2788, 2147483648
        %v2797 = vxor.u32 %v2789, 2147483648
        %v2798 = vxor.u32 %v2790, 2147483648
        %v2799 = vxor.u32 %v2791, 2147483648
        %v2800 = vxor.u32 %v2792, 2147483648
        %v2801 = vmul.f32 %v2793, 1.442695
        %v2802 = vpow.pop %v2801
        %v2803 = vmul.f32 %v2794, 1.442695
        %v2804 = vpow.pop %v2803
        %v2805 = vmul.f32 %v2795, 1.442695
        %v2806 = vpow.pop %v2805
        %v2807 = vmul.f32 %v2796, 1.442695
        %v2808 = vpow.pop %v2807
        %v2809 = vmul.f32 %v2797, 1.442695
        %v2810 = vpow.pop %v2809
        %v2811 = vmul.f32 %v2798, 1.442695
        %v2812 = vpow.pop %v2811
        %v2813 = vmul.f32 %v2799, 1.442695
        %v2814 = vpow.pop %v2813
        %v2815 = vmul.f32 %v2800, 1.442695
        %v2816 = vpow.pop %v2815
        %v2817 = vadd.f32 %v2802, 1.0
        %v2818 = vadd.f32 %v2804, 1.0
        %v2819 = vadd.f32 %v2806, 1.0
        %v2820 = vadd.f32 %v2808, 1.0
        %v2821 = vadd.f32 %v2810, 1.0
        %v2822 = vadd.f32 %v2812, 1.0
        %v2823 = vadd.f32 %v2814, 1.0
        %v2824 = vadd.f32 %v2816, 1.0
        %v2825 = vrcp.pop %v2817
        %v2826 = vmul.f32 1.0, %v2825
        %v2827 = vrcp.pop %v2818
        %v2828 = vmul.f32 1.0, %v2827
        %v2829 = vrcp.pop %v2819
        %v2830 = vmul.f32 1.0, %v2829
        %v2831 = vrcp.pop %v2820
        %v2832 = vmul.f32 1.0, %v2831
        %v2833 = vrcp.pop %v2821
        %v2834 = vmul.f32 1.0, %v2833
        %v2835 = vrcp.pop %v2822
        %v2836 = vmul.f32 1.0, %v2835
        %v2837 = vrcp.pop %v2823
        %v2838 = vmul.f32 1.0, %v2837
        %v2839 = vrcp.pop %v2824
        %v2840 = vmul.f32 1.0, %v2839
        %v2841 = vtanh.pop %v2785
        %v2842 = vtanh.pop %v2786
        %v2843 = vtanh.pop %v2787
        %v2844 = vtanh.pop %v2788
        %v2845 = vtanh.pop %v2789
        %v2846 = vtanh.pop %v2790
        %v2847 = vtanh.pop %v2791
        %v2848 = vtanh.pop %v2792
        %v2849 = vmul.f32 %v2826, %v2477
        %v2850 = vmul.f32 %v2828, %v2478
        %v2851 = vmul.f32 %v2830, %v2479
        %v2852 = vmul.f32 %v2832, %v2480
        %v2853 = vmul.f32 %v2834, %v2481
        %v2854 = vmul.f32 %v2836, %v2482
        %v2855 = vmul.f32 %v2838, %v2483
        %v2856 = vmul.f32 %v2840, %v2484
        %2865 = vrot.lane.b32.xlu0 %v2841, 64
        %v2866 = vpop.permute.xlu0 %2865
        %2867 = vrot.lane.b32.xlu0 %v2842, 64
        %v2868 = vpop.permute.xlu0 %2867
        %2869 = vrot.lane.b32.xlu0 %v2843, 64
        %v2870 = vpop.permute.xlu0 %2869
        %2871 = vrot.lane.b32.xlu0 %v2844, 64
        %v2872 = vpop.permute.xlu0 %2871
        %2873 = vrot.lane.b32.xlu0 %v2845, 64
        %v2874 = vpop.permute.xlu0 %2873
        %2875 = vrot.lane.b32.xlu0 %v2846, 64
        %v2876 = vpop.permute.xlu0 %2875
        %2877 = vrot.lane.b32.xlu0 %v2847, 64
        %v2878 = vpop.permute.xlu0 %2877
        %2879 = vrot.lane.b32.xlu0 %v2848, 64
        %v2880 = vpop.permute.xlu0 %2879
        %v2889 = vmul.f32 %v2826, %v2866
        %v2890 = vmul.f32 %v2828, %v2868
        %v2891 = vmul.f32 %v2830, %v2870
        %v2892 = vmul.f32 %v2832, %v2872
        %v2893 = vmul.f32 %v2834, %v2874
        %v2894 = vmul.f32 %v2836, %v2876
        %v2895 = vmul.f32 %v2838, %v2878
        %v2896 = vmul.f32 %v2840, %v2880
        %2905 = vrot.lane.b32.xlu0 %v2889, 32
        %v2906 = vpop.permute.xlu0 %2905
        %2907 = vrot.lane.b32.xlu0 %v2890, 32
        %v2908 = vpop.permute.xlu0 %2907
        %2909 = vrot.lane.b32.xlu0 %v2891, 32
        %v2910 = vpop.permute.xlu0 %2909
        %2911 = vrot.lane.b32.xlu0 %v2892, 32
        %v2912 = vpop.permute.xlu0 %2911
        %2913 = vrot.lane.b32.xlu0 %v2893, 32
        %v2914 = vpop.permute.xlu0 %2913
        %2915 = vrot.lane.b32.xlu0 %v2894, 32
        %v2916 = vpop.permute.xlu0 %2915
        %2917 = vrot.lane.b32.xlu0 %v2895, 32
        %v2918 = vpop.permute.xlu0 %2917
        %2919 = vrot.lane.b32.xlu0 %v2896, 32
        %v2920 = vpop.permute.xlu0 %2919
        %v2929 = vadd.f32 %v2849, %v2906
        %v2930 = vadd.f32 %v2850, %v2908
        %v2931 = vadd.f32 %v2851, %v2910
        %v2932 = vadd.f32 %v2852, %v2912
        %v2933 = vadd.f32 %v2853, %v2914
        %v2934 = vadd.f32 %v2854, %v2916
        %v2935 = vadd.f32 %v2855, %v2918
        %v2936 = vadd.f32 %v2856, %v2920
        %v2937 = vtanh.pop %v2929
        %v2938 = vtanh.pop %v2930
        %v2939 = vtanh.pop %v2931
        %v2940 = vtanh.pop %v2932
        %v2941 = vtanh.pop %v2933
        %v2942 = vtanh.pop %v2934
        %v2943 = vtanh.pop %v2935
        %v2944 = vtanh.pop %v2936
        %2953 = vrot.lane.b32.xlu0 %v2937, 64
        %v2954 = vpop.permute.xlu0 %2953
        %2955 = vrot.lane.b32.xlu0 %v2938, 64
        %v2956 = vpop.permute.xlu0 %2955
        %2957 = vrot.lane.b32.xlu0 %v2939, 64
        %v2958 = vpop.permute.xlu0 %2957
        %2959 = vrot.lane.b32.xlu0 %v2940, 64
        %v2960 = vpop.permute.xlu0 %2959
        %2961 = vrot.lane.b32.xlu0 %v2941, 64
        %v2962 = vpop.permute.xlu0 %2961
        %2963 = vrot.lane.b32.xlu0 %v2942, 64
        %v2964 = vpop.permute.xlu0 %2963
        %2965 = vrot.lane.b32.xlu0 %v2943, 64
        %v2966 = vpop.permute.xlu0 %2965
        %2967 = vrot.lane.b32.xlu0 %v2944, 64
        %v2968 = vpop.permute.xlu0 %2967
        %v2977 = vmul.f32 %v2826, %v2954
        %v2978 = vmul.f32 %v2828, %v2956
        %v2979 = vmul.f32 %v2830, %v2958
        %v2980 = vmul.f32 %v2832, %v2960
        %v2981 = vmul.f32 %v2834, %v2962
        %v2982 = vmul.f32 %v2836, %v2964
        %v2983 = vmul.f32 %v2838, %v2966
        %v2984 = vmul.f32 %v2840, %v2968
        %s2985 = scalar_lea.vmem [#allocation4], 160
        %v2986 = vld [vmem:[%s2985] sm:$0xff]
        %v2987 = vld [vmem:[%s2985 + $0x8] sm:$0xff]
        %v2988 = vld [vmem:[%s2985 + $0x10] sm:$0xff]
        %v2989 = vld [vmem:[%s2985 + $0x18] sm:$0xff]
        %v2998 = vrot.slane %v2978, 7
        %v2999 = vsel %vm798, %v2998, %v2977
        %v3000 = vrot.slane %v2979, 6
        %v3001 = vsel %vm801, %v3000, %v2999
        %v3002 = vrot.slane %v2980, 5
        %v3003 = vsel %vm804, %v3002, %v3001
        %v3004 = vrot.slane %v2981, 4
        %v3005 = vsel %vm807, %v3004, %v3003
        %v3006 = vrot.slane %v2982, 3
        %v3007 = vsel %vm810, %v3006, %v3005
        %v3008 = vrot.slane %v2983, 2
        %v3009 = vsel %vm813, %v3008, %v3007
        %v3010 = vrot.slane %v2984, 1
        %v3011 = vsel %vm816, %v3010, %v3009
        %3012 = vrot.lane.b32.xlu0 %v3011, 32
        %v3013 = vpop.permute.xlu0 %3012
        %v3014 = vsel %vm399, %v3013, 0
        %3016 = vmatprep.subr.mxu0 0.0
        %3017 = vmatpush1.msra.mxu0 %v2986
        %3018 = vmatprep.subr.mxu0 0.0
        %3019 = vmatpush1.msra.mxu0 %v2987
        %3020 = vmatprep.subr.mxu0 0.0
        %3021 = vmatpush1.msra.mxu0 %v2988
        %3022 = vmatprep.subr.mxu0 0.0
        %3023 = vmatpush1.msra.mxu0 %v2989
        %3024 = vmatprep.subr.mxu0 0.0
        %3025 = vmatpush1.msra.mxu0 0.0
        %3026 = vmatprep.subr.mxu0 0.0
        %3027 = vmatpush1.msra.mxu0 0.0
        %3028 = vmatprep.subr.mxu0 0.0
        %3029 = vmatpush1.msra.mxu0 0.0
        %3030 = vmatprep.subr.mxu0 0.0
        %3031 = vmatpush1.msra.mxu0 0.0
        %3032 = vmatprep.subr.mxu0 0.0
        %3033 = vmatpush1.msra.mxu0 0.0
        %3034 = vmatprep.subr.mxu0 0.0
        %3035 = vmatpush1.msra.mxu0 0.0
        %3036 = vmatprep.subr.mxu0 0.0
        %3037 = vmatpush1.msra.mxu0 0.0
        %3038 = vmatprep.subr.mxu0 0.0
        %3039 = vmatpush1.msra.mxu0 0.0
        %3040 = vmatprep.subr.mxu0 0.0
        %3041 = vmatpush1.msra.mxu0 0.0
        %3042 = vmatprep.subr.mxu0 0.0
        %3043 = vmatpush1.msra.mxu0 0.0
        %3044 = vmatprep.subr.mxu0 0.0
        %3045 = vmatpush1.msra.mxu0 0.0
        %3046 = vmatprep.subr.mxu0 0.0
        %3047 = vmatpush1.msra.mxu0 0.0
        %3048 = vmatprep.subr.mxu0 0.0
        %3049 = vmatpush1.msra.mxu0 0.0
        %3050 = vmatprep.subr.mxu0 0.0
        %3051 = vmatpush1.msra.mxu0 0.0
        %3052 = vmatprep.subr.mxu0 0.0
        %3053 = vmatpush1.msra.mxu0 0.0
        %3054 = vmatprep.subr.mxu0 0.0
        %3055 = vmatpush1.msra.mxu0 0.0
        %3056 = vmatprep.subr.mxu0 0.0
        %3057 = vmatpush1.msra.mxu0 0.0
        %3058 = vmatprep.subr.mxu0 0.0
        %3059 = vmatpush1.msra.mxu0 0.0
        %3060 = vmatprep.subr.mxu0 0.0
        %3061 = vmatpush1.msra.mxu0 0.0
        %3062 = vmatprep.subr.mxu0 0.0
        %3063 = vmatpush1.msra.mxu0 0.0
        %3064 = vmatprep.subr.mxu0 0.0
        %3065 = vmatpush1.msra.mxu0 0.0
        %3066 = vmatprep.subr.mxu0 0.0
        %3067 = vmatpush1.msra.mxu0 0.0
        %3068 = vmatprep.subr.mxu0 0.0
        %3069 = vmatpush1.msra.mxu0 0.0
        %3070 = vmatprep.subr.mxu0 0.0
        %3071 = vmatpush1.msra.mxu0 0.0
        %3072 = vmatprep.subr.mxu0 0.0
        %3073 = vmatpush1.msra.mxu0 0.0
        %3074 = vmatprep.subr.mxu0 0.0
        %3075 = vmatpush1.msra.mxu0 0.0
        %3076 = vmatprep.subr.mxu0 0.0
        %3077 = vmatpush1.msra.mxu0 0.0
        %3078 = vmatprep.subr.mxu0 0.0
        %3079 = vmatpush1.msra.mxu0 0.0
        %3080 = vmatprep.mubr.f32.mxu0 0.0
        %3081 = vmatmul.mubr.f32.gmra.mrb[0].mxu0 %v3014
        %v3082 = vpop.f32.mrb[0].mxu0
        %v3083 = vadd.f32 0.0, %v3082
        %v3084 = vpop.f32.mrb[0].mxu0
        %3085 = vdwg.mxu0
        %v3086 = vadd.f32 %v2634, %v3083
        %v3087 = vld [vmem:[%s297 + $0x6] sm:$0x1]
        %v3088 = vld [vmem:[%s297 + $0xe] sm:$0x1]
        %v3089 = vld [vmem:[%s297 + $0x16] sm:$0x1]
        %v3090 = vld [vmem:[%s297 + $0x1e] sm:$0x1]
        %v3091 = vld [vmem:[%s297 + $0x26] sm:$0x1]
        %v3092 = vld [vmem:[%s297 + $0x2e] sm:$0x1]
        %v3093 = vld [vmem:[%s297 + $0x36] sm:$0x1]
        %v3094 = vld [vmem:[%s297 + $0x3e] sm:$0x1]
        %3096 = vset.pattern.permute.xlu0 0
        %3097 = vperm.xlu0 %3096, %v3087
        %v3098 = vpop.permute.xlu0 %3097
        %3101 = vset.pattern.permute.xlu0 0
        %3102 = vperm.xlu0 %3101, %v3088
        %v3103 = vpop.permute.xlu0 %3102
        %3106 = vset.pattern.permute.xlu0 0
        %3107 = vperm.xlu0 %3106, %v3089
        %v3108 = vpop.permute.xlu0 %3107
        %3111 = vset.pattern.permute.xlu0 0
        %3112 = vperm.xlu0 %3111, %v3090
        %v3113 = vpop.permute.xlu0 %3112
        %3116 = vset.pattern.permute.xlu0 0
        %3117 = vperm.xlu0 %3116, %v3091
        %v3118 = vpop.permute.xlu0 %3117
        %3121 = vset.pattern.permute.xlu0 0
        %3122 = vperm.xlu0 %3121, %v3092
        %v3123 = vpop.permute.xlu0 %3122
        %3126 = vset.pattern.permute.xlu0 0
        %3127 = vperm.xlu0 %3126, %v3093
        %v3128 = vpop.permute.xlu0 %3127
        %3131 = vset.pattern.permute.xlu0 0
        %3132 = vperm.xlu0 %3131, %v3094
        %v3133 = vpop.permute.xlu0 %3132
        %v3135 = vmul.f32 %v3098, %v370
        %v3136 = vmul.f32 %v3103, %v370
        %v3137 = vmul.f32 %v3108, %v370
        %v3138 = vmul.f32 %v3113, %v370
        %v3139 = vmul.f32 %v3118, %v370
        %v3140 = vmul.f32 %v3123, %v370
        %v3141 = vmul.f32 %v3128, %v370
        %v3142 = vmul.f32 %v3133, %v370
        %v3143 = vadd.f32 %v3135, %v385
        %v3144 = vadd.f32 %v3136, %v385
        %v3145 = vadd.f32 %v3137, %v385
        %v3146 = vadd.f32 %v3138, %v385
        %v3147 = vadd.f32 %v3139, %v385
        %v3148 = vadd.f32 %v3140, %v385
        %v3149 = vadd.f32 %v3141, %v385
        %v3150 = vadd.f32 %v3142, %v385
        %3151 = vmatprep.subr.mxu0 0.0
        %3152 = vmatpush1.msra.mxu0 %v395
        %3153 = vmatprep.subr.mxu0 0.0
        %3154 = vmatpush1.msra.mxu0 %v396
        %3155 = vmatprep.subr.mxu0 0.0
        %3156 = vmatpush1.msra.mxu0 %v397
        %3157 = vmatprep.subr.mxu0 0.0
        %3158 = vmatpush1.msra.mxu0 %v398
        %3159 = vmatprep.subr.mxu0 0.0
        %3160 = vmatpush1.msra.mxu0 0.0
        %3161 = vmatprep.subr.mxu0 0.0
        %3162 = vmatpush1.msra.mxu0 0.0
        %3163 = vmatprep.subr.mxu0 0.0
        %3164 = vmatpush1.msra.mxu0 0.0
        %3165 = vmatprep.subr.mxu0 0.0
        %3166 = vmatpush1.msra.mxu0 0.0
        %3167 = vmatprep.subr.mxu0 0.0
        %3168 = vmatpush1.msra.mxu0 0.0
        %3169 = vmatprep.subr.mxu0 0.0
        %3170 = vmatpush1.msra.mxu0 0.0
        %3171 = vmatprep.subr.mxu0 0.0
        %3172 = vmatpush1.msra.mxu0 0.0
        %3173 = vmatprep.subr.mxu0 0.0
        %3174 = vmatpush1.msra.mxu0 0.0
        %3175 = vmatprep.subr.mxu0 0.0
        %3176 = vmatpush1.msra.mxu0 0.0
        %3177 = vmatprep.subr.mxu0 0.0
        %3178 = vmatpush1.msra.mxu0 0.0
        %3179 = vmatprep.subr.mxu0 0.0
        %3180 = vmatpush1.msra.mxu0 0.0
        %3181 = vmatprep.subr.mxu0 0.0
        %3182 = vmatpush1.msra.mxu0 0.0
        %3183 = vmatprep.subr.mxu0 0.0
        %3184 = vmatpush1.msra.mxu0 0.0
        %3185 = vmatprep.subr.mxu0 0.0
        %3186 = vmatpush1.msra.mxu0 0.0
        %3187 = vmatprep.subr.mxu0 0.0
        %3188 = vmatpush1.msra.mxu0 0.0
        %3189 = vmatprep.subr.mxu0 0.0
        %3190 = vmatpush1.msra.mxu0 0.0
        %3191 = vmatprep.subr.mxu0 0.0
        %3192 = vmatpush1.msra.mxu0 0.0
        %3193 = vmatprep.subr.mxu0 0.0
        %3194 = vmatpush1.msra.mxu0 0.0
        %3195 = vmatprep.subr.mxu0 0.0
        %3196 = vmatpush1.msra.mxu0 0.0
        %3197 = vmatprep.subr.mxu0 0.0
        %3198 = vmatpush1.msra.mxu0 0.0
        %3199 = vmatprep.subr.mxu0 0.0
        %3200 = vmatpush1.msra.mxu0 0.0
        %3201 = vmatprep.subr.mxu0 0.0
        %3202 = vmatpush1.msra.mxu0 0.0
        %3203 = vmatprep.subr.mxu0 0.0
        %3204 = vmatpush1.msra.mxu0 0.0
        %3205 = vmatprep.subr.mxu0 0.0
        %3206 = vmatpush1.msra.mxu0 0.0
        %3207 = vmatprep.subr.mxu0 0.0
        %3208 = vmatpush1.msra.mxu0 0.0
        %3209 = vmatprep.subr.mxu0 0.0
        %3210 = vmatpush1.msra.mxu0 0.0
        %3211 = vmatprep.subr.mxu0 0.0
        %3212 = vmatpush1.msra.mxu0 0.0
        %3213 = vmatprep.subr.mxu0 0.0
        %3214 = vmatpush1.msra.mxu0 0.0
        %3215 = vmatprep.mubr.f32.mxu0 0.0
        %3216 = vmatmul.mubr.f32.gmra.mrb[0].mxu0 %v3014
        %v3217 = vpop.f32.mrb[0].mxu0
        %v3218 = vadd.f32 0.0, %v3217
        %v3219 = vpop.f32.mrb[0].mxu0
        %3220 = vdwg.mxu0
        %v3222 = vrot.slane %v3218, 1
        %v3223 = vrot.slane %v3218, 2
        %v3224 = vrot.slane %v3218, 3
        %v3225 = vrot.slane %v3218, 4
        %v3226 = vrot.slane %v3218, 5
        %v3227 = vrot.slane %v3218, 6
        %v3228 = vrot.slane %v3218, 7
        %v3237 = vadd.f32 %v3143, %v3218
        %v3238 = vadd.f32 %v3144, %v3222
        %v3239 = vadd.f32 %v3145, %v3223
        %v3240 = vadd.f32 %v3146, %v3224
        %v3241 = vadd.f32 %v3147, %v3225
        %v3242 = vadd.f32 %v3148, %v3226
        %v3243 = vadd.f32 %v3149, %v3227
        %v3244 = vadd.f32 %v3150, %v3228
        %v3245 = vxor.u32 %v3237, 2147483648
        %v3246 = vxor.u32 %v3238, 2147483648
        %v3247 = vxor.u32 %v3239, 2147483648
        %v3248 = vxor.u32 %v3240, 2147483648
        %v3249 = vxor.u32 %v3241, 2147483648
        %v3250 = vxor.u32 %v3242, 2147483648
        %v3251 = vxor.u32 %v3243, 2147483648
        %v3252 = vxor.u32 %v3244, 2147483648
        %v3253 = vmul.f32 %v3245, 1.442695
        %v3254 = vpow.pop %v3253
        %v3255 = vmul.f32 %v3246, 1.442695
        %v3256 = vpow.pop %v3255
        %v3257 = vmul.f32 %v3247, 1.442695
        %v3258 = vpow.pop %v3257
        %v3259 = vmul.f32 %v3248, 1.442695
        %v3260 = vpow.pop %v3259
        %v3261 = vmul.f32 %v3249, 1.442695
        %v3262 = vpow.pop %v3261
        %v3263 = vmul.f32 %v3250, 1.442695
        %v3264 = vpow.pop %v3263
        %v3265 = vmul.f32 %v3251, 1.442695
        %v3266 = vpow.pop %v3265
        %v3267 = vmul.f32 %v3252, 1.442695
        %v3268 = vpow.pop %v3267
        %v3269 = vadd.f32 %v3254, 1.0
        %v3270 = vadd.f32 %v3256, 1.0
        %v3271 = vadd.f32 %v3258, 1.0
        %v3272 = vadd.f32 %v3260, 1.0
        %v3273 = vadd.f32 %v3262, 1.0
        %v3274 = vadd.f32 %v3264, 1.0
        %v3275 = vadd.f32 %v3266, 1.0
        %v3276 = vadd.f32 %v3268, 1.0
        %v3277 = vrcp.pop %v3269
        %v3278 = vmul.f32 1.0, %v3277
        %v3279 = vrcp.pop %v3270
        %v3280 = vmul.f32 1.0, %v3279
        %v3281 = vrcp.pop %v3271
        %v3282 = vmul.f32 1.0, %v3281
        %v3283 = vrcp.pop %v3272
        %v3284 = vmul.f32 1.0, %v3283
        %v3285 = vrcp.pop %v3273
        %v3286 = vmul.f32 1.0, %v3285
        %v3287 = vrcp.pop %v3274
        %v3288 = vmul.f32 1.0, %v3287
        %v3289 = vrcp.pop %v3275
        %v3290 = vmul.f32 1.0, %v3289
        %v3291 = vrcp.pop %v3276
        %v3292 = vmul.f32 1.0, %v3291
        %v3293 = vtanh.pop %v3237
        %v3294 = vtanh.pop %v3238
        %v3295 = vtanh.pop %v3239
        %v3296 = vtanh.pop %v3240
        %v3297 = vtanh.pop %v3241
        %v3298 = vtanh.pop %v3242
        %v3299 = vtanh.pop %v3243
        %v3300 = vtanh.pop %v3244
        %v3301 = vmul.f32 %v3278, %v2929
        %v3302 = vmul.f32 %v3280, %v2930
        %v3303 = vmul.f32 %v3282, %v2931
        %v3304 = vmul.f32 %v3284, %v2932
        %v3305 = vmul.f32 %v3286, %v2933
        %v3306 = vmul.f32 %v3288, %v2934
        %v3307 = vmul.f32 %v3290, %v2935
        %v3308 = vmul.f32 %v3292, %v2936
        %3317 = vrot.lane.b32.xlu0 %v3293, 64
        %v3318 = vpop.permute.xlu0 %3317
        %3319 = vrot.lane.b32.xlu0 %v3294, 64
        %v3320 = vpop.permute.xlu0 %3319
        %3321 = vrot.lane.b32.xlu0 %v3295, 64
        %v3322 = vpop.permute.xlu0 %3321
        %3323 = vrot.lane.b32.xlu0 %v3296, 64
        %v3324 = vpop.permute.xlu0 %3323
        %3325 = vrot.lane.b32.xlu0 %v3297, 64
        %v3326 = vpop.permute.xlu0 %3325
        %3327 = vrot.lane.b32.xlu0 %v3298, 64
        %v3328 = vpop.permute.xlu0 %3327
        %3329 = vrot.lane.b32.xlu0 %v3299, 64
        %v3330 = vpop.permute.xlu0 %3329
        %3331 = vrot.lane.b32.xlu0 %v3300, 64
        %v3332 = vpop.permute.xlu0 %3331
        %v3341 = vmul.f32 %v3278, %v3318
        %v3342 = vmul.f32 %v3280, %v3320
        %v3343 = vmul.f32 %v3282, %v3322
        %v3344 = vmul.f32 %v3284, %v3324
        %v3345 = vmul.f32 %v3286, %v3326
        %v3346 = vmul.f32 %v3288, %v3328
        %v3347 = vmul.f32 %v3290, %v3330
        %v3348 = vmul.f32 %v3292, %v3332
        %3357 = vrot.lane.b32.xlu0 %v3341, 32
        %v3358 = vpop.permute.xlu0 %3357
        %3359 = vrot.lane.b32.xlu0 %v3342, 32
        %v3360 = vpop.permute.xlu0 %3359
        %3361 = vrot.lane.b32.xlu0 %v3343, 32
        %v3362 = vpop.permute.xlu0 %3361
        %3363 = vrot.lane.b32.xlu0 %v3344, 32
        %v3364 = vpop.permute.xlu0 %3363
        %3365 = vrot.lane.b32.xlu0 %v3345, 32
        %v3366 = vpop.permute.xlu0 %3365
        %3367 = vrot.lane.b32.xlu0 %v3346, 32
        %v3368 = vpop.permute.xlu0 %3367
        %3369 = vrot.lane.b32.xlu0 %v3347, 32
        %v3370 = vpop.permute.xlu0 %3369
        %3371 = vrot.lane.b32.xlu0 %v3348, 32
        %v3372 = vpop.permute.xlu0 %3371
        %v3381 = vadd.f32 %v3301, %v3358
        %v3382 = vadd.f32 %v3302, %v3360
        %v3383 = vadd.f32 %v3303, %v3362
        %v3384 = vadd.f32 %v3304, %v3364
        %v3385 = vadd.f32 %v3305, %v3366
        %v3386 = vadd.f32 %v3306, %v3368
        %v3387 = vadd.f32 %v3307, %v3370
        %v3388 = vadd.f32 %v3308, %v3372
        %v3389 = vtanh.pop %v3381
        %v3390 = vtanh.pop %v3382
        %v3391 = vtanh.pop %v3383
        %v3392 = vtanh.pop %v3384
        %v3393 = vtanh.pop %v3385
        %v3394 = vtanh.pop %v3386
        %v3395 = vtanh.pop %v3387
        %v3396 = vtanh.pop %v3388
        %3405 = vrot.lane.b32.xlu0 %v3389, 64
        %v3406 = vpop.permute.xlu0 %3405
        %3407 = vrot.lane.b32.xlu0 %v3390, 64
        %v3408 = vpop.permute.xlu0 %3407
        %3409 = vrot.lane.b32.xlu0 %v3391, 64
        %v3410 = vpop.permute.xlu0 %3409
        %3411 = vrot.lane.b32.xlu0 %v3392, 64
        %v3412 = vpop.permute.xlu0 %3411
        %3413 = vrot.lane.b32.xlu0 %v3393, 64
        %v3414 = vpop.permute.xlu0 %3413
        %3415 = vrot.lane.b32.xlu0 %v3394, 64
        %v3416 = vpop.permute.xlu0 %3415
        %3417 = vrot.lane.b32.xlu0 %v3395, 64
        %v3418 = vpop.permute.xlu0 %3417
        %3419 = vrot.lane.b32.xlu0 %v3396, 64
        %v3420 = vpop.permute.xlu0 %3419
        %v3429 = vmul.f32 %v3278, %v3406
        %v3430 = vmul.f32 %v3280, %v3408
        %v3431 = vmul.f32 %v3282, %v3410
        %v3432 = vmul.f32 %v3284, %v3412
        %v3433 = vmul.f32 %v3286, %v3414
        %v3434 = vmul.f32 %v3288, %v3416
        %v3435 = vmul.f32 %v3290, %v3418
        %v3436 = vmul.f32 %v3292, %v3420
        %s3437 = scalar_lea.vmem [#allocation4], 192
        %v3438 = vld [vmem:[%s3437] sm:$0xff]
        %v3439 = vld [vmem:[%s3437 + $0x8] sm:$0xff]
        %v3440 = vld [vmem:[%s3437 + $0x10] sm:$0xff]
        %v3441 = vld [vmem:[%s3437 + $0x18] sm:$0xff]
        %v3450 = vrot.slane %v3430, 7
        %v3451 = vsel %vm798, %v3450, %v3429
        %v3452 = vrot.slane %v3431, 6
        %v3453 = vsel %vm801, %v3452, %v3451
        %v3454 = vrot.slane %v3432, 5
        %v3455 = vsel %vm804, %v3454, %v3453
        %v3456 = vrot.slane %v3433, 4
        %v3457 = vsel %vm807, %v3456, %v3455
        %v3458 = vrot.slane %v3434, 3
        %v3459 = vsel %vm810, %v3458, %v3457
        %v3460 = vrot.slane %v3435, 2
        %v3461 = vsel %vm813, %v3460, %v3459
        %v3462 = vrot.slane %v3436, 1
        %v3463 = vsel %vm816, %v3462, %v3461
        %3464 = vrot.lane.b32.xlu0 %v3463, 32
        %v3465 = vpop.permute.xlu0 %3464
        %v3466 = vsel %vm399, %v3465, 0
        %3468 = vmatprep.subr.mxu0 0.0
        %3469 = vmatpush1.msra.mxu0 %v3438
        %3470 = vmatprep.subr.mxu0 0.0
        %3471 = vmatpush1.msra.mxu0 %v3439
        %3472 = vmatprep.subr.mxu0 0.0
        %3473 = vmatpush1.msra.mxu0 %v3440
        %3474 = vmatprep.subr.mxu0 0.0
        %3475 = vmatpush1.msra.mxu0 %v3441
        %3476 = vmatprep.subr.mxu0 0.0
        %3477 = vmatpush1.msra.mxu0 0.0
        %3478 = vmatprep.subr.mxu0 0.0
        %3479 = vmatpush1.msra.mxu0 0.0
        %3480 = vmatprep.subr.mxu0 0.0
        %3481 = vmatpush1.msra.mxu0 0.0
        %3482 = vmatprep.subr.mxu0 0.0
        %3483 = vmatpush1.msra.mxu0 0.0
        %3484 = vmatprep.subr.mxu0 0.0
        %3485 = vmatpush1.msra.mxu0 0.0
        %3486 = vmatprep.subr.mxu0 0.0
        %3487 = vmatpush1.msra.mxu0 0.0
        %3488 = vmatprep.subr.mxu0 0.0
        %3489 = vmatpush1.msra.mxu0 0.0
        %3490 = vmatprep.subr.mxu0 0.0
        %3491 = vmatpush1.msra.mxu0 0.0
        %3492 = vmatprep.subr.mxu0 0.0
        %3493 = vmatpush1.msra.mxu0 0.0
        %3494 = vmatprep.subr.mxu0 0.0
        %3495 = vmatpush1.msra.mxu0 0.0
        %3496 = vmatprep.subr.mxu0 0.0
        %3497 = vmatpush1.msra.mxu0 0.0
        %3498 = vmatprep.subr.mxu0 0.0
        %3499 = vmatpush1.msra.mxu0 0.0
        %3500 = vmatprep.subr.mxu0 0.0
        %3501 = vmatpush1.msra.mxu0 0.0
        %3502 = vmatprep.subr.mxu0 0.0
        %3503 = vmatpush1.msra.mxu0 0.0
        %3504 = vmatprep.subr.mxu0 0.0
        %3505 = vmatpush1.msra.mxu0 0.0
        %3506 = vmatprep.subr.mxu0 0.0
        %3507 = vmatpush1.msra.mxu0 0.0
        %3508 = vmatprep.subr.mxu0 0.0
        %3509 = vmatpush1.msra.mxu0 0.0
        %3510 = vmatprep.subr.mxu0 0.0
        %3511 = vmatpush1.msra.mxu0 0.0
        %3512 = vmatprep.subr.mxu0 0.0
        %3513 = vmatpush1.msra.mxu0 0.0
        %3514 = vmatprep.subr.mxu0 0.0
        %3515 = vmatpush1.msra.mxu0 0.0
        %3516 = vmatprep.subr.mxu0 0.0
        %3517 = vmatpush1.msra.mxu0 0.0
        %3518 = vmatprep.subr.mxu0 0.0
        %3519 = vmatpush1.msra.mxu0 0.0
        %3520 = vmatprep.subr.mxu0 0.0
        %3521 = vmatpush1.msra.mxu0 0.0
        %3522 = vmatprep.subr.mxu0 0.0
        %3523 = vmatpush1.msra.mxu0 0.0
        %3524 = vmatprep.subr.mxu0 0.0
        %3525 = vmatpush1.msra.mxu0 0.0
        %3526 = vmatprep.subr.mxu0 0.0
        %3527 = vmatpush1.msra.mxu0 0.0
        %3528 = vmatprep.subr.mxu0 0.0
        %3529 = vmatpush1.msra.mxu0 0.0
        %3530 = vmatprep.subr.mxu0 0.0
        %3531 = vmatpush1.msra.mxu0 0.0
        %3532 = vmatprep.mubr.f32.mxu0 0.0
        %3533 = vmatmul.mubr.f32.gmra.mrb[0].mxu0 %v3466
        %v3534 = vpop.f32.mrb[0].mxu0
        %v3535 = vadd.f32 0.0, %v3534
        %v3536 = vpop.f32.mrb[0].mxu0
        %3537 = vdwg.mxu0
        %v3538 = vadd.f32 %v3086, %v3535
        %v3539 = vld [vmem:[%s297 + $0x7] sm:$0x1]
        %v3540 = vld [vmem:[%s297 + $0xf] sm:$0x1]
        %v3541 = vld [vmem:[%s297 + $0x17] sm:$0x1]
        %v3542 = vld [vmem:[%s297 + $0x1f] sm:$0x1]
        %v3543 = vld [vmem:[%s297 + $0x27] sm:$0x1]
        %v3544 = vld [vmem:[%s297 + $0x2f] sm:$0x1]
        %v3545 = vld [vmem:[%s297 + $0x37] sm:$0x1]
        %v3546 = vld [vmem:[%s297 + $0x3f] sm:$0x1]
        %3548 = vset.pattern.permute.xlu0 0
        %3549 = vperm.xlu0 %3548, %v3539
        %v3550 = vpop.permute.xlu0 %3549
        %3553 = vset.pattern.permute.xlu0 0
        %3554 = vperm.xlu0 %3553, %v3540
        %v3555 = vpop.permute.xlu0 %3554
        %3558 = vset.pattern.permute.xlu0 0
        %3559 = vperm.xlu0 %3558, %v3541
        %v3560 = vpop.permute.xlu0 %3559
        %3563 = vset.pattern.permute.xlu0 0
        %3564 = vperm.xlu0 %3563, %v3542
        %v3565 = vpop.permute.xlu0 %3564
        %3568 = vset.pattern.permute.xlu0 0
        %3569 = vperm.xlu0 %3568, %v3543
        %v3570 = vpop.permute.xlu0 %3569
        %3573 = vset.pattern.permute.xlu0 0
        %3574 = vperm.xlu0 %3573, %v3544
        %v3575 = vpop.permute.xlu0 %3574
        %3578 = vset.pattern.permute.xlu0 0
        %3579 = vperm.xlu0 %3578, %v3545
        %v3580 = vpop.permute.xlu0 %3579
        %3583 = vset.pattern.permute.xlu0 0
        %3584 = vperm.xlu0 %3583, %v3546
        %v3585 = vpop.permute.xlu0 %3584
        %v3587 = vmul.f32 %v3550, %v370
        %v3588 = vmul.f32 %v3555, %v370
        %v3589 = vmul.f32 %v3560, %v370
        %v3590 = vmul.f32 %v3565, %v370
        %v3591 = vmul.f32 %v3570, %v370
        %v3592 = vmul.f32 %v3575, %v370
        %v3593 = vmul.f32 %v3580, %v370
        %v3594 = vmul.f32 %v3585, %v370
        %v3595 = vadd.f32 %v3587, %v385
        %v3596 = vadd.f32 %v3588, %v385
        %v3597 = vadd.f32 %v3589, %v385
        %v3598 = vadd.f32 %v3590, %v385
        %v3599 = vadd.f32 %v3591, %v385
        %v3600 = vadd.f32 %v3592, %v385
        %v3601 = vadd.f32 %v3593, %v385
        %v3602 = vadd.f32 %v3594, %v385
        %3603 = vmatprep.subr.mxu0 0.0
        %3604 = vmatpush1.msra.mxu0 %v395
        %3605 = vmatprep.subr.mxu0 0.0
        %3606 = vmatpush1.msra.mxu0 %v396
        %3607 = vmatprep.subr.mxu0 0.0
        %3608 = vmatpush1.msra.mxu0 %v397
        %3609 = vmatprep.subr.mxu0 0.0
        %3610 = vmatpush1.msra.mxu0 %v398
        %3611 = vmatprep.subr.mxu0 0.0
        %3612 = vmatpush1.msra.mxu0 0.0
        %3613 = vmatprep.subr.mxu0 0.0
        %3614 = vmatpush1.msra.mxu0 0.0
        %3615 = vmatprep.subr.mxu0 0.0
        %3616 = vmatpush1.msra.mxu0 0.0
        %3617 = vmatprep.subr.mxu0 0.0
        %3618 = vmatpush1.msra.mxu0 0.0
        %3619 = vmatprep.subr.mxu0 0.0
        %3620 = vmatpush1.msra.mxu0 0.0
        %3621 = vmatprep.subr.mxu0 0.0
        %3622 = vmatpush1.msra.mxu0 0.0
        %3623 = vmatprep.subr.mxu0 0.0
        %3624 = vmatpush1.msra.mxu0 0.0
        %3625 = vmatprep.subr.mxu0 0.0
        %3626 = vmatpush1.msra.mxu0 0.0
        %3627 = vmatprep.subr.mxu0 0.0
        %3628 = vmatpush1.msra.mxu0 0.0
        %3629 = vmatprep.subr.mxu0 0.0
        %3630 = vmatpush1.msra.mxu0 0.0
        %3631 = vmatprep.subr.mxu0 0.0
        %3632 = vmatpush1.msra.mxu0 0.0
        %3633 = vmatprep.subr.mxu0 0.0
        %3634 = vmatpush1.msra.mxu0 0.0
        %3635 = vmatprep.subr.mxu0 0.0
        %3636 = vmatpush1.msra.mxu0 0.0
        %3637 = vmatprep.subr.mxu0 0.0
        %3638 = vmatpush1.msra.mxu0 0.0
        %3639 = vmatprep.subr.mxu0 0.0
        %3640 = vmatpush1.msra.mxu0 0.0
        %3641 = vmatprep.subr.mxu0 0.0
        %3642 = vmatpush1.msra.mxu0 0.0
        %3643 = vmatprep.subr.mxu0 0.0
        %3644 = vmatpush1.msra.mxu0 0.0
        %3645 = vmatprep.subr.mxu0 0.0
        %3646 = vmatpush1.msra.mxu0 0.0
        %3647 = vmatprep.subr.mxu0 0.0
        %3648 = vmatpush1.msra.mxu0 0.0
        %3649 = vmatprep.subr.mxu0 0.0
        %3650 = vmatpush1.msra.mxu0 0.0
        %3651 = vmatprep.subr.mxu0 0.0
        %3652 = vmatpush1.msra.mxu0 0.0
        %3653 = vmatprep.subr.mxu0 0.0
        %3654 = vmatpush1.msra.mxu0 0.0
        %3655 = vmatprep.subr.mxu0 0.0
        %3656 = vmatpush1.msra.mxu0 0.0
        %3657 = vmatprep.subr.mxu0 0.0
        %3658 = vmatpush1.msra.mxu0 0.0
        %3659 = vmatprep.subr.mxu0 0.0
        %3660 = vmatpush1.msra.mxu0 0.0
        %3661 = vmatprep.subr.mxu0 0.0
        %3662 = vmatpush1.msra.mxu0 0.0
        %3663 = vmatprep.subr.mxu0 0.0
        %3664 = vmatpush1.msra.mxu0 0.0
        %3665 = vmatprep.subr.mxu0 0.0
        %3666 = vmatpush1.msra.mxu0 0.0
        %3667 = vmatprep.mubr.f32.mxu0 0.0
        %3668 = vmatmul.mubr.f32.gmra.mrb[0].mxu0 %v3466
        %v3669 = vpop.f32.mrb[0].mxu0
        %v3670 = vadd.f32 0.0, %v3669
        %v3671 = vpop.f32.mrb[0].mxu0
        %3672 = vdwg.mxu0
        %v3674 = vrot.slane %v3670, 1
        %v3675 = vrot.slane %v3670, 2
        %v3676 = vrot.slane %v3670, 3
        %v3677 = vrot.slane %v3670, 4
        %v3678 = vrot.slane %v3670, 5
        %v3679 = vrot.slane %v3670, 6
        %v3680 = vrot.slane %v3670, 7
        %v3689 = vadd.f32 %v3595, %v3670
        %v3690 = vadd.f32 %v3596, %v3674
        %v3691 = vadd.f32 %v3597, %v3675
        %v3692 = vadd.f32 %v3598, %v3676
        %v3693 = vadd.f32 %v3599, %v3677
        %v3694 = vadd.f32 %v3600, %v3678
        %v3695 = vadd.f32 %v3601, %v3679
        %v3696 = vadd.f32 %v3602, %v3680
        %v3697 = vxor.u32 %v3689, 2147483648
        %v3698 = vxor.u32 %v3690, 2147483648
        %v3699 = vxor.u32 %v3691, 2147483648
        %v3700 = vxor.u32 %v3692, 2147483648
        %v3701 = vxor.u32 %v3693, 2147483648
        %v3702 = vxor.u32 %v3694, 2147483648
        %v3703 = vxor.u32 %v3695, 2147483648
        %v3704 = vxor.u32 %v3696, 2147483648
        %v3705 = vmul.f32 %v3697, 1.442695
        %v3706 = vpow.pop %v3705
        %v3707 = vmul.f32 %v3698, 1.442695
        %v3708 = vpow.pop %v3707
        %v3709 = vmul.f32 %v3699, 1.442695
        %v3710 = vpow.pop %v3709
        %v3711 = vmul.f32 %v3700, 1.442695
        %v3712 = vpow.pop %v3711
        %v3713 = vmul.f32 %v3701, 1.442695
        %v3714 = vpow.pop %v3713
        %v3715 = vmul.f32 %v3702, 1.442695
        %v3716 = vpow.pop %v3715
        %v3717 = vmul.f32 %v3703, 1.442695
        %v3718 = vpow.pop %v3717
        %v3719 = vmul.f32 %v3704, 1.442695
        %v3720 = vpow.pop %v3719
        %v3721 = vadd.f32 %v3706, 1.0
        %v3722 = vadd.f32 %v3708, 1.0
        %v3723 = vadd.f32 %v3710, 1.0
        %v3724 = vadd.f32 %v3712, 1.0
        %v3725 = vadd.f32 %v3714, 1.0
        %v3726 = vadd.f32 %v3716, 1.0
        %v3727 = vadd.f32 %v3718, 1.0
        %v3728 = vadd.f32 %v3720, 1.0
        %v3729 = vrcp.pop %v3721
        %v3730 = vmul.f32 1.0, %v3729
        %v3731 = vrcp.pop %v3722
        %v3732 = vmul.f32 1.0, %v3731
        %v3733 = vrcp.pop %v3723
        %v3734 = vmul.f32 1.0, %v3733
        %v3735 = vrcp.pop %v3724
        %v3736 = vmul.f32 1.0, %v3735
        %v3737 = vrcp.pop %v3725
        %v3738 = vmul.f32 1.0, %v3737
        %v3739 = vrcp.pop %v3726
        %v3740 = vmul.f32 1.0, %v3739
        %v3741 = vrcp.pop %v3727
        %v3742 = vmul.f32 1.0, %v3741
        %v3743 = vrcp.pop %v3728
        %v3744 = vmul.f32 1.0, %v3743
        %v3745 = vtanh.pop %v3689
        %v3746 = vtanh.pop %v3690
        %v3747 = vtanh.pop %v3691
        %v3748 = vtanh.pop %v3692
        %v3749 = vtanh.pop %v3693
        %v3750 = vtanh.pop %v3694
        %v3751 = vtanh.pop %v3695
        %v3752 = vtanh.pop %v3696
        %v3753 = vmul.f32 %v3730, %v3381
        %v3754 = vmul.f32 %v3732, %v3382
        %v3755 = vmul.f32 %v3734, %v3383
        %v3756 = vmul.f32 %v3736, %v3384
        %v3757 = vmul.f32 %v3738, %v3385
        %v3758 = vmul.f32 %v3740, %v3386
        %v3759 = vmul.f32 %v3742, %v3387
        %v3760 = vmul.f32 %v3744, %v3388
        %3769 = vrot.lane.b32.xlu0 %v3745, 64
        %v3770 = vpop.permute.xlu0 %3769
        %3771 = vrot.lane.b32.xlu0 %v3746, 64
        %v3772 = vpop.permute.xlu0 %3771
        %3773 = vrot.lane.b32.xlu0 %v3747, 64
        %v3774 = vpop.permute.xlu0 %3773
        %3775 = vrot.lane.b32.xlu0 %v3748, 64
        %v3776 = vpop.permute.xlu0 %3775
        %3777 = vrot.lane.b32.xlu0 %v3749, 64
        %v3778 = vpop.permute.xlu0 %3777
        %3779 = vrot.lane.b32.xlu0 %v3750, 64
        %v3780 = vpop.permute.xlu0 %3779
        %3781 = vrot.lane.b32.xlu0 %v3751, 64
        %v3782 = vpop.permute.xlu0 %3781
        %3783 = vrot.lane.b32.xlu0 %v3752, 64
        %v3784 = vpop.permute.xlu0 %3783
        %v3793 = vmul.f32 %v3730, %v3770
        %v3794 = vmul.f32 %v3732, %v3772
        %v3795 = vmul.f32 %v3734, %v3774
        %v3796 = vmul.f32 %v3736, %v3776
        %v3797 = vmul.f32 %v3738, %v3778
        %v3798 = vmul.f32 %v3740, %v3780
        %v3799 = vmul.f32 %v3742, %v3782
        %v3800 = vmul.f32 %v3744, %v3784
        %3809 = vrot.lane.b32.xlu0 %v3793, 32
        %v3810 = vpop.permute.xlu0 %3809
        %3811 = vrot.lane.b32.xlu0 %v3794, 32
        %v3812 = vpop.permute.xlu0 %3811
        %3813 = vrot.lane.b32.xlu0 %v3795, 32
        %v3814 = vpop.permute.xlu0 %3813
        %3815 = vrot.lane.b32.xlu0 %v3796, 32
        %v3816 = vpop.permute.xlu0 %3815
        %3817 = vrot.lane.b32.xlu0 %v3797, 32
        %v3818 = vpop.permute.xlu0 %3817
        %3819 = vrot.lane.b32.xlu0 %v3798, 32
        %v3820 = vpop.permute.xlu0 %3819
        %3821 = vrot.lane.b32.xlu0 %v3799, 32
        %v3822 = vpop.permute.xlu0 %3821
        %3823 = vrot.lane.b32.xlu0 %v3800, 32
        %v3824 = vpop.permute.xlu0 %3823
        %v3833 = vadd.f32 %v3753, %v3810
        %v3834 = vadd.f32 %v3754, %v3812
        %v3835 = vadd.f32 %v3755, %v3814
        %v3836 = vadd.f32 %v3756, %v3816
        %v3837 = vadd.f32 %v3757, %v3818
        %v3838 = vadd.f32 %v3758, %v3820
        %v3839 = vadd.f32 %v3759, %v3822
        %v3840 = vadd.f32 %v3760, %v3824
        %v3841 = vtanh.pop %v3833
        %v3842 = vtanh.pop %v3834
        %v3843 = vtanh.pop %v3835
        %v3844 = vtanh.pop %v3836
        %v3845 = vtanh.pop %v3837
        %v3846 = vtanh.pop %v3838
        %v3847 = vtanh.pop %v3839
        %v3848 = vtanh.pop %v3840
        %3857 = vrot.lane.b32.xlu0 %v3841, 64
        %v3858 = vpop.permute.xlu0 %3857
        %3859 = vrot.lane.b32.xlu0 %v3842, 64
        %v3860 = vpop.permute.xlu0 %3859
        %3861 = vrot.lane.b32.xlu0 %v3843, 64
        %v3862 = vpop.permute.xlu0 %3861
        %3863 = vrot.lane.b32.xlu0 %v3844, 64
        %v3864 = vpop.permute.xlu0 %3863
        %3865 = vrot.lane.b32.xlu0 %v3845, 64
        %v3866 = vpop.permute.xlu0 %3865
        %3867 = vrot.lane.b32.xlu0 %v3846, 64
        %v3868 = vpop.permute.xlu0 %3867
        %3869 = vrot.lane.b32.xlu0 %v3847, 64
        %v3870 = vpop.permute.xlu0 %3869
        %3871 = vrot.lane.b32.xlu0 %v3848, 64
        %v3872 = vpop.permute.xlu0 %3871
        %v3881 = vmul.f32 %v3730, %v3858
        %v3882 = vmul.f32 %v3732, %v3860
        %v3883 = vmul.f32 %v3734, %v3862
        %v3884 = vmul.f32 %v3736, %v3864
        %v3885 = vmul.f32 %v3738, %v3866
        %v3886 = vmul.f32 %v3740, %v3868
        %v3887 = vmul.f32 %v3742, %v3870
        %v3888 = vmul.f32 %v3744, %v3872
        %s3889 = scalar_lea.vmem [#allocation4], 224
        %v3890 = vld [vmem:[%s3889] sm:$0xff]
        %v3891 = vld [vmem:[%s3889 + $0x8] sm:$0xff]
        %v3892 = vld [vmem:[%s3889 + $0x10] sm:$0xff]
        %v3893 = vld [vmem:[%s3889 + $0x18] sm:$0xff]
        %v3902 = vrot.slane %v3882, 7
        %v3903 = vsel %vm798, %v3902, %v3881
        %v3904 = vrot.slane %v3883, 6
        %v3905 = vsel %vm801, %v3904, %v3903
        %v3906 = vrot.slane %v3884, 5
        %v3907 = vsel %vm804, %v3906, %v3905
        %v3908 = vrot.slane %v3885, 4
        %v3909 = vsel %vm807, %v3908, %v3907
        %v3910 = vrot.slane %v3886, 3
        %v3911 = vsel %vm810, %v3910, %v3909
        %v3912 = vrot.slane %v3887, 2
        %v3913 = vsel %vm813, %v3912, %v3911
        %v3914 = vrot.slane %v3888, 1
        %v3915 = vsel %vm816, %v3914, %v3913
        %3916 = vrot.lane.b32.xlu0 %v3915, 32
        %v3917 = vpop.permute.xlu0 %3916
        %v3918 = vsel %vm399, %v3917, 0
        %3920 = vmatprep.subr.mxu0 0.0
        %3921 = vmatpush1.msra.mxu0 %v3890
        %3922 = vmatprep.subr.mxu0 0.0
        %3923 = vmatpush1.msra.mxu0 %v3891
        %3924 = vmatprep.subr.mxu0 0.0
        %3925 = vmatpush1.msra.mxu0 %v3892
        %3926 = vmatprep.subr.mxu0 0.0
        %3927 = vmatpush1.msra.mxu0 %v3893
        %3928 = vmatprep.subr.mxu0 0.0
        %3929 = vmatpush1.msra.mxu0 0.0
        %3930 = vmatprep.subr.mxu0 0.0
        %3931 = vmatpush1.msra.mxu0 0.0
        %3932 = vmatprep.subr.mxu0 0.0
        %3933 = vmatpush1.msra.mxu0 0.0
        %3934 = vmatprep.subr.mxu0 0.0
        %3935 = vmatpush1.msra.mxu0 0.0
        %3936 = vmatprep.subr.mxu0 0.0
        %3937 = vmatpush1.msra.mxu0 0.0
        %3938 = vmatprep.subr.mxu0 0.0
        %3939 = vmatpush1.msra.mxu0 0.0
        %3940 = vmatprep.subr.mxu0 0.0
        %3941 = vmatpush1.msra.mxu0 0.0
        %3942 = vmatprep.subr.mxu0 0.0
        %3943 = vmatpush1.msra.mxu0 0.0
        %3944 = vmatprep.subr.mxu0 0.0
        %3945 = vmatpush1.msra.mxu0 0.0
        %3946 = vmatprep.subr.mxu0 0.0
        %3947 = vmatpush1.msra.mxu0 0.0
        %3948 = vmatprep.subr.mxu0 0.0
        %3949 = vmatpush1.msra.mxu0 0.0
        %3950 = vmatprep.subr.mxu0 0.0
        %3951 = vmatpush1.msra.mxu0 0.0
        %3952 = vmatprep.subr.mxu0 0.0
        %3953 = vmatpush1.msra.mxu0 0.0
        %3954 = vmatprep.subr.mxu0 0.0
        %3955 = vmatpush1.msra.mxu0 0.0
        %3956 = vmatprep.subr.mxu0 0.0
        %3957 = vmatpush1.msra.mxu0 0.0
        %3958 = vmatprep.subr.mxu0 0.0
        %3959 = vmatpush1.msra.mxu0 0.0
        %3960 = vmatprep.subr.mxu0 0.0
        %3961 = vmatpush1.msra.mxu0 0.0
        %3962 = vmatprep.subr.mxu0 0.0
        %3963 = vmatpush1.msra.mxu0 0.0
        %3964 = vmatprep.subr.mxu0 0.0
        %3965 = vmatpush1.msra.mxu0 0.0
        %3966 = vmatprep.subr.mxu0 0.0
        %3967 = vmatpush1.msra.mxu0 0.0
        %3968 = vmatprep.subr.mxu0 0.0
        %3969 = vmatpush1.msra.mxu0 0.0
        %3970 = vmatprep.subr.mxu0 0.0
        %3971 = vmatpush1.msra.mxu0 0.0
        %3972 = vmatprep.subr.mxu0 0.0
        %3973 = vmatpush1.msra.mxu0 0.0
        %3974 = vmatprep.subr.mxu0 0.0
        %3975 = vmatpush1.msra.mxu0 0.0
        %3976 = vmatprep.subr.mxu0 0.0
        %3977 = vmatpush1.msra.mxu0 0.0
        %3978 = vmatprep.subr.mxu0 0.0
        %3979 = vmatpush1.msra.mxu0 0.0
        %3980 = vmatprep.subr.mxu0 0.0
        %3981 = vmatpush1.msra.mxu0 0.0
        %3982 = vmatprep.subr.mxu0 0.0
        %3983 = vmatpush1.msra.mxu0 0.0
        %3984 = vmatprep.mubr.f32.mxu0 0.0
        %3985 = vmatmul.mubr.f32.gmra.mrb[0].mxu0 %v3918
        %v3986 = vpop.f32.mrb[0].mxu0
        %v3987 = vadd.f32 0.0, %v3986
        %v3988 = vpop.f32.mrb[0].mxu0
        %3989 = vdwg.mxu0
        %v3990 = vadd.f32 %v3538, %v3987
        %3992 = vst.msk [vmem:[#allocation2] sm:$0xff] %vm399, %v3917
        %v4001 = vrot.slane %v3834, 7
        %v4002 = vsel %vm798, %v4001, %v3833
        %v4003 = vrot.slane %v3835, 6
        %v4004 = vsel %vm801, %v4003, %v4002
        %v4005 = vrot.slane %v3836, 5
        %v4006 = vsel %vm804, %v4005, %v4004
        %v4007 = vrot.slane %v3837, 4
        %v4008 = vsel %vm807, %v4007, %v4006
        %v4009 = vrot.slane %v3838, 3
        %v4010 = vsel %vm810, %v4009, %v4008
        %v4011 = vrot.slane %v3839, 2
        %v4012 = vsel %vm813, %v4011, %v4010
        %v4013 = vrot.slane %v3840, 1
        %v4014 = vsel %vm816, %v4013, %v4012
        %4015 = vrot.lane.b32.xlu0 %v4014, 96
        %v4016 = vpop.permute.xlu0 %4015
        %4018 = vst.msk [vmem:[#allocation3] sm:$0xff] %vm399, %v4016
        %v4019 = vld [vmem:[%s289] sm:$0xff]
        %v4020 = vadd.f32 %v4019, %v3990
        %4021 = vst [vmem:[%s289] sm:$0xff] %v4020
        %s4022 = sand.u32 %s179, 1
        %s4023 = scalar_lea.sflag [#allocation6], %s4022
        %s4024 = sand.u32 %s179, 1
        %s4025 = smul.addr %s4024, 8
        %s4026 = scalar_lea.vmem [#allocation7], %s4025
        // Predicated region
        $region53: #{tpu_custom_call.1} parent=43 // pred_check
          %p4027 = pneg %p189
        $region54: #{tpu_custom_call.1} parent=43 // pred_check_branch
          %4029 = sbr.rel (%p4027) target = $region56
        $region55: #{tpu_custom_call.1} parent=43 // pred_region
          %s4031 = ssub.s32 128, 128
          %4032 = vsyncadd %s4023, %s4031
          %s4033 = smul.addr %s25, 128
          %s4034 = scalar_lea.hbm %s6, %s4033
          %s4036 = sshll.u32 %s4026, 4
          %s4037 = int_to_ptr.vmem [resolvable:$true] %s4036
          %4039 = dma.vmem_to_hbm [thread:$0]  %s4037, 128, %s4034, %s4023
        $region56: #{tpu_custom_call.1} parent=43 // pred_fallthru
          _
      $region44: #{tpu_custom_call.1} parent=5 // pred_fallthru
        _
      %p4040 = scmp.le.s32.totalorder 2, %s16
      // Predicated region
      $region57: #{tpu_custom_call.1} parent=5 // pred_check
        %p4041 = pneg %p4040
      $region58: #{tpu_custom_call.1} parent=5 // pred_check_branch
        %4043 = sbr.rel (%p4041) target = $region60
      $region59: #{tpu_custom_call.1} parent=5 // pred_region
        %s4044 = ssub.s32 %s16, 2
        // Predicated region
        $region61: #{tpu_custom_call.1} parent=59 // pred_check
          %p4045 = pneg %p195
        $region62: #{tpu_custom_call.1} parent=59 // pred_check_branch
          %4047 = sbr.rel (%p4045) target = $region64
        $region63: #{tpu_custom_call.1} parent=59 // pred_region
          %s4048 = sand.u32 %s180, 1
          %s4049 = scalar_lea.sflag [#allocation6], %s4048
          %s4050 = sand.u32 %s180, 1
          %s4051 = smul.addr %s4050, 8
          %s4052 = scalar_lea.vmem [#allocation7], %s4051
          %4053 = dma.done %s4049, 128
        $region64: #{tpu_custom_call.1} parent=59 // pred_fallthru
          _
      $region60: #{tpu_custom_call.1} parent=5 // pred_fallthru
        _
    $region6: #{tpu_custom_call.1} parent=1 // loop_footer
      %s20 = sadd.s32 1, %s16
    $region7: #{tpu_custom_call.1} parent=1 // loop_footer_branch
      %15 = sbr.rel target = $region3
    $region8: #{tpu_custom_call.1} parent=1 // loop_exit
      _
    %4054 = vsyncpa [#allocation5], 1
    %s4055 = scalar_lea.sflag [#allocation5], 1
    %4056 = vsyncpa %s4055, 1
    %4057 = vsyncpa [#allocation6], 1
    %s4058 = scalar_lea.sflag [#allocation6], 1
    %4059 = vsyncpa %s4058, 1

</llo_original>
